<compile_context>
chip_gen: v6e
topology: v6e:2x2x1
jax: 0.10.0
libtpu: 0.0.40
codegen_flags: <defaults>
</compile_context>

<pallas_src>
import numpy as np
import jax
import jax.numpy as jnp
from jax.experimental import pallas as pl
from jax.experimental.pallas import tpu as pltpu


def mscere_kernel(x_ref, r_ref, coef_ref, w_ref, o_ref):
    # x_ref:    (NB, T//2, C, S) bf16  — pre-upsample frames
    # r_ref:    (NB, T,    C, S) bf16  — residual
    # coef_ref: (C, 8) f32             — per-channel temporal taps (col d+3 == offset d)
    # w_ref:    (Cout, C) bf16         — wrapped net's 1x1 conv weight
    # o_ref:    (NB, T, Cout, S) bf16/f32
    NB = r_ref.shape[0]
    T = r_ref.shape[1]

    cf = coef_ref[...]                               # (C, 8) f32
    cf_col = [cf[:, k:k + 1] for k in range(7)]      # hoisted (C, 1) tap columns
    w = w_ref[...]                                   # (Cout, C) bf16

    for b in range(NB):                              # static unroll over batch block
        # nearest temporal x2 upsample: x frame i feeds output frames 2i and 2i+1,
        # so load/convert each x frame once and reuse it (halves x VMEM loads).
        xs = [x_ref[b, i].astype(jnp.float32) for i in range(T // 2)]
        # y[t] = upsampled-x + residual, in f32 (taps are 0/1 -> stencil is exact).
        ys = [xs[t // 2] + r_ref[b, t].astype(jnp.float32) for t in range(T)]

        for t in range(T):                           # static unroll over the 8 frames
            acc = ys[t] * cf_col[3]                  # d = 0 tap initialises acc
            for d in (-3, -2, -1, 1, 2, 3):          # only in-range taps (zero pad == skip)
                tt = t + d
                if 0 <= tt < T:
                    acc = acc + ys[tt] * cf_col[d + 3]
            # wrapped net: 1x1 conv == (Cout, C) @ (C, S) channel matmul on the MXU.
            o_ref[b, t] = jnp.dot(
                w, acc.astype(jnp.bfloat16),
                preferred_element_type=jnp.float32).astype(o_ref.dtype)


def build_temporal_coef(c, n_div=8):
    """Per-channel temporal tap table reproducing weight_init(); shape (c, 8).

    Column (d + 3) holds the coefficient for temporal offset d; column 7 is padding.
    """
    planes = c // 4
    fold = planes // n_div
    assert fold >= 1, "need c >= 4 * n_div"
    coef = np.zeros((c, 8), np.float32)
    c3 = c // 2
    # --- kernel-3 part: channels [0, c//2) ---
    coef[0:2 * fold, 2] = 1.0                  # weight3[:,0,0] -> offset -1
    coef[2 * fold:4 * fold, 4] = 1.0           # weight3[:,0,2] -> offset +1
    coef[4 * fold:c3, 3] = 1.0                 # identity
    # --- kernel-5 part: channels [c//2, c//2 + planes) ---
    b5 = c3
    coef[b5:b5 + fold, 1] = 1.0                # offsets -2, -1
    coef[b5:b5 + fold, 2] = 1.0
    coef[b5 + fold:b5 + 2 * fold, 4] = 1.0     # offsets +1, +2
    coef[b5 + fold:b5 + 2 * fold, 5] = 1.0
    coef[b5 + 2 * fold:b5 + planes, 3] = 1.0
    # --- kernel-7 part: channels [c//2 + planes, c) ---
    b7 = c3 + planes
    coef[b7:b7 + fold, 0:3] = 1.0              # offsets -3, -2, -1
    coef[b7 + fold:b7 + 2 * fold, 4:7] = 1.0   # offsets +1, +2, +3
    coef[b7 + 2 * fold:b7 + planes, 3] = 1.0
    return jnp.asarray(coef)


def _pick_tiles(nb, seg_half, T, c, cout, hw, out_itemsize,
                vmem_budget=24 << 20, min_step_hbm=2 << 20, max_nb_blk=8):
    """Pick (nb_blk, block_hw): biggest legal spatial tile within the VMEM budget,
    then grow the batch block until each grid step moves enough HBM bytes."""
    def vmem_bytes(nb_blk, s):
        xb = nb_blk * seg_half * c * s * 2           # bf16 x block
        rb = nb_blk * T * c * s * 2                  # bf16 residual block
        ob = nb_blk * T * cout * s * out_itemsize    # output block
        inter = nb_blk * (seg_half + T) * c * s * 4  # f32 upsample/sum intermediates
        return 2 * (xb + rb + ob) + inter            # 2x: Pallas double-buffering

    def hbm_bytes(nb_blk, s):
        return nb_blk * s * (seg_half * c * 2 + T * c * 2 + T * cout * out_itemsize)

    # spatial tile: divisors of hw that are multiples of 128 (lane-dense, (8,128)-legal)
    cands = [d for d in range(hw, 0, -1) if hw % d == 0 and d % 128 == 0]
    block_hw = None
    for d in cands:
        if vmem_bytes(1, d) <= vmem_budget:
            block_hw = d
            break
    if block_hw is None:
        # either no 128-multiple divisor exists (use full extent: legal as full-dim
        # block) or even the smallest one blows the budget (take it anyway).
        block_hw = cands[-1] if cands else hw

    nb_blk = 1
    while (nb_blk < max_nb_blk and nb % (nb_blk * 2) == 0
           and hbm_bytes(nb_blk, block_hw) < min_step_hbm
           and vmem_bytes(nb_blk * 2, block_hw) <= vmem_budget):
        nb_blk *= 2
    return nb_blk, block_hw


def ms_ce_res(x, residual, coef, w_net, n_segment=8,
              block_hw=None, nb_block=None, out_dtype=jnp.bfloat16):
    """x: (nt, c, h, w) NCHW with nt = n_batch * n_segment//2 (pre-upsample);
       residual: (n_batch * n_segment, c, h, w);
       coef: (c, 8) temporal tap table; w_net: (cout, c) 1x1 conv weight."""
    nt, c, h, w = x.shape
    seg_half = n_segment // 2
    nb = nt // seg_half
    T = n_segment
    HW = h * w
    cout = w_net.shape[0]
    out_itemsize = jnp.dtype(out_dtype).itemsize

    auto_nb, auto_hw = _pick_tiles(nb, seg_half, T, c, cout, HW, out_itemsize)
    if block_hw is None:
        block_hw = auto_hw
    if nb_block is None:
        nb_block = auto_nb
    assert HW % block_hw == 0 and nb % nb_block == 0

    # NCHW-native: only reshapes + dtype casts (no transposes, no upsample copy).
    x_k = x.reshape(nb, seg_half, c, HW).astype(jnp.bfloat16)
    r_k = residual.reshape(nb, T, c, HW).astype(jnp.bfloat16)
    w_k = w_net.astype(jnp.bfloat16)
    coef_k = coef.astype(jnp.float32)

    out = pl.pallas_call(
        mscere_kernel,
        out_shape=jax.ShapeDtypeStruct((nb, T, cout, HW), out_dtype),
        grid=(nb // nb_block, HW // block_hw),
        in_specs=[
            pl.BlockSpec((nb_block, seg_half, c, block_hw), lambda b, s: (b, 0, 0, s)),
            pl.BlockSpec((nb_block, T, c, block_hw), lambda b, s: (b, 0, 0, s)),
            pl.BlockSpec((c, 8), lambda b, s: (0, 0)),
            pl.BlockSpec((cout, c), lambda b, s: (0, 0)),
        ],
        out_specs=pl.BlockSpec((nb_block, T, cout, block_hw), lambda b, s: (b, 0, 0, s)),
        compiler_params=pltpu.CompilerParams(
            dimension_semantics=("parallel", "parallel"),
            vmem_limit_bytes=48 * 1024 * 1024),
    )(x_k, r_k, coef_k, w_k)

    # Back to NCHW: (n_batch * n_segment, cout, h, w) — pure reshape.
    return out.reshape(nb * T, cout, h, w)


def reference(x, residual, coef, w_net, n_segment=8, out_dtype=jnp.bfloat16):
    """Pure-JAX reference mirroring the PyTorch forward (stride=1), with the
    same bf16 residency / f32-accumulation choices as the kernel."""
    nt, c, h, w = x.shape
    seg_half = n_segment // 2
    nb = nt // seg_half
    T = n_segment
    xb = x.astype(jnp.bfloat16).astype(jnp.float32).reshape(nb, seg_half, c, h, w)
    rb = residual.astype(jnp.bfloat16).astype(jnp.float32).reshape(nb, T, c, h, w)
    xb = jnp.repeat(xb, 2, axis=1)                         # nearest temporal x2
    y = xb + rb
    acc = jnp.zeros_like(y)
    for d in range(-3, 4):
        cf_d = coef[:, d + 3][None, None, :, None, None]
        if d == 0:
            sh = y
        elif d > 0:
            sh = jnp.concatenate([y[:, d:], jnp.zeros_like(y[:, :d])], axis=1)
        else:
            sh = jnp.concatenate([jnp.zeros_like(y[:, :(-d)]), y[:, :d]], axis=1)
        acc = acc + sh * cf_d
    out = jnp.einsum('oc,btchw->btohw',
                     w_net.astype(jnp.bfloat16), acc.astype(jnp.bfloat16),
                     preferred_element_type=jnp.float32)
    out = out.astype(out_dtype).astype(jnp.float32)
    return out.reshape(nb * T, -1, h, w)


if __name__ == "__main__":
    n_segment = 8
    n_div = 8
    c = 32                      # net.in_channels (must be >= 4 * n_div for fold >= 1)
    h = w = 16                  # HW = 256: lane-dense spatial tiles (multiple of 128)
    nb = 2                      # temporal batch
    nt = nb * (n_segment // 2)  # x has n_segment/2 frames per batch (pre-upsample)

    key = jax.random.PRNGKey(0)
    k1, k2, k3 = jax.random.split(key, 3)
    x = jax.random.normal(k1, (nt, c, h, w), jnp.float32)
    residual = jax.random.normal(k2, (nb * n_segment, c, h, w), jnp.float32)

    # Deterministic parameters: temporal-conv coefficients per weight_init(),
    # and the wrapped net's 1x1 conv weight (Cout, Cin), bias-free.
    coef = build_temporal_coef(c, n_div=n_div)
    w_net = (jax.random.normal(k3, (c, c), jnp.float32) * 0.05).astype(jnp.float32)

    out = ms_ce_res(x, residual, coef, w_net, n_segment=n_segment)
    out = jax.block_until_ready(out)

    ref = reference(x, residual, coef, w_net, n_segment=n_segment)
    assert out.shape == (nb * n_segment, c, h, w), out.shape
    out_f32 = out.astype(jnp.float32)
    max_err = float(jnp.max(jnp.abs(out_f32 - ref)))
    assert jnp.allclose(out_f32, ref, atol=2e-2, rtol=2e-2), max_err
    print("KERNEL_OK")
</pallas_src>

<mosaic_0001>
module attributes {stable_mosaic.version = 11 : i64} {
  func.func @mscere_kernel(%arg0: i32, %arg1: i32, %arg2: memref<2x4x32x256xbf16, #tpu.memory_space<vmem>>, %arg3: memref<2x8x32x256xbf16, #tpu.memory_space<vmem>>, %arg4: memref<32x8xf32, #tpu.memory_space<vmem>>, %arg5: memref<32x32xbf16, #tpu.memory_space<vmem>>, %arg6: memref<2x8x32x256xbf16, #tpu.memory_space<vmem>>) attributes {dimension_semantics = [#tpu.dimension_semantics<parallel>, #tpu.dimension_semantics<parallel>], iteration_bounds = array<i64: 1, 1>, scalar_prefetch = 0 : i64, scratch_operands = 0 : i64, tpu.core_type = #tpu.core_type<tc>, window_params = [{transform_indices = @transform_0, window_bounds = array<i64: 2, 4, 32, 256>}, {transform_indices = @transform_1, window_bounds = array<i64: 2, 8, 32, 256>}, {pipeline_mode = #tpu.pipeline_mode<synchronous>, transform_indices = @transform_2, window_bounds = array<i64: 32, 8>}, {pipeline_mode = #tpu.pipeline_mode<synchronous>, transform_indices = @transform_3, window_bounds = array<i64: 32, 32>}, {transform_indices = @transform_4, window_bounds = array<i64: 2, 8, 32, 256>}]} {
    %c0 = arith.constant 0 : index
    %c0_0 = arith.constant 0 : index
    %0 = vector.load %arg4[%c0, %c0_0] : memref<32x8xf32, #tpu.memory_space<vmem>>, vector<32x8xf32>
    %1 = vector.extract_strided_slice %0 {offsets = [0, 0], sizes = [32, 1], strides = [1, 1]} : vector<32x8xf32> to vector<32x1xf32>
    %2 = vector.extract_strided_slice %0 {offsets = [0, 1], sizes = [32, 1], strides = [1, 1]} : vector<32x8xf32> to vector<32x1xf32>
    %3 = vector.extract_strided_slice %0 {offsets = [0, 2], sizes = [32, 1], strides = [1, 1]} : vector<32x8xf32> to vector<32x1xf32>
    %4 = vector.extract_strided_slice %0 {offsets = [0, 3], sizes = [32, 1], strides = [1, 1]} : vector<32x8xf32> to vector<32x1xf32>
    %5 = vector.extract_strided_slice %0 {offsets = [0, 4], sizes = [32, 1], strides = [1, 1]} : vector<32x8xf32> to vector<32x1xf32>
    %6 = vector.extract_strided_slice %0 {offsets = [0, 5], sizes = [32, 1], strides = [1, 1]} : vector<32x8xf32> to vector<32x1xf32>
    %7 = vector.extract_strided_slice %0 {offsets = [0, 6], sizes = [32, 1], strides = [1, 1]} : vector<32x8xf32> to vector<32x1xf32>
    %c0_1 = arith.constant 0 : index
    %c0_2 = arith.constant 0 : index
    %8 = vector.load %arg5[%c0_1, %c0_2] : memref<32x32xbf16, #tpu.memory_space<vmem>>, vector<32x32xbf16>
    %c0_3 = arith.constant 0 : index
    %c0_4 = arith.constant 0 : index
    %c0_5 = arith.constant 0 : index
    %c0_6 = arith.constant 0 : index
    %9 = vector.load %arg2[%c0_3, %c0_4, %c0_5, %c0_6] : memref<2x4x32x256xbf16, #tpu.memory_space<vmem>>, vector<1x1x32x256xbf16>
    %10 = vector.shape_cast %9 : vector<1x1x32x256xbf16> to vector<32x256xbf16>
    %11 = arith.extf %10 : vector<32x256xbf16> to vector<32x256xf32>
    %c0_7 = arith.constant 0 : index
    %c1 = arith.constant 1 : index
    %c0_8 = arith.constant 0 : index
    %c0_9 = arith.constant 0 : index
    %12 = vector.load %arg2[%c0_7, %c1, %c0_8, %c0_9] : memref<2x4x32x256xbf16, #tpu.memory_space<vmem>>, vector<1x1x32x256xbf16>
    %13 = vector.shape_cast %12 : vector<1x1x32x256xbf16> to vector<32x256xbf16>
    %14 = arith.extf %13 : vector<32x256xbf16> to vector<32x256xf32>
    %c0_10 = arith.constant 0 : index
    %c2 = arith.constant 2 : index
    %c0_11 = arith.constant 0 : index
    %c0_12 = arith.constant 0 : index
    %15 = vector.load %arg2[%c0_10, %c2, %c0_11, %c0_12] : memref<2x4x32x256xbf16, #tpu.memory_space<vmem>>, vector<1x1x32x256xbf16>
    %16 = vector.shape_cast %15 : vector<1x1x32x256xbf16> to vector<32x256xbf16>
    %17 = arith.extf %16 : vector<32x256xbf16> to vector<32x256xf32>
    %c0_13 = arith.constant 0 : index
    %c3 = arith.constant 3 : index
    %c0_14 = arith.constant 0 : index
    %c0_15 = arith.constant 0 : index
    %18 = vector.load %arg2[%c0_13, %c3, %c0_14, %c0_15] : memref<2x4x32x256xbf16, #tpu.memory_space<vmem>>, vector<1x1x32x256xbf16>
    %19 = vector.shape_cast %18 : vector<1x1x32x256xbf16> to vector<32x256xbf16>
    %20 = arith.extf %19 : vector<32x256xbf16> to vector<32x256xf32>
    %c0_16 = arith.constant 0 : index
    %c0_17 = arith.constant 0 : index
    %c0_18 = arith.constant 0 : index
    %c0_19 = arith.constant 0 : index
    %21 = vector.load %arg3[%c0_16, %c0_17, %c0_18, %c0_19] : memref<2x8x32x256xbf16, #tpu.memory_space<vmem>>, vector<1x1x32x256xbf16>
    %22 = vector.shape_cast %21 : vector<1x1x32x256xbf16> to vector<32x256xbf16>
    %23 = arith.extf %22 : vector<32x256xbf16> to vector<32x256xf32>
    %24 = arith.addf %11, %23 : vector<32x256xf32>
    %c0_20 = arith.constant 0 : index
    %c1_21 = arith.constant 1 : index
    %c0_22 = arith.constant 0 : index
    %c0_23 = arith.constant 0 : index
    %25 = vector.load %arg3[%c0_20, %c1_21, %c0_22, %c0_23] : memref<2x8x32x256xbf16, #tpu.memory_space<vmem>>, vector<1x1x32x256xbf16>
    %26 = vector.shape_cast %25 : vector<1x1x32x256xbf16> to vector<32x256xbf16>
    %27 = arith.extf %26 : vector<32x256xbf16> to vector<32x256xf32>
    %28 = arith.addf %11, %27 : vector<32x256xf32>
    %c0_24 = arith.constant 0 : index
    %c2_25 = arith.constant 2 : index
    %c0_26 = arith.constant 0 : index
    %c0_27 = arith.constant 0 : index
    %29 = vector.load %arg3[%c0_24, %c2_25, %c0_26, %c0_27] : memref<2x8x32x256xbf16, #tpu.memory_space<vmem>>, vector<1x1x32x256xbf16>
    %30 = vector.shape_cast %29 : vector<1x1x32x256xbf16> to vector<32x256xbf16>
    %31 = arith.extf %30 : vector<32x256xbf16> to vector<32x256xf32>
    %32 = arith.addf %14, %31 : vector<32x256xf32>
    %c0_28 = arith.constant 0 : index
    %c3_29 = arith.constant 3 : index
    %c0_30 = arith.constant 0 : index
    %c0_31 = arith.constant 0 : index
    %33 = vector.load %arg3[%c0_28, %c3_29, %c0_30, %c0_31] : memref<2x8x32x256xbf16, #tpu.memory_space<vmem>>, vector<1x1x32x256xbf16>
    %34 = vector.shape_cast %33 : vector<1x1x32x256xbf16> to vector<32x256xbf16>
    %35 = arith.extf %34 : vector<32x256xbf16> to vector<32x256xf32>
    %36 = arith.addf %14, %35 : vector<32x256xf32>
    %c0_32 = arith.constant 0 : index
    %c4 = arith.constant 4 : index
    %c0_33 = arith.constant 0 : index
    %c0_34 = arith.constant 0 : index
    %37 = vector.load %arg3[%c0_32, %c4, %c0_33, %c0_34] : memref<2x8x32x256xbf16, #tpu.memory_space<vmem>>, vector<1x1x32x256xbf16>
    %38 = vector.shape_cast %37 : vector<1x1x32x256xbf16> to vector<32x256xbf16>
    %39 = arith.extf %38 : vector<32x256xbf16> to vector<32x256xf32>
    %40 = arith.addf %17, %39 : vector<32x256xf32>
    %c0_35 = arith.constant 0 : index
    %c5 = arith.constant 5 : index
    %c0_36 = arith.constant 0 : index
    %c0_37 = arith.constant 0 : index
    %41 = vector.load %arg3[%c0_35, %c5, %c0_36, %c0_37] : memref<2x8x32x256xbf16, #tpu.memory_space<vmem>>, vector<1x1x32x256xbf16>
    %42 = vector.shape_cast %41 : vector<1x1x32x256xbf16> to vector<32x256xbf16>
    %43 = arith.extf %42 : vector<32x256xbf16> to vector<32x256xf32>
    %44 = arith.addf %17, %43 : vector<32x256xf32>
    %c0_38 = arith.constant 0 : index
    %c6 = arith.constant 6 : index
    %c0_39 = arith.constant 0 : index
    %c0_40 = arith.constant 0 : index
    %45 = vector.load %arg3[%c0_38, %c6, %c0_39, %c0_40] : memref<2x8x32x256xbf16, #tpu.memory_space<vmem>>, vector<1x1x32x256xbf16>
    %46 = vector.shape_cast %45 : vector<1x1x32x256xbf16> to vector<32x256xbf16>
    %47 = arith.extf %46 : vector<32x256xbf16> to vector<32x256xf32>
    %48 = arith.addf %20, %47 : vector<32x256xf32>
    %c0_41 = arith.constant 0 : index
    %c7 = arith.constant 7 : index
    %c0_42 = arith.constant 0 : index
    %c0_43 = arith.constant 0 : index
    %49 = vector.load %arg3[%c0_41, %c7, %c0_42, %c0_43] : memref<2x8x32x256xbf16, #tpu.memory_space<vmem>>, vector<1x1x32x256xbf16>
    %50 = vector.shape_cast %49 : vector<1x1x32x256xbf16> to vector<32x256xbf16>
    %51 = arith.extf %50 : vector<32x256xbf16> to vector<32x256xf32>
    %52 = arith.addf %20, %51 : vector<32x256xf32>
    %53 = vector.broadcast %4 : vector<32x1xf32> to vector<32x256xf32>
    %54 = arith.mulf %24, %53 : vector<32x256xf32>
    %55 = vector.broadcast %5 : vector<32x1xf32> to vector<32x256xf32>
    %56 = arith.mulf %28, %55 : vector<32x256xf32>
    %57 = arith.addf %54, %56 : vector<32x256xf32>
    %58 = vector.broadcast %6 : vector<32x1xf32> to vector<32x256xf32>
    %59 = arith.mulf %32, %58 : vector<32x256xf32>
    %60 = arith.addf %57, %59 : vector<32x256xf32>
    %61 = vector.broadcast %7 : vector<32x1xf32> to vector<32x256xf32>
    %62 = arith.mulf %36, %61 : vector<32x256xf32>
    %63 = arith.addf %60, %62 : vector<32x256xf32>
    %64 = arith.truncf %63 : vector<32x256xf32> to vector<32x256xbf16>
    %cst = arith.constant dense<0.000000e+00> : vector<32x256xf32>
    %65 = tpu.matmul %8, %64, %cst {dimension_numbers = #tpu.dot_dimension_numbers<[1], [0], [0], [1], [0, 0, 1, 1], [], []>} : vector<32x32xbf16>, vector<32x256xbf16>, vector<32x256xf32> -> vector<32x256xf32>
    %66 = arith.truncf %65 : vector<32x256xf32> to vector<32x256xbf16>
    %c0_44 = arith.constant 0 : index
    %c0_45 = arith.constant 0 : index
    %c0_46 = arith.constant 0 : index
    %c0_47 = arith.constant 0 : index
    %67 = vector.load %arg6[%c0_44, %c0_45, %c0_46, %c0_47] : memref<2x8x32x256xbf16, #tpu.memory_space<vmem>>, vector<1x1x32x256xbf16>
    %68 = vector.shape_cast %67 : vector<1x1x32x256xbf16> to vector<32x256xbf16>
    %69 = vector.shape_cast %66 : vector<32x256xbf16> to vector<1x1x32x256xbf16>
    tpu.vector_store %arg6[%c0_44, %c0_45, %c0_46, %c0_47], %69 {strides = array<i32>} : memref<2x8x32x256xbf16, #tpu.memory_space<vmem>>, vector<1x1x32x256xbf16>,
    %70 = vector.broadcast %4 : vector<32x1xf32> to vector<32x256xf32>
    %71 = arith.mulf %28, %70 : vector<32x256xf32>
    %72 = vector.broadcast %3 : vector<32x1xf32> to vector<32x256xf32>
    %73 = arith.mulf %24, %72 : vector<32x256xf32>
    %74 = arith.addf %71, %73 : vector<32x256xf32>
    %75 = vector.broadcast %5 : vector<32x1xf32> to vector<32x256xf32>
    %76 = arith.mulf %32, %75 : vector<32x256xf32>
    %77 = arith.addf %74, %76 : vector<32x256xf32>
    %78 = vector.broadcast %6 : vector<32x1xf32> to vector<32x256xf32>
    %79 = arith.mulf %36, %78 : vector<32x256xf32>
    %80 = arith.addf %77, %79 : vector<32x256xf32>
    %81 = vector.broadcast %7 : vector<32x1xf32> to vector<32x256xf32>
    %82 = arith.mulf %40, %81 : vector<32x256xf32>
    %83 = arith.addf %80, %82 : vector<32x256xf32>
    %84 = arith.truncf %83 : vector<32x256xf32> to vector<32x256xbf16>
    %cst_48 = arith.constant dense<0.000000e+00> : vector<32x256xf32>
    %85 = tpu.matmul %8, %84, %cst_48 {dimension_numbers = #tpu.dot_dimension_numbers<[1], [0], [0], [1], [0, 0, 1, 1], [], []>} : vector<32x32xbf16>, vector<32x256xbf16>, vector<32x256xf32> -> vector<32x256xf32>
    %86 = arith.truncf %85 : vector<32x256xf32> to vector<32x256xbf16>
    %c0_49 = arith.constant 0 : index
    %c1_50 = arith.constant 1 : index
    %c0_51 = arith.constant 0 : index
    %c0_52 = arith.constant 0 : index
    %87 = vector.load %arg6[%c0_49, %c1_50, %c0_51, %c0_52] : memref<2x8x32x256xbf16, #tpu.memory_space<vmem>>, vector<1x1x32x256xbf16>
    %88 = vector.shape_cast %87 : vector<1x1x32x256xbf16> to vector<32x256xbf16>
    %89 = vector.shape_cast %86 : vector<32x256xbf16> to vector<1x1x32x256xbf16>
    tpu.vector_store %arg6[%c0_49, %c1_50, %c0_51, %c0_52], %89 {strides = array<i32>} : memref<2x8x32x256xbf16, #tpu.memory_space<vmem>>, vector<1x1x32x256xbf16>,
    %90 = vector.broadcast %4 : vector<32x1xf32> to vector<32x256xf32>
    %91 = arith.mulf %32, %90 : vector<32x256xf32>
    %92 = vector.broadcast %2 : vector<32x1xf32> to vector<32x256xf32>
    %93 = arith.mulf %24, %92 : vector<32x256xf32>
    %94 = arith.addf %91, %93 : vector<32x256xf32>
    %95 = vector.broadcast %3 : vector<32x1xf32> to vector<32x256xf32>
    %96 = arith.mulf %28, %95 : vector<32x256xf32>
    %97 = arith.addf %94, %96 : vector<32x256xf32>
    %98 = vector.broadcast %5 : vector<32x1xf32> to vector<32x256xf32>
    %99 = arith.mulf %36, %98 : vector<32x256xf32>
    %100 = arith.addf %97, %99 : vector<32x256xf32>
    %101 = vector.broadcast %6 : vector<32x1xf32> to vector<32x256xf32>
    %102 = arith.mulf %40, %101 : vector<32x256xf32>
    %103 = arith.addf %100, %102 : vector<32x256xf32>
    %104 = vector.broadcast %7 : vector<32x1xf32> to vector<32x256xf32>
    %105 = arith.mulf %44, %104 : vector<32x256xf32>
    %106 = arith.addf %103, %105 : vector<32x256xf32>
    %107 = arith.truncf %106 : vector<32x256xf32> to vector<32x256xbf16>
    %cst_53 = arith.constant dense<0.000000e+00> : vector<32x256xf32>
    %108 = tpu.matmul %8, %107, %cst_53 {dimension_numbers = #tpu.dot_dimension_numbers<[1], [0], [0], [1], [0, 0, 1, 1], [], []>} : vector<32x32xbf16>, vector<32x256xbf16>, vector<32x256xf32> -> vector<32x256xf32>
    %109 = arith.truncf %108 : vector<32x256xf32> to vector<32x256xbf16>
    %c0_54 = arith.constant 0 : index
    %c2_55 = arith.constant 2 : index
    %c0_56 = arith.constant 0 : index
    %c0_57 = arith.constant 0 : index
    %110 = vector.load %arg6[%c0_54, %c2_55, %c0_56, %c0_57] : memref<2x8x32x256xbf16, #tpu.memory_space<vmem>>, vector<1x1x32x256xbf16>
    %111 = vector.shape_cast %110 : vector<1x1x32x256xbf16> to vector<32x256xbf16>
    %112 = vector.shape_cast %109 : vector<32x256xbf16> to vector<1x1x32x256xbf16>
    tpu.vector_store %arg6[%c0_54, %c2_55, %c0_56, %c0_57], %112 {strides = array<i32>} : memref<2x8x32x256xbf16, #tpu.memory_space<vmem>>, vector<1x1x32x256xbf16>,
    %113 = vector.broadcast %4 : vector<32x1xf32> to vector<32x256xf32>
    %114 = arith.mulf %36, %113 : vector<32x256xf32>
    %115 = vector.broadcast %1 : vector<32x1xf32> to vector<32x256xf32>
    %116 = arith.mulf %24, %115 : vector<32x256xf32>
    %117 = arith.addf %114, %116 : vector<32x256xf32>
    %118 = vector.broadcast %2 : vector<32x1xf32> to vector<32x256xf32>
    %119 = arith.mulf %28, %118 : vector<32x256xf32>
    %120 = arith.addf %117, %119 : vector<32x256xf32>
    %121 = vector.broadcast %3 : vector<32x1xf32> to vector<32x256xf32>
    %122 = arith.mulf %32, %121 : vector<32x256xf32>
    %123 = arith.addf %120, %122 : vector<32x256xf32>
    %124 = vector.broadcast %5 : vector<32x1xf32> to vector<32x256xf32>
    %125 = arith.mulf %40, %124 : vector<32x256xf32>
    %126 = arith.addf %123, %125 : vector<32x256xf32>
    %127 = vector.broadcast %6 : vector<32x1xf32> to vector<32x256xf32>
    %128 = arith.mulf %44, %127 : vector<32x256xf32>
    %129 = arith.addf %126, %128 : vector<32x256xf32>
    %130 = vector.broadcast %7 : vector<32x1xf32> to vector<32x256xf32>
    %131 = arith.mulf %48, %130 : vector<32x256xf32>
    %132 = arith.addf %129, %131 : vector<32x256xf32>
    %133 = arith.truncf %132 : vector<32x256xf32> to vector<32x256xbf16>
    %cst_58 = arith.constant dense<0.000000e+00> : vector<32x256xf32>
    %134 = tpu.matmul %8, %133, %cst_58 {dimension_numbers = #tpu.dot_dimension_numbers<[1], [0], [0], [1], [0, 0, 1, 1], [], []>} : vector<32x32xbf16>, vector<32x256xbf16>, vector<32x256xf32> -> vector<32x256xf32>
    %135 = arith.truncf %134 : vector<32x256xf32> to vector<32x256xbf16>
    %c0_59 = arith.constant 0 : index
    %c3_60 = arith.constant 3 : index
    %c0_61 = arith.constant 0 : index
    %c0_62 = arith.constant 0 : index
    %136 = vector.load %arg6[%c0_59, %c3_60, %c0_61, %c0_62] : memref<2x8x32x256xbf16, #tpu.memory_space<vmem>>, vector<1x1x32x256xbf16>
    %137 = vector.shape_cast %136 : vector<1x1x32x256xbf16> to vector<32x256xbf16>
    %138 = vector.shape_cast %135 : vector<32x256xbf16> to vector<1x1x32x256xbf16>
    tpu.vector_store %arg6[%c0_59, %c3_60, %c0_61, %c0_62], %138 {strides = array<i32>} : memref<2x8x32x256xbf16, #tpu.memory_space<vmem>>, vector<1x1x32x256xbf16>,
    %139 = vector.broadcast %4 : vector<32x1xf32> to vector<32x256xf32>
    %140 = arith.mulf %40, %139 : vector<32x256xf32>
    %141 = vector.broadcast %1 : vector<32x1xf32> to vector<32x256xf32>
    %142 = arith.mulf %28, %141 : vector<32x256xf32>
    %143 = arith.addf %140, %142 : vector<32x256xf32>
    %144 = vector.broadcast %2 : vector<32x1xf32> to vector<32x256xf32>
    %145 = arith.mulf %32, %144 : vector<32x256xf32>
    %146 = arith.addf %143, %145 : vector<32x256xf32>
    %147 = vector.broadcast %3 : vector<32x1xf32> to vector<32x256xf32>
    %148 = arith.mulf %36, %147 : vector<32x256xf32>
    %149 = arith.addf %146, %148 : vector<32x256xf32>
    %150 = vector.broadcast %5 : vector<32x1xf32> to vector<32x256xf32>
    %151 = arith.mulf %44, %150 : vector<32x256xf32>
    %152 = arith.addf %149, %151 : vector<32x256xf32>
    %153 = vector.broadcast %6 : vector<32x1xf32> to vector<32x256xf32>
    %154 = arith.mulf %48, %153 : vector<32x256xf32>
    %155 = arith.addf %152, %154 : vector<32x256xf32>
    %156 = vector.broadcast %7 : vector<32x1xf32> to vector<32x256xf32>
    %157 = arith.mulf %52, %156 : vector<32x256xf32>
    %158 = arith.addf %155, %157 : vector<32x256xf32>
    %159 = arith.truncf %158 : vector<32x256xf32> to vector<32x256xbf16>
    %cst_63 = arith.constant dense<0.000000e+00> : vector<32x256xf32>
    %160 = tpu.matmul %8, %159, %cst_63 {dimension_numbers = #tpu.dot_dimension_numbers<[1], [0], [0], [1], [0, 0, 1, 1], [], []>} : vector<32x32xbf16>, vector<32x256xbf16>, vector<32x256xf32> -> vector<32x256xf32>
    %161 = arith.truncf %160 : vector<32x256xf32> to vector<32x256xbf16>
    %c0_64 = arith.constant 0 : index
    %c4_65 = arith.constant 4 : index
    %c0_66 = arith.constant 0 : index
    %c0_67 = arith.constant 0 : index
    %162 = vector.load %arg6[%c0_64, %c4_65, %c0_66, %c0_67] : memref<2x8x32x256xbf16, #tpu.memory_space<vmem>>, vector<1x1x32x256xbf16>
    %163 = vector.shape_cast %162 : vector<1x1x32x256xbf16> to vector<32x256xbf16>
    %164 = vector.shape_cast %161 : vector<32x256xbf16> to vector<1x1x32x256xbf16>
    tpu.vector_store %arg6[%c0_64, %c4_65, %c0_66, %c0_67], %164 {strides = array<i32>} : memref<2x8x32x256xbf16, #tpu.memory_space<vmem>>, vector<1x1x32x256xbf16>,
    %165 = vector.broadcast %4 : vector<32x1xf32> to vector<32x256xf32>
    %166 = arith.mulf %44, %165 : vector<32x256xf32>
    %167 = vector.broadcast %1 : vector<32x1xf32> to vector<32x256xf32>
    %168 = arith.mulf %32, %167 : vector<32x256xf32>
    %169 = arith.addf %166, %168 : vector<32x256xf32>
    %170 = vector.broadcast %2 : vector<32x1xf32> to vector<32x256xf32>
    %171 = arith.mulf %36, %170 : vector<32x256xf32>
    %172 = arith.addf %169, %171 : vector<32x256xf32>
    %173 = vector.broadcast %3 : vector<32x1xf32> to vector<32x256xf32>
    %174 = arith.mulf %40, %173 : vector<32x256xf32>
    %175 = arith.addf %172, %174 : vector<32x256xf32>
    %176 = vector.broadcast %5 : vector<32x1xf32> to vector<32x256xf32>
    %177 = arith.mulf %48, %176 : vector<32x256xf32>
    %178 = arith.addf %175, %177 : vector<32x256xf32>
    %179 = vector.broadcast %6 : vector<32x1xf32> to vector<32x256xf32>
    %180 = arith.mulf %52, %179 : vector<32x256xf32>
    %181 = arith.addf %178, %180 : vector<32x256xf32>
    %182 = arith.truncf %181 : vector<32x256xf32> to vector<32x256xbf16>
    %cst_68 = arith.constant dense<0.000000e+00> : vector<32x256xf32>
    %183 = tpu.matmul %8, %182, %cst_68 {dimension_numbers = #tpu.dot_dimension_numbers<[1], [0], [0], [1], [0, 0, 1, 1], [], []>} : vector<32x32xbf16>, vector<32x256xbf16>, vector<32x256xf32> -> vector<32x256xf32>
    %184 = arith.truncf %183 : vector<32x256xf32> to vector<32x256xbf16>
    %c0_69 = arith.constant 0 : index
    %c5_70 = arith.constant 5 : index
    %c0_71 = arith.constant 0 : index
    %c0_72 = arith.constant 0 : index
    %185 = vector.load %arg6[%c0_69, %c5_70, %c0_71, %c0_72] : memref<2x8x32x256xbf16, #tpu.memory_space<vmem>>, vector<1x1x32x256xbf16>
    %186 = vector.shape_cast %185 : vector<1x1x32x256xbf16> to vector<32x256xbf16>
    %187 = vector.shape_cast %184 : vector<32x256xbf16> to vector<1x1x32x256xbf16>
    tpu.vector_store %arg6[%c0_69, %c5_70, %c0_71, %c0_72], %187 {strides = array<i32>} : memref<2x8x32x256xbf16, #tpu.memory_space<vmem>>, vector<1x1x32x256xbf16>,
    %188 = vector.broadcast %4 : vector<32x1xf32> to vector<32x256xf32>
    %189 = arith.mulf %48, %188 : vector<32x256xf32>
    %190 = vector.broadcast %1 : vector<32x1xf32> to vector<32x256xf32>
    %191 = arith.mulf %36, %190 : vector<32x256xf32>
    %192 = arith.addf %189, %191 : vector<32x256xf32>
    %193 = vector.broadcast %2 : vector<32x1xf32> to vector<32x256xf32>
    %194 = arith.mulf %40, %193 : vector<32x256xf32>
    %195 = arith.addf %192, %194 : vector<32x256xf32>
    %196 = vector.broadcast %3 : vector<32x1xf32> to vector<32x256xf32>
    %197 = arith.mulf %44, %196 : vector<32x256xf32>
    %198 = arith.addf %195, %197 : vector<32x256xf32>
    %199 = vector.broadcast %5 : vector<32x1xf32> to vector<32x256xf32>
    %200 = arith.mulf %52, %199 : vector<32x256xf32>
    %201 = arith.addf %198, %200 : vector<32x256xf32>
    %202 = arith.truncf %201 : vector<32x256xf32> to vector<32x256xbf16>
    %cst_73 = arith.constant dense<0.000000e+00> : vector<32x256xf32>
    %203 = tpu.matmul %8, %202, %cst_73 {dimension_numbers = #tpu.dot_dimension_numbers<[1], [0], [0], [1], [0, 0, 1, 1], [], []>} : vector<32x32xbf16>, vector<32x256xbf16>, vector<32x256xf32> -> vector<32x256xf32>
    %204 = arith.truncf %203 : vector<32x256xf32> to vector<32x256xbf16>
    %c0_74 = arith.constant 0 : index
    %c6_75 = arith.constant 6 : index
    %c0_76 = arith.constant 0 : index
    %c0_77 = arith.constant 0 : index
    %205 = vector.load %arg6[%c0_74, %c6_75, %c0_76, %c0_77] : memref<2x8x32x256xbf16, #tpu.memory_space<vmem>>, vector<1x1x32x256xbf16>
    %206 = vector.shape_cast %205 : vector<1x1x32x256xbf16> to vector<32x256xbf16>
    %207 = vector.shape_cast %204 : vector<32x256xbf16> to vector<1x1x32x256xbf16>
    tpu.vector_store %arg6[%c0_74, %c6_75, %c0_76, %c0_77], %207 {strides = array<i32>} : memref<2x8x32x256xbf16, #tpu.memory_space<vmem>>, vector<1x1x32x256xbf16>,
    %208 = vector.broadcast %4 : vector<32x1xf32> to vector<32x256xf32>
    %209 = arith.mulf %52, %208 : vector<32x256xf32>
    %210 = vector.broadcast %1 : vector<32x1xf32> to vector<32x256xf32>
    %211 = arith.mulf %40, %210 : vector<32x256xf32>
    %212 = arith.addf %209, %211 : vector<32x256xf32>
    %213 = vector.broadcast %2 : vector<32x1xf32> to vector<32x256xf32>
    %214 = arith.mulf %44, %213 : vector<32x256xf32>
    %215 = arith.addf %212, %214 : vector<32x256xf32>
    %216 = vector.broadcast %3 : vector<32x1xf32> to vector<32x256xf32>
    %217 = arith.mulf %48, %216 : vector<32x256xf32>
    %218 = arith.addf %215, %217 : vector<32x256xf32>
    %219 = arith.truncf %218 : vector<32x256xf32> to vector<32x256xbf16>
    %cst_78 = arith.constant dense<0.000000e+00> : vector<32x256xf32>
    %220 = tpu.matmul %8, %219, %cst_78 {dimension_numbers = #tpu.dot_dimension_numbers<[1], [0], [0], [1], [0, 0, 1, 1], [], []>} : vector<32x32xbf16>, vector<32x256xbf16>, vector<32x256xf32> -> vector<32x256xf32>
    %221 = arith.truncf %220 : vector<32x256xf32> to vector<32x256xbf16>
    %c0_79 = arith.constant 0 : index
    %c7_80 = arith.constant 7 : index
    %c0_81 = arith.constant 0 : index
    %c0_82 = arith.constant 0 : index
    %222 = vector.load %arg6[%c0_79, %c7_80, %c0_81, %c0_82] : memref<2x8x32x256xbf16, #tpu.memory_space<vmem>>, vector<1x1x32x256xbf16>
    %223 = vector.shape_cast %222 : vector<1x1x32x256xbf16> to vector<32x256xbf16>
    %224 = vector.shape_cast %221 : vector<32x256xbf16> to vector<1x1x32x256xbf16>
    tpu.vector_store %arg6[%c0_79, %c7_80, %c0_81, %c0_82], %224 {strides = array<i32>} : memref<2x8x32x256xbf16, #tpu.memory_space<vmem>>, vector<1x1x32x256xbf16>,
    %c1_83 = arith.constant 1 : index
    %c0_84 = arith.constant 0 : index
    %c0_85 = arith.constant 0 : index
    %c0_86 = arith.constant 0 : index
    %225 = vector.load %arg2[%c1_83, %c0_84, %c0_85, %c0_86] : memref<2x4x32x256xbf16, #tpu.memory_space<vmem>>, vector<1x1x32x256xbf16>
    %226 = vector.shape_cast %225 : vector<1x1x32x256xbf16> to vector<32x256xbf16>
    %227 = arith.extf %226 : vector<32x256xbf16> to vector<32x256xf32>
    %c1_87 = arith.constant 1 : index
    %c1_88 = arith.constant 1 : index
    %c0_89 = arith.constant 0 : index
    %c0_90 = arith.constant 0 : index
    %228 = vector.load %arg2[%c1_87, %c1_88, %c0_89, %c0_90] : memref<2x4x32x256xbf16, #tpu.memory_space<vmem>>, vector<1x1x32x256xbf16>
    %229 = vector.shape_cast %228 : vector<1x1x32x256xbf16> to vector<32x256xbf16>
    %230 = arith.extf %229 : vector<32x256xbf16> to vector<32x256xf32>
    %c1_91 = arith.constant 1 : index
    %c2_92 = arith.constant 2 : index
    %c0_93 = arith.constant 0 : index
    %c0_94 = arith.constant 0 : index
    %231 = vector.load %arg2[%c1_91, %c2_92, %c0_93, %c0_94] : memref<2x4x32x256xbf16, #tpu.memory_space<vmem>>, vector<1x1x32x256xbf16>
    %232 = vector.shape_cast %231 : vector<1x1x32x256xbf16> to vector<32x256xbf16>
    %233 = arith.extf %232 : vector<32x256xbf16> to vector<32x256xf32>
    %c1_95 = arith.constant 1 : index
    %c3_96 = arith.constant 3 : index
    %c0_97 = arith.constant 0 : index
    %c0_98 = arith.constant 0 : index
    %234 = vector.load %arg2[%c1_95, %c3_96, %c0_97, %c0_98] : memref<2x4x32x256xbf16, #tpu.memory_space<vmem>>, vector<1x1x32x256xbf16>
    %235 = vector.shape_cast %234 : vector<1x1x32x256xbf16> to vector<32x256xbf16>
    %236 = arith.extf %235 : vector<32x256xbf16> to vector<32x256xf32>
    %c1_99 = arith.constant 1 : index
    %c0_100 = arith.constant 0 : index
    %c0_101 = arith.constant 0 : index
    %c0_102 = arith.constant 0 : index
    %237 = vector.load %arg3[%c1_99, %c0_100, %c0_101, %c0_102] : memref<2x8x32x256xbf16, #tpu.memory_space<vmem>>, vector<1x1x32x256xbf16>
    %238 = vector.shape_cast %237 : vector<1x1x32x256xbf16> to vector<32x256xbf16>
    %239 = arith.extf %238 : vector<32x256xbf16> to vector<32x256xf32>
    %240 = arith.addf %227, %239 : vector<32x256xf32>
    %c1_103 = arith.constant 1 : index
    %c1_104 = arith.constant 1 : index
    %c0_105 = arith.constant 0 : index
    %c0_106 = arith.constant 0 : index
    %241 = vector.load %arg3[%c1_103, %c1_104, %c0_105, %c0_106] : memref<2x8x32x256xbf16, #tpu.memory_space<vmem>>, vector<1x1x32x256xbf16>
    %242 = vector.shape_cast %241 : vector<1x1x32x256xbf16> to vector<32x256xbf16>
    %243 = arith.extf %242 : vector<32x256xbf16> to vector<32x256xf32>
    %244 = arith.addf %227, %243 : vector<32x256xf32>
    %c1_107 = arith.constant 1 : index
    %c2_108 = arith.constant 2 : index
    %c0_109 = arith.constant 0 : index
    %c0_110 = arith.constant 0 : index
    %245 = vector.load %arg3[%c1_107, %c2_108, %c0_109, %c0_110] : memref<2x8x32x256xbf16, #tpu.memory_space<vmem>>, vector<1x1x32x256xbf16>
    %246 = vector.shape_cast %245 : vector<1x1x32x256xbf16> to vector<32x256xbf16>
    %247 = arith.extf %246 : vector<32x256xbf16> to vector<32x256xf32>
    %248 = arith.addf %230, %247 : vector<32x256xf32>
    %c1_111 = arith.constant 1 : index
    %c3_112 = arith.constant 3 : index
    %c0_113 = arith.constant 0 : index
    %c0_114 = arith.constant 0 : index
    %249 = vector.load %arg3[%c1_111, %c3_112, %c0_113, %c0_114] : memref<2x8x32x256xbf16, #tpu.memory_space<vmem>>, vector<1x1x32x256xbf16>
    %250 = vector.shape_cast %249 : vector<1x1x32x256xbf16> to vector<32x256xbf16>
    %251 = arith.extf %250 : vector<32x256xbf16> to vector<32x256xf32>
    %252 = arith.addf %230, %251 : vector<32x256xf32>
    %c1_115 = arith.constant 1 : index
    %c4_116 = arith.constant 4 : index
    %c0_117 = arith.constant 0 : index
    %c0_118 = arith.constant 0 : index
    %253 = vector.load %arg3[%c1_115, %c4_116, %c0_117, %c0_118] : memref<2x8x32x256xbf16, #tpu.memory_space<vmem>>, vector<1x1x32x256xbf16>
    %254 = vector.shape_cast %253 : vector<1x1x32x256xbf16> to vector<32x256xbf16>
    %255 = arith.extf %254 : vector<32x256xbf16> to vector<32x256xf32>
    %256 = arith.addf %233, %255 : vector<32x256xf32>
    %c1_119 = arith.constant 1 : index
    %c5_120 = arith.constant 5 : index
    %c0_121 = arith.constant 0 : index
    %c0_122 = arith.constant 0 : index
    %257 = vector.load %arg3[%c1_119, %c5_120, %c0_121, %c0_122] : memref<2x8x32x256xbf16, #tpu.memory_space<vmem>>, vector<1x1x32x256xbf16>
    %258 = vector.shape_cast %257 : vector<1x1x32x256xbf16> to vector<32x256xbf16>
    %259 = arith.extf %258 : vector<32x256xbf16> to vector<32x256xf32>
    %260 = arith.addf %233, %259 : vector<32x256xf32>
    %c1_123 = arith.constant 1 : index
    %c6_124 = arith.constant 6 : index
    %c0_125 = arith.constant 0 : index
    %c0_126 = arith.constant 0 : index
    %261 = vector.load %arg3[%c1_123, %c6_124, %c0_125, %c0_126] : memref<2x8x32x256xbf16, #tpu.memory_space<vmem>>, vector<1x1x32x256xbf16>
    %262 = vector.shape_cast %261 : vector<1x1x32x256xbf16> to vector<32x256xbf16>
    %263 = arith.extf %262 : vector<32x256xbf16> to vector<32x256xf32>
    %264 = arith.addf %236, %263 : vector<32x256xf32>
    %c1_127 = arith.constant 1 : index
    %c7_128 = arith.constant 7 : index
    %c0_129 = arith.constant 0 : index
    %c0_130 = arith.constant 0 : index
    %265 = vector.load %arg3[%c1_127, %c7_128, %c0_129, %c0_130] : memref<2x8x32x256xbf16, #tpu.memory_space<vmem>>, vector<1x1x32x256xbf16>
    %266 = vector.shape_cast %265 : vector<1x1x32x256xbf16> to vector<32x256xbf16>
    %267 = arith.extf %266 : vector<32x256xbf16> to vector<32x256xf32>
    %268 = arith.addf %236, %267 : vector<32x256xf32>
    %269 = vector.broadcast %4 : vector<32x1xf32> to vector<32x256xf32>
    %270 = arith.mulf %240, %269 : vector<32x256xf32>
    %271 = vector.broadcast %5 : vector<32x1xf32> to vector<32x256xf32>
    %272 = arith.mulf %244, %271 : vector<32x256xf32>
    %273 = arith.addf %270, %272 : vector<32x256xf32>
    %274 = vector.broadcast %6 : vector<32x1xf32> to vector<32x256xf32>
    %275 = arith.mulf %248, %274 : vector<32x256xf32>
    %276 = arith.addf %273, %275 : vector<32x256xf32>
    %277 = vector.broadcast %7 : vector<32x1xf32> to vector<32x256xf32>
    %278 = arith.mulf %252, %277 : vector<32x256xf32>
    %279 = arith.addf %276, %278 : vector<32x256xf32>
    %280 = arith.truncf %279 : vector<32x256xf32> to vector<32x256xbf16>
    %cst_131 = arith.constant dense<0.000000e+00> : vector<32x256xf32>
    %281 = tpu.matmul %8, %280, %cst_131 {dimension_numbers = #tpu.dot_dimension_numbers<[1], [0], [0], [1], [0, 0, 1, 1], [], []>} : vector<32x32xbf16>, vector<32x256xbf16>, vector<32x256xf32> -> vector<32x256xf32>
    %282 = arith.truncf %281 : vector<32x256xf32> to vector<32x256xbf16>
    %c1_132 = arith.constant 1 : index
    %c0_133 = arith.constant 0 : index
    %c0_134 = arith.constant 0 : index
    %c0_135 = arith.constant 0 : index
    %283 = vector.load %arg6[%c1_132, %c0_133, %c0_134, %c0_135] : memref<2x8x32x256xbf16, #tpu.memory_space<vmem>>, vector<1x1x32x256xbf16>
    %284 = vector.shape_cast %283 : vector<1x1x32x256xbf16> to vector<32x256xbf16>
    %285 = vector.shape_cast %282 : vector<32x256xbf16> to vector<1x1x32x256xbf16>
    tpu.vector_store %arg6[%c1_132, %c0_133, %c0_134, %c0_135], %285 {strides = array<i32>} : memref<2x8x32x256xbf16, #tpu.memory_space<vmem>>, vector<1x1x32x256xbf16>,
    %286 = vector.broadcast %4 : vector<32x1xf32> to vector<32x256xf32>
    %287 = arith.mulf %244, %286 : vector<32x256xf32>
    %288 = vector.broadcast %3 : vector<32x1xf32> to vector<32x256xf32>
    %289 = arith.mulf %240, %288 : vector<32x256xf32>
    %290 = arith.addf %287, %289 : vector<32x256xf32>
    %291 = vector.broadcast %5 : vector<32x1xf32> to vector<32x256xf32>
    %292 = arith.mulf %248, %291 : vector<32x256xf32>
    %293 = arith.addf %290, %292 : vector<32x256xf32>
    %294 = vector.broadcast %6 : vector<32x1xf32> to vector<32x256xf32>
    %295 = arith.mulf %252, %294 : vector<32x256xf32>
    %296 = arith.addf %293, %295 : vector<32x256xf32>
    %297 = vector.broadcast %7 : vector<32x1xf32> to vector<32x256xf32>
    %298 = arith.mulf %256, %297 : vector<32x256xf32>
    %299 = arith.addf %296, %298 : vector<32x256xf32>
    %300 = arith.truncf %299 : vector<32x256xf32> to vector<32x256xbf16>
    %cst_136 = arith.constant dense<0.000000e+00> : vector<32x256xf32>
    %301 = tpu.matmul %8, %300, %cst_136 {dimension_numbers = #tpu.dot_dimension_numbers<[1], [0], [0], [1], [0, 0, 1, 1], [], []>} : vector<32x32xbf16>, vector<32x256xbf16>, vector<32x256xf32> -> vector<32x256xf32>
    %302 = arith.truncf %301 : vector<32x256xf32> to vector<32x256xbf16>
    %c1_137 = arith.constant 1 : index
    %c1_138 = arith.constant 1 : index
    %c0_139 = arith.constant 0 : index
    %c0_140 = arith.constant 0 : index
    %303 = vector.load %arg6[%c1_137, %c1_138, %c0_139, %c0_140] : memref<2x8x32x256xbf16, #tpu.memory_space<vmem>>, vector<1x1x32x256xbf16>
    %304 = vector.shape_cast %303 : vector<1x1x32x256xbf16> to vector<32x256xbf16>
    %305 = vector.shape_cast %302 : vector<32x256xbf16> to vector<1x1x32x256xbf16>
    tpu.vector_store %arg6[%c1_137, %c1_138, %c0_139, %c0_140], %305 {strides = array<i32>} : memref<2x8x32x256xbf16, #tpu.memory_space<vmem>>, vector<1x1x32x256xbf16>,
    %306 = vector.broadcast %4 : vector<32x1xf32> to vector<32x256xf32>
    %307 = arith.mulf %248, %306 : vector<32x256xf32>
    %308 = vector.broadcast %2 : vector<32x1xf32> to vector<32x256xf32>
    %309 = arith.mulf %240, %308 : vector<32x256xf32>
    %310 = arith.addf %307, %309 : vector<32x256xf32>
    %311 = vector.broadcast %3 : vector<32x1xf32> to vector<32x256xf32>
    %312 = arith.mulf %244, %311 : vector<32x256xf32>
    %313 = arith.addf %310, %312 : vector<32x256xf32>
    %314 = vector.broadcast %5 : vector<32x1xf32> to vector<32x256xf32>
    %315 = arith.mulf %252, %314 : vector<32x256xf32>
    %316 = arith.addf %313, %315 : vector<32x256xf32>
    %317 = vector.broadcast %6 : vector<32x1xf32> to vector<32x256xf32>
    %318 = arith.mulf %256, %317 : vector<32x256xf32>
    %319 = arith.addf %316, %318 : vector<32x256xf32>
    %320 = vector.broadcast %7 : vector<32x1xf32> to vector<32x256xf32>
    %321 = arith.mulf %260, %320 : vector<32x256xf32>
    %322 = arith.addf %319, %321 : vector<32x256xf32>
    %323 = arith.truncf %322 : vector<32x256xf32> to vector<32x256xbf16>
    %cst_141 = arith.constant dense<0.000000e+00> : vector<32x256xf32>
    %324 = tpu.matmul %8, %323, %cst_141 {dimension_numbers = #tpu.dot_dimension_numbers<[1], [0], [0], [1], [0, 0, 1, 1], [], []>} : vector<32x32xbf16>, vector<32x256xbf16>, vector<32x256xf32> -> vector<32x256xf32>
    %325 = arith.truncf %324 : vector<32x256xf32> to vector<32x256xbf16>
    %c1_142 = arith.constant 1 : index
    %c2_143 = arith.constant 2 : index
    %c0_144 = arith.constant 0 : index
    %c0_145 = arith.constant 0 : index
    %326 = vector.load %arg6[%c1_142, %c2_143, %c0_144, %c0_145] : memref<2x8x32x256xbf16, #tpu.memory_space<vmem>>, vector<1x1x32x256xbf16>
    %327 = vector.shape_cast %326 : vector<1x1x32x256xbf16> to vector<32x256xbf16>
    %328 = vector.shape_cast %325 : vector<32x256xbf16> to vector<1x1x32x256xbf16>
    tpu.vector_store %arg6[%c1_142, %c2_143, %c0_144, %c0_145], %328 {strides = array<i32>} : memref<2x8x32x256xbf16, #tpu.memory_space<vmem>>, vector<1x1x32x256xbf16>,
    %329 = vector.broadcast %4 : vector<32x1xf32> to vector<32x256xf32>
    %330 = arith.mulf %252, %329 : vector<32x256xf32>
    %331 = vector.broadcast %1 : vector<32x1xf32> to vector<32x256xf32>
    %332 = arith.mulf %240, %331 : vector<32x256xf32>
    %333 = arith.addf %330, %332 : vector<32x256xf32>
    %334 = vector.broadcast %2 : vector<32x1xf32> to vector<32x256xf32>
    %335 = arith.mulf %244, %334 : vector<32x256xf32>
    %336 = arith.addf %333, %335 : vector<32x256xf32>
    %337 = vector.broadcast %3 : vector<32x1xf32> to vector<32x256xf32>
    %338 = arith.mulf %248, %337 : vector<32x256xf32>
    %339 = arith.addf %336, %338 : vector<32x256xf32>
    %340 = vector.broadcast %5 : vector<32x1xf32> to vector<32x256xf32>
    %341 = arith.mulf %256, %340 : vector<32x256xf32>
    %342 = arith.addf %339, %341 : vector<32x256xf32>
    %343 = vector.broadcast %6 : vector<32x1xf32> to vector<32x256xf32>
    %344 = arith.mulf %260, %343 : vector<32x256xf32>
    %345 = arith.addf %342, %344 : vector<32x256xf32>
    %346 = vector.broadcast %7 : vector<32x1xf32> to vector<32x256xf32>
    %347 = arith.mulf %264, %346 : vector<32x256xf32>
    %348 = arith.addf %345, %347 : vector<32x256xf32>
    %349 = arith.truncf %348 : vector<32x256xf32> to vector<32x256xbf16>
    %cst_146 = arith.constant dense<0.000000e+00> : vector<32x256xf32>
    %350 = tpu.matmul %8, %349, %cst_146 {dimension_numbers = #tpu.dot_dimension_numbers<[1], [0], [0], [1], [0, 0, 1, 1], [], []>} : vector<32x32xbf16>, vector<32x256xbf16>, vector<32x256xf32> -> vector<32x256xf32>
    %351 = arith.truncf %350 : vector<32x256xf32> to vector<32x256xbf16>
    %c1_147 = arith.constant 1 : index
    %c3_148 = arith.constant 3 : index
    %c0_149 = arith.constant 0 : index
    %c0_150 = arith.constant 0 : index
    %352 = vector.load %arg6[%c1_147, %c3_148, %c0_149, %c0_150] : memref<2x8x32x256xbf16, #tpu.memory_space<vmem>>, vector<1x1x32x256xbf16>
    %353 = vector.shape_cast %352 : vector<1x1x32x256xbf16> to vector<32x256xbf16>
    %354 = vector.shape_cast %351 : vector<32x256xbf16> to vector<1x1x32x256xbf16>
    tpu.vector_store %arg6[%c1_147, %c3_148, %c0_149, %c0_150], %354 {strides = array<i32>} : memref<2x8x32x256xbf16, #tpu.memory_space<vmem>>, vector<1x1x32x256xbf16>,
    %355 = vector.broadcast %4 : vector<32x1xf32> to vector<32x256xf32>
    %356 = arith.mulf %256, %355 : vector<32x256xf32>
    %357 = vector.broadcast %1 : vector<32x1xf32> to vector<32x256xf32>
    %358 = arith.mulf %244, %357 : vector<32x256xf32>
    %359 = arith.addf %356, %358 : vector<32x256xf32>
    %360 = vector.broadcast %2 : vector<32x1xf32> to vector<32x256xf32>
    %361 = arith.mulf %248, %360 : vector<32x256xf32>
    %362 = arith.addf %359, %361 : vector<32x256xf32>
    %363 = vector.broadcast %3 : vector<32x1xf32> to vector<32x256xf32>
    %364 = arith.mulf %252, %363 : vector<32x256xf32>
    %365 = arith.addf %362, %364 : vector<32x256xf32>
    %366 = vector.broadcast %5 : vector<32x1xf32> to vector<32x256xf32>
    %367 = arith.mulf %260, %366 : vector<32x256xf32>
    %368 = arith.addf %365, %367 : vector<32x256xf32>
    %369 = vector.broadcast %6 : vector<32x1xf32> to vector<32x256xf32>
    %370 = arith.mulf %264, %369 : vector<32x256xf32>
    %371 = arith.addf %368, %370 : vector<32x256xf32>
    %372 = vector.broadcast %7 : vector<32x1xf32> to vector<32x256xf32>
    %373 = arith.mulf %268, %372 : vector<32x256xf32>
    %374 = arith.addf %371, %373 : vector<32x256xf32>
    %375 = arith.truncf %374 : vector<32x256xf32> to vector<32x256xbf16>
    %cst_151 = arith.constant dense<0.000000e+00> : vector<32x256xf32>
    %376 = tpu.matmul %8, %375, %cst_151 {dimension_numbers = #tpu.dot_dimension_numbers<[1], [0], [0], [1], [0, 0, 1, 1], [], []>} : vector<32x32xbf16>, vector<32x256xbf16>, vector<32x256xf32> -> vector<32x256xf32>
    %377 = arith.truncf %376 : vector<32x256xf32> to vector<32x256xbf16>
    %c1_152 = arith.constant 1 : index
    %c4_153 = arith.constant 4 : index
    %c0_154 = arith.constant 0 : index
    %c0_155 = arith.constant 0 : index
    %378 = vector.load %arg6[%c1_152, %c4_153, %c0_154, %c0_155] : memref<2x8x32x256xbf16, #tpu.memory_space<vmem>>, vector<1x1x32x256xbf16>
    %379 = vector.shape_cast %378 : vector<1x1x32x256xbf16> to vector<32x256xbf16>
    %380 = vector.shape_cast %377 : vector<32x256xbf16> to vector<1x1x32x256xbf16>
    tpu.vector_store %arg6[%c1_152, %c4_153, %c0_154, %c0_155], %380 {strides = array<i32>} : memref<2x8x32x256xbf16, #tpu.memory_space<vmem>>, vector<1x1x32x256xbf16>,
    %381 = vector.broadcast %4 : vector<32x1xf32> to vector<32x256xf32>
    %382 = arith.mulf %260, %381 : vector<32x256xf32>
    %383 = vector.broadcast %1 : vector<32x1xf32> to vector<32x256xf32>
    %384 = arith.mulf %248, %383 : vector<32x256xf32>
    %385 = arith.addf %382, %384 : vector<32x256xf32>
    %386 = vector.broadcast %2 : vector<32x1xf32> to vector<32x256xf32>
    %387 = arith.mulf %252, %386 : vector<32x256xf32>
    %388 = arith.addf %385, %387 : vector<32x256xf32>
    %389 = vector.broadcast %3 : vector<32x1xf32> to vector<32x256xf32>
    %390 = arith.mulf %256, %389 : vector<32x256xf32>
    %391 = arith.addf %388, %390 : vector<32x256xf32>
    %392 = vector.broadcast %5 : vector<32x1xf32> to vector<32x256xf32>
    %393 = arith.mulf %264, %392 : vector<32x256xf32>
    %394 = arith.addf %391, %393 : vector<32x256xf32>
    %395 = vector.broadcast %6 : vector<32x1xf32> to vector<32x256xf32>
    %396 = arith.mulf %268, %395 : vector<32x256xf32>
    %397 = arith.addf %394, %396 : vector<32x256xf32>
    %398 = arith.truncf %397 : vector<32x256xf32> to vector<32x256xbf16>
    %cst_156 = arith.constant dense<0.000000e+00> : vector<32x256xf32>
    %399 = tpu.matmul %8, %398, %cst_156 {dimension_numbers = #tpu.dot_dimension_numbers<[1], [0], [0], [1], [0, 0, 1, 1], [], []>} : vector<32x32xbf16>, vector<32x256xbf16>, vector<32x256xf32> -> vector<32x256xf32>
    %400 = arith.truncf %399 : vector<32x256xf32> to vector<32x256xbf16>
    %c1_157 = arith.constant 1 : index
    %c5_158 = arith.constant 5 : index
    %c0_159 = arith.constant 0 : index
    %c0_160 = arith.constant 0 : index
    %401 = vector.load %arg6[%c1_157, %c5_158, %c0_159, %c0_160] : memref<2x8x32x256xbf16, #tpu.memory_space<vmem>>, vector<1x1x32x256xbf16>
    %402 = vector.shape_cast %401 : vector<1x1x32x256xbf16> to vector<32x256xbf16>
    %403 = vector.shape_cast %400 : vector<32x256xbf16> to vector<1x1x32x256xbf16>
    tpu.vector_store %arg6[%c1_157, %c5_158, %c0_159, %c0_160], %403 {strides = array<i32>} : memref<2x8x32x256xbf16, #tpu.memory_space<vmem>>, vector<1x1x32x256xbf16>,
    %404 = vector.broadcast %4 : vector<32x1xf32> to vector<32x256xf32>
    %405 = arith.mulf %264, %404 : vector<32x256xf32>
    %406 = vector.broadcast %1 : vector<32x1xf32> to vector<32x256xf32>
    %407 = arith.mulf %252, %406 : vector<32x256xf32>
    %408 = arith.addf %405, %407 : vector<32x256xf32>
    %409 = vector.broadcast %2 : vector<32x1xf32> to vector<32x256xf32>
    %410 = arith.mulf %256, %409 : vector<32x256xf32>
    %411 = arith.addf %408, %410 : vector<32x256xf32>
    %412 = vector.broadcast %3 : vector<32x1xf32> to vector<32x256xf32>
    %413 = arith.mulf %260, %412 : vector<32x256xf32>
    %414 = arith.addf %411, %413 : vector<32x256xf32>
    %415 = vector.broadcast %5 : vector<32x1xf32> to vector<32x256xf32>
    %416 = arith.mulf %268, %415 : vector<32x256xf32>
    %417 = arith.addf %414, %416 : vector<32x256xf32>
    %418 = arith.truncf %417 : vector<32x256xf32> to vector<32x256xbf16>
    %cst_161 = arith.constant dense<0.000000e+00> : vector<32x256xf32>
    %419 = tpu.matmul %8, %418, %cst_161 {dimension_numbers = #tpu.dot_dimension_numbers<[1], [0], [0], [1], [0, 0, 1, 1], [], []>} : vector<32x32xbf16>, vector<32x256xbf16>, vector<32x256xf32> -> vector<32x256xf32>
    %420 = arith.truncf %419 : vector<32x256xf32> to vector<32x256xbf16>
    %c1_162 = arith.constant 1 : index
    %c6_163 = arith.constant 6 : index
    %c0_164 = arith.constant 0 : index
    %c0_165 = arith.constant 0 : index
    %421 = vector.load %arg6[%c1_162, %c6_163, %c0_164, %c0_165] : memref<2x8x32x256xbf16, #tpu.memory_space<vmem>>, vector<1x1x32x256xbf16>
    %422 = vector.shape_cast %421 : vector<1x1x32x256xbf16> to vector<32x256xbf16>
    %423 = vector.shape_cast %420 : vector<32x256xbf16> to vector<1x1x32x256xbf16>
    tpu.vector_store %arg6[%c1_162, %c6_163, %c0_164, %c0_165], %423 {strides = array<i32>} : memref<2x8x32x256xbf16, #tpu.memory_space<vmem>>, vector<1x1x32x256xbf16>,
    %424 = vector.broadcast %4 : vector<32x1xf32> to vector<32x256xf32>
    %425 = arith.mulf %268, %424 : vector<32x256xf32>
    %426 = vector.broadcast %1 : vector<32x1xf32> to vector<32x256xf32>
    %427 = arith.mulf %256, %426 : vector<32x256xf32>
    %428 = arith.addf %425, %427 : vector<32x256xf32>
    %429 = vector.broadcast %2 : vector<32x1xf32> to vector<32x256xf32>
    %430 = arith.mulf %260, %429 : vector<32x256xf32>
    %431 = arith.addf %428, %430 : vector<32x256xf32>
    %432 = vector.broadcast %3 : vector<32x1xf32> to vector<32x256xf32>
    %433 = arith.mulf %264, %432 : vector<32x256xf32>
    %434 = arith.addf %431, %433 : vector<32x256xf32>
    %435 = arith.truncf %434 : vector<32x256xf32> to vector<32x256xbf16>
    %cst_166 = arith.constant dense<0.000000e+00> : vector<32x256xf32>
    %436 = tpu.matmul %8, %435, %cst_166 {dimension_numbers = #tpu.dot_dimension_numbers<[1], [0], [0], [1], [0, 0, 1, 1], [], []>} : vector<32x32xbf16>, vector<32x256xbf16>, vector<32x256xf32> -> vector<32x256xf32>
    %437 = arith.truncf %436 : vector<32x256xf32> to vector<32x256xbf16>
    %c1_167 = arith.constant 1 : index
    %c7_168 = arith.constant 7 : index
    %c0_169 = arith.constant 0 : index
    %c0_170 = arith.constant 0 : index
    %438 = vector.load %arg6[%c1_167, %c7_168, %c0_169, %c0_170] : memref<2x8x32x256xbf16, #tpu.memory_space<vmem>>, vector<1x1x32x256xbf16>
    %439 = vector.shape_cast %438 : vector<1x1x32x256xbf16> to vector<32x256xbf16>
    %440 = vector.shape_cast %437 : vector<32x256xbf16> to vector<1x1x32x256xbf16>
    tpu.vector_store %arg6[%c1_167, %c7_168, %c0_169, %c0_170], %440 {strides = array<i32>} : memref<2x8x32x256xbf16, #tpu.memory_space<vmem>>, vector<1x1x32x256xbf16>,
    return
  }
  func.func @transform_0(%arg0: i32, %arg1: i32) -> (i32, i32, i32, i32) {
    %c0_i32 = arith.constant 0 : i32
    %c0_i32_0 = arith.constant 0 : i32
    %c0_i32_1 = arith.constant 0 : i32
    return %arg0, %c0_i32, %c0_i32_0, %arg1 : i32, i32, i32, i32
  }
  func.func @transform_1(%arg0: i32, %arg1: i32) -> (i32, i32, i32, i32) {
    %c0_i32 = arith.constant 0 : i32
    %c0_i32_0 = arith.constant 0 : i32
    %c0_i32_1 = arith.constant 0 : i32
    return %arg0, %c0_i32, %c0_i32_0, %arg1 : i32, i32, i32, i32
  }
  func.func @transform_2(%arg0: i32, %arg1: i32) -> (i32, i32) {
    %c0_i32 = arith.constant 0 : i32
    %c0_i32_0 = arith.constant 0 : i32
    %c0_i32_1 = arith.constant 0 : i32
    return %c0_i32, %c0_i32_0 : i32, i32
  }
  func.func @transform_3(%arg0: i32, %arg1: i32) -> (i32, i32) {
    %c0_i32 = arith.constant 0 : i32
    %c0_i32_0 = arith.constant 0 : i32
    %c0_i32_1 = arith.constant 0 : i32
    return %c0_i32, %c0_i32_0 : i32, i32
  }
  func.func @transform_4(%arg0: i32, %arg1: i32) -> (i32, i32, i32, i32) {
    %c0_i32 = arith.constant 0 : i32
    %c0_i32_0 = arith.constant 0 : i32
    %c0_i32_1 = arith.constant 0 : i32
    return %arg0, %c0_i32, %c0_i32_0, %arg1 : i32, i32, i32, i32
  }
}

</mosaic_0001>

<llo_original>
// kernel: tpu_custom_call.1
$region0: #{tpu_custom_call.1}
  #allocation0 [shape = 'u32[]', space=smem, size = 0x4, offset = 0x4, fixed_abs, tag = 'smem constant byte address 0x4 - core index']
  #allocation1 [shape = 'u32[144,128]{1,0:T(1,128)}', space=vmem, size = 0x12000, scoped, tag = 'internal scratch']
  %s0 = inlined_call_operand.hbm [shape: bf16[2,4,32,256], index: 0, kind: input, shape index: {}]
  %s1 = inlined_call_operand.hbm [shape: bf16[2,8,32,256], index: 1, kind: input, shape index: {}]
  %s2 = inlined_call_operand.vmem [shape: f32[32,8], index: 2, kind: input, shape index: {}]
  %s3 = inlined_call_operand.vmem [shape: bf16[32,32], index: 3, kind: input, shape index: {}]
  %s4 = inlined_call_operand.hbm [shape: bf16[2,8,32,256], index: 4, kind: output, shape index: {}]
  %s5 = sld [smem:[#allocation0]]
  $region34: #{tpu_custom_call.1} parent=0
    _
  %s7 = ssub.s32 1, %s5
  %s8 = scalar_select 0, %s7, %s5
  $region1: #{tpu_custom_call.1} parent=0
    #allocation2 [shape = 'u8[131072]{0}', space=vmem, size = 0x20000, scoped, tag = 'input window, operand 0, single buffered']
    #allocation3 [shape = 's32[1]{0}', space=sflag, size = 0x4, scoped, tag = 'scoped memory for tpu_custom_call.1']
    #allocation4 [shape = 's32[1]{0}', space=sflag, size = 0x4, scoped, tag = 'scoped memory for tpu_custom_call.1']
    #allocation5 [shape = 'u8[262144]{0}', space=vmem, size = 0x40000, scoped, tag = 'input window, operand 1, single buffered']
    #allocation6 [shape = 's32[1]{0}', space=sflag, size = 0x4, scoped, tag = 'scoped memory for tpu_custom_call.1']
    #allocation7 [shape = 'u8[262144]{0}', space=vmem, size = 0x40000, scoped, tag = 'output window, operand 0, single buffered']
    %9 = vsyncpa [#allocation3], 0
    %10 = vsyncpa [#allocation6], 0
    %11 = vsyncpa [#allocation4], 0
    // Predicated region
    $region2: #{tpu_custom_call.1} parent=1 // pred_check
      _
    $region3: #{tpu_custom_call.1} parent=1 // pred_check_branch
      %13 = sbr.rel (0) target = $region5
    $region4: #{tpu_custom_call.1} parent=1 // pred_region
      %s15 = ssub.s32 4096, 4096
      %16 = vsyncadd [#allocation3], %s15
      %s17 = sshll.u32 [#allocation2], 4
      %s18 = int_to_ptr.vmem [resolvable:$true] %s17
      %23 = dma.hbm_to_vmem [thread:$0]  %s0, 4096, %s18, [#allocation3], 128, 128, 8
    $region5: #{tpu_custom_call.1} parent=1 // pred_fallthru
      _
    // Predicated region
    $region6: #{tpu_custom_call.1} parent=1 // pred_check
      _
    $region7: #{tpu_custom_call.1} parent=1 // pred_check_branch
      %25 = sbr.rel (0) target = $region9
    $region8: #{tpu_custom_call.1} parent=1 // pred_region
      %s27 = ssub.s32 8192, 8192
      %28 = vsyncadd [#allocation6], %s27
      %s29 = sshll.u32 [#allocation5], 4
      %s30 = int_to_ptr.vmem [resolvable:$true] %s29
      %35 = dma.hbm_to_vmem [thread:$0]  %s1, 8192, %s30, [#allocation6], 128, 128, 8
    $region9: #{tpu_custom_call.1} parent=1 // pred_fallthru
      _
    // Predicated region
    $region10: #{tpu_custom_call.1} parent=1 // pred_check
      _
    $region11: #{tpu_custom_call.1} parent=1 // pred_check_branch
      %37 = sbr.rel (0) target = $region13
    $region12: #{tpu_custom_call.1} parent=1 // pred_region
      _
    $region13: #{tpu_custom_call.1} parent=1 // pred_fallthru
      _
    // Predicated region
    $region14: #{tpu_custom_call.1} parent=1 // pred_check
      _
    $region15: #{tpu_custom_call.1} parent=1 // pred_check_branch
      %39 = sbr.rel (0) target = $region17
    $region16: #{tpu_custom_call.1} parent=1 // pred_region
      _
    $region17: #{tpu_custom_call.1} parent=1 // pred_fallthru
      _
    // Predicated region
    $region18: #{tpu_custom_call.1} parent=1 // pred_check
      _
    $region19: #{tpu_custom_call.1} parent=1 // pred_check_branch
      %41 = sbr.rel (0) target = $region21
    $region20: #{tpu_custom_call.1} parent=1 // pred_region
      %42 = dma.done [#allocation3], 4096
    $region21: #{tpu_custom_call.1} parent=1 // pred_fallthru
      _
    // Predicated region
    $region22: #{tpu_custom_call.1} parent=1 // pred_check
      _
    $region23: #{tpu_custom_call.1} parent=1 // pred_check_branch
      %44 = sbr.rel (0) target = $region25
    $region24: #{tpu_custom_call.1} parent=1 // pred_region
      %45 = dma.done [#allocation6], 8192
    $region25: #{tpu_custom_call.1} parent=1 // pred_fallthru
      _
    %v47 = vld [vmem:[%s2] sm:$0xff]
    %v48 = vld [vmem:[%s2 + $0x8] sm:$0xff]
    %v49 = vld [vmem:[%s2 + $0x10] sm:$0xff]
    %v50 = vld [vmem:[%s2 + $0x18] sm:$0xff]
    %v51 = vld [vmem:[%s3] sm:$0xf]
    %v52 = vld [vmem:[%s3 + $0x4] sm:$0xf]
    %v53 = vld [vmem:[%s3 + $0x8] sm:$0xf]
    %v54 = vld [vmem:[%s3 + $0xc] sm:$0xf]
    %v55 = vld [vmem:[#allocation2] sm:$0xff]
    %v56 = vld [vmem:[#allocation2 + $0x8] sm:$0xff]
    %v57 = vld [vmem:[#allocation2 + $0x10] sm:$0xff]
    %v58 = vld [vmem:[#allocation2 + $0x18] sm:$0xff]
    %v59 = vunpack.c.l.bf16 %v55
    %v60 = vunpack.c.h.bf16 %v55
    %v61 = vunpack.c.l.bf16 %v56
    %v62 = vunpack.c.h.bf16 %v56
    %v63 = vunpack.c.l.bf16 %v57
    %v64 = vunpack.c.h.bf16 %v57
    %v65 = vunpack.c.l.bf16 %v58
    %v66 = vunpack.c.h.bf16 %v58
    %s67 = scalar_lea.vmem [#allocation2], 32
    %v68 = vld [vmem:[%s67] sm:$0xff]
    %v69 = vld [vmem:[%s67 + $0x8] sm:$0xff]
    %v70 = vld [vmem:[%s67 + $0x10] sm:$0xff]
    %v71 = vld [vmem:[%s67 + $0x18] sm:$0xff]
    %v72 = vunpack.c.l.bf16 %v68
    %v73 = vunpack.c.h.bf16 %v68
    %v74 = vunpack.c.l.bf16 %v69
    %v75 = vunpack.c.h.bf16 %v69
    %v76 = vunpack.c.l.bf16 %v70
    %v77 = vunpack.c.h.bf16 %v70
    %v78 = vunpack.c.l.bf16 %v71
    %v79 = vunpack.c.h.bf16 %v71
    %s80 = scalar_lea.vmem [#allocation2], 64
    %v81 = vld [vmem:[%s80] sm:$0xff]
    %v82 = vld [vmem:[%s80 + $0x8] sm:$0xff]
    %v83 = vld [vmem:[%s80 + $0x10] sm:$0xff]
    %v84 = vld [vmem:[%s80 + $0x18] sm:$0xff]
    %v85 = vunpack.c.l.bf16 %v81
    %v86 = vunpack.c.h.bf16 %v81
    %v87 = vunpack.c.l.bf16 %v82
    %v88 = vunpack.c.h.bf16 %v82
    %v89 = vunpack.c.l.bf16 %v83
    %v90 = vunpack.c.h.bf16 %v83
    %v91 = vunpack.c.l.bf16 %v84
    %v92 = vunpack.c.h.bf16 %v84
    %s93 = scalar_lea.vmem [#allocation2], 96
    %v94 = vld [vmem:[%s93] sm:$0xff]
    %v95 = vld [vmem:[%s93 + $0x8] sm:$0xff]
    %v96 = vld [vmem:[%s93 + $0x10] sm:$0xff]
    %v97 = vld [vmem:[%s93 + $0x18] sm:$0xff]
    %v98 = vunpack.c.l.bf16 %v94
    %v99 = vunpack.c.h.bf16 %v94
    %v100 = vunpack.c.l.bf16 %v95
    %v101 = vunpack.c.h.bf16 %v95
    %v102 = vunpack.c.l.bf16 %v96
    %v103 = vunpack.c.h.bf16 %v96
    %v104 = vunpack.c.l.bf16 %v97
    %v105 = vunpack.c.h.bf16 %v97
    %v106 = vld [vmem:[#allocation5] sm:$0xff]
    %v107 = vld [vmem:[#allocation5 + $0x8] sm:$0xff]
    %v108 = vld [vmem:[#allocation5 + $0x10] sm:$0xff]
    %v109 = vld [vmem:[#allocation5 + $0x18] sm:$0xff]
    %v110 = vunpack.c.l.bf16 %v106
    %v111 = vunpack.c.h.bf16 %v106
    %v112 = vunpack.c.l.bf16 %v107
    %v113 = vunpack.c.h.bf16 %v107
    %v114 = vunpack.c.l.bf16 %v108
    %v115 = vunpack.c.h.bf16 %v108
    %v116 = vunpack.c.l.bf16 %v109
    %v117 = vunpack.c.h.bf16 %v109
    %v118 = vadd.f32 %v59, %v110
    %v119 = vadd.f32 %v60, %v111
    %v120 = vadd.f32 %v61, %v112
    %v121 = vadd.f32 %v62, %v113
    %v122 = vadd.f32 %v63, %v114
    %v123 = vadd.f32 %v64, %v115
    %v124 = vadd.f32 %v65, %v116
    %v125 = vadd.f32 %v66, %v117
    %s126 = scalar_lea.vmem [#allocation5], 32
    %v127 = vld [vmem:[%s126] sm:$0xff]
    %v128 = vld [vmem:[%s126 + $0x8] sm:$0xff]
    %v129 = vld [vmem:[%s126 + $0x10] sm:$0xff]
    %v130 = vld [vmem:[%s126 + $0x18] sm:$0xff]
    %v131 = vunpack.c.l.bf16 %v127
    %v132 = vunpack.c.h.bf16 %v127
    %v133 = vunpack.c.l.bf16 %v128
    %v134 = vunpack.c.h.bf16 %v128
    %v135 = vunpack.c.l.bf16 %v129
    %v136 = vunpack.c.h.bf16 %v129
    %v137 = vunpack.c.l.bf16 %v130
    %v138 = vunpack.c.h.bf16 %v130
    %v139 = vadd.f32 %v59, %v131
    %v140 = vadd.f32 %v60, %v132
    %v141 = vadd.f32 %v61, %v133
    %v142 = vadd.f32 %v62, %v134
    %v143 = vadd.f32 %v63, %v135
    %v144 = vadd.f32 %v64, %v136
    %v145 = vadd.f32 %v65, %v137
    %v146 = vadd.f32 %v66, %v138
    %s147 = scalar_lea.vmem [#allocation5], 64
    %v148 = vld [vmem:[%s147] sm:$0xff]
    %v149 = vld [vmem:[%s147 + $0x8] sm:$0xff]
    %v150 = vld [vmem:[%s147 + $0x10] sm:$0xff]
    %v151 = vld [vmem:[%s147 + $0x18] sm:$0xff]
    %v152 = vunpack.c.l.bf16 %v148
    %v153 = vunpack.c.h.bf16 %v148
    %v154 = vunpack.c.l.bf16 %v149
    %v155 = vunpack.c.h.bf16 %v149
    %v156 = vunpack.c.l.bf16 %v150
    %v157 = vunpack.c.h.bf16 %v150
    %v158 = vunpack.c.l.bf16 %v151
    %v159 = vunpack.c.h.bf16 %v151
    %v160 = vadd.f32 %v72, %v152
    %v161 = vadd.f32 %v73, %v153
    %v162 = vadd.f32 %v74, %v154
    %v163 = vadd.f32 %v75, %v155
    %v164 = vadd.f32 %v76, %v156
    %v165 = vadd.f32 %v77, %v157
    %v166 = vadd.f32 %v78, %v158
    %v167 = vadd.f32 %v79, %v159
    %s168 = scalar_lea.vmem [#allocation5], 96
    %v169 = vld [vmem:[%s168] sm:$0xff]
    %v170 = vld [vmem:[%s168 + $0x8] sm:$0xff]
    %v171 = vld [vmem:[%s168 + $0x10] sm:$0xff]
    %v172 = vld [vmem:[%s168 + $0x18] sm:$0xff]
    %v173 = vunpack.c.l.bf16 %v169
    %v174 = vunpack.c.h.bf16 %v169
    %v175 = vunpack.c.l.bf16 %v170
    %v176 = vunpack.c.h.bf16 %v170
    %v177 = vunpack.c.l.bf16 %v171
    %v178 = vunpack.c.h.bf16 %v171
    %v179 = vunpack.c.l.bf16 %v172
    %v180 = vunpack.c.h.bf16 %v172
    %v181 = vadd.f32 %v72, %v173
    %v182 = vadd.f32 %v73, %v174
    %v183 = vadd.f32 %v74, %v175
    %v184 = vadd.f32 %v75, %v176
    %v185 = vadd.f32 %v76, %v177
    %v186 = vadd.f32 %v77, %v178
    %v187 = vadd.f32 %v78, %v179
    %v188 = vadd.f32 %v79, %v180
    %s189 = scalar_lea.vmem [#allocation5], 128
    %v190 = vld [vmem:[%s189] sm:$0xff]
    %v191 = vld [vmem:[%s189 + $0x8] sm:$0xff]
    %v192 = vld [vmem:[%s189 + $0x10] sm:$0xff]
    %v193 = vld [vmem:[%s189 + $0x18] sm:$0xff]
    %v194 = vunpack.c.l.bf16 %v190
    %v195 = vunpack.c.h.bf16 %v190
    %v196 = vunpack.c.l.bf16 %v191
    %v197 = vunpack.c.h.bf16 %v191
    %v198 = vunpack.c.l.bf16 %v192
    %v199 = vunpack.c.h.bf16 %v192
    %v200 = vunpack.c.l.bf16 %v193
    %v201 = vunpack.c.h.bf16 %v193
    %v202 = vadd.f32 %v85, %v194
    %v203 = vadd.f32 %v86, %v195
    %v204 = vadd.f32 %v87, %v196
    %v205 = vadd.f32 %v88, %v197
    %v206 = vadd.f32 %v89, %v198
    %v207 = vadd.f32 %v90, %v199
    %v208 = vadd.f32 %v91, %v200
    %v209 = vadd.f32 %v92, %v201
    %s210 = scalar_lea.vmem [#allocation5], 160
    %v211 = vld [vmem:[%s210] sm:$0xff]
    %v212 = vld [vmem:[%s210 + $0x8] sm:$0xff]
    %v213 = vld [vmem:[%s210 + $0x10] sm:$0xff]
    %v214 = vld [vmem:[%s210 + $0x18] sm:$0xff]
    %v215 = vunpack.c.l.bf16 %v211
    %v216 = vunpack.c.h.bf16 %v211
    %v217 = vunpack.c.l.bf16 %v212
    %v218 = vunpack.c.h.bf16 %v212
    %v219 = vunpack.c.l.bf16 %v213
    %v220 = vunpack.c.h.bf16 %v213
    %v221 = vunpack.c.l.bf16 %v214
    %v222 = vunpack.c.h.bf16 %v214
    %v223 = vadd.f32 %v85, %v215
    %v224 = vadd.f32 %v86, %v216
    %v225 = vadd.f32 %v87, %v217
    %v226 = vadd.f32 %v88, %v218
    %v227 = vadd.f32 %v89, %v219
    %v228 = vadd.f32 %v90, %v220
    %v229 = vadd.f32 %v91, %v221
    %v230 = vadd.f32 %v92, %v222
    %s231 = scalar_lea.vmem [#allocation5], 192
    %v232 = vld [vmem:[%s231] sm:$0xff]
    %v233 = vld [vmem:[%s231 + $0x8] sm:$0xff]
    %v234 = vld [vmem:[%s231 + $0x10] sm:$0xff]
    %v235 = vld [vmem:[%s231 + $0x18] sm:$0xff]
    %v236 = vunpack.c.l.bf16 %v232
    %v237 = vunpack.c.h.bf16 %v232
    %v238 = vunpack.c.l.bf16 %v233
    %v239 = vunpack.c.h.bf16 %v233
    %v240 = vunpack.c.l.bf16 %v234
    %v241 = vunpack.c.h.bf16 %v234
    %v242 = vunpack.c.l.bf16 %v235
    %v243 = vunpack.c.h.bf16 %v235
    %v244 = vadd.f32 %v98, %v236
    %v245 = vadd.f32 %v99, %v237
    %v246 = vadd.f32 %v100, %v238
    %v247 = vadd.f32 %v101, %v239
    %v248 = vadd.f32 %v102, %v240
    %v249 = vadd.f32 %v103, %v241
    %v250 = vadd.f32 %v104, %v242
    %v251 = vadd.f32 %v105, %v243
    %s252 = scalar_lea.vmem [#allocation5], 224
    %v253 = vld [vmem:[%s252] sm:$0xff]
    %v254 = vld [vmem:[%s252 + $0x8] sm:$0xff]
    %v255 = vld [vmem:[%s252 + $0x10] sm:$0xff]
    %v256 = vld [vmem:[%s252 + $0x18] sm:$0xff]
    %v257 = vunpack.c.l.bf16 %v253
    %v258 = vunpack.c.h.bf16 %v253
    %v259 = vunpack.c.l.bf16 %v254
    %v260 = vunpack.c.h.bf16 %v254
    %v261 = vunpack.c.l.bf16 %v255
    %v262 = vunpack.c.h.bf16 %v255
    %v263 = vunpack.c.l.bf16 %v256
    %v264 = vunpack.c.h.bf16 %v256
    %v265 = vadd.f32 %v98, %v257
    %v266 = vadd.f32 %v99, %v258
    %v267 = vadd.f32 %v100, %v259
    %v268 = vadd.f32 %v101, %v260
    %v269 = vadd.f32 %v102, %v261
    %v270 = vadd.f32 %v103, %v262
    %v271 = vadd.f32 %v104, %v263
    %v272 = vadd.f32 %v105, %v264
    %274 = vset.pattern.permute.xlu0 3
    %275 = vperm.xlu0 %274, %v47
    %v276 = vpop.permute.xlu0 %275
    %279 = vset.pattern.permute.xlu0 3
    %280 = vperm.xlu0 %279, %v48
    %v281 = vpop.permute.xlu0 %280
    %284 = vset.pattern.permute.xlu0 3
    %285 = vperm.xlu0 %284, %v49
    %v286 = vpop.permute.xlu0 %285
    %289 = vset.pattern.permute.xlu0 3
    %290 = vperm.xlu0 %289, %v50
    %v291 = vpop.permute.xlu0 %290
    %v293 = vmul.f32 %v118, %v276
    %v294 = vmul.f32 %v119, %v276
    %v295 = vmul.f32 %v120, %v281
    %v296 = vmul.f32 %v121, %v281
    %v297 = vmul.f32 %v122, %v286
    %v298 = vmul.f32 %v123, %v286
    %v299 = vmul.f32 %v124, %v291
    %v300 = vmul.f32 %v125, %v291
    %301 = vset.pattern.permute.xlu0 4
    %302 = vperm.xlu0 %301, %v47
    %v303 = vpop.permute.xlu0 %302
    %305 = vset.pattern.permute.xlu0 4
    %306 = vperm.xlu0 %305, %v48
    %v307 = vpop.permute.xlu0 %306
    %309 = vset.pattern.permute.xlu0 4
    %310 = vperm.xlu0 %309, %v49
    %v311 = vpop.permute.xlu0 %310
    %313 = vset.pattern.permute.xlu0 4
    %314 = vperm.xlu0 %313, %v50
    %v315 = vpop.permute.xlu0 %314
    %v317 = vmul.f32 %v139, %v303
    %v318 = vmul.f32 %v140, %v303
    %v319 = vmul.f32 %v141, %v307
    %v320 = vmul.f32 %v142, %v307
    %v321 = vmul.f32 %v143, %v311
    %v322 = vmul.f32 %v144, %v311
    %v323 = vmul.f32 %v145, %v315
    %v324 = vmul.f32 %v146, %v315
    %v325 = vadd.f32 %v293, %v317
    %v326 = vadd.f32 %v294, %v318
    %v327 = vadd.f32 %v295, %v319
    %v328 = vadd.f32 %v296, %v320
    %v329 = vadd.f32 %v297, %v321
    %v330 = vadd.f32 %v298, %v322
    %v331 = vadd.f32 %v299, %v323
    %v332 = vadd.f32 %v300, %v324
    %333 = vset.pattern.permute.xlu0 5
    %334 = vperm.xlu0 %333, %v47
    %v335 = vpop.permute.xlu0 %334
    %337 = vset.pattern.permute.xlu0 5
    %338 = vperm.xlu0 %337, %v48
    %v339 = vpop.permute.xlu0 %338
    %341 = vset.pattern.permute.xlu0 5
    %342 = vperm.xlu0 %341, %v49
    %v343 = vpop.permute.xlu0 %342
    %345 = vset.pattern.permute.xlu0 5
    %346 = vperm.xlu0 %345, %v50
    %v347 = vpop.permute.xlu0 %346
    %v349 = vmul.f32 %v160, %v335
    %v350 = vmul.f32 %v161, %v335
    %v351 = vmul.f32 %v162, %v339
    %v352 = vmul.f32 %v163, %v339
    %v353 = vmul.f32 %v164, %v343
    %v354 = vmul.f32 %v165, %v343
    %v355 = vmul.f32 %v166, %v347
    %v356 = vmul.f32 %v167, %v347
    %v357 = vadd.f32 %v325, %v349
    %v358 = vadd.f32 %v326, %v350
    %v359 = vadd.f32 %v327, %v351
    %v360 = vadd.f32 %v328, %v352
    %v361 = vadd.f32 %v329, %v353
    %v362 = vadd.f32 %v330, %v354
    %v363 = vadd.f32 %v331, %v355
    %v364 = vadd.f32 %v332, %v356
    %365 = vset.pattern.permute.xlu0 6
    %366 = vperm.xlu0 %365, %v47
    %v367 = vpop.permute.xlu0 %366
    %369 = vset.pattern.permute.xlu0 6
    %370 = vperm.xlu0 %369, %v48
    %v371 = vpop.permute.xlu0 %370
    %373 = vset.pattern.permute.xlu0 6
    %374 = vperm.xlu0 %373, %v49
    %v375 = vpop.permute.xlu0 %374
    %377 = vset.pattern.permute.xlu0 6
    %378 = vperm.xlu0 %377, %v50
    %v379 = vpop.permute.xlu0 %378
    %v381 = vmul.f32 %v181, %v367
    %v382 = vmul.f32 %v182, %v367
    %v383 = vmul.f32 %v183, %v371
    %v384 = vmul.f32 %v184, %v371
    %v385 = vmul.f32 %v185, %v375
    %v386 = vmul.f32 %v186, %v375
    %v387 = vmul.f32 %v187, %v379
    %v388 = vmul.f32 %v188, %v379
    %v389 = vadd.f32 %v357, %v381
    %v390 = vadd.f32 %v358, %v382
    %v391 = vadd.f32 %v359, %v383
    %v392 = vadd.f32 %v360, %v384
    %v393 = vadd.f32 %v361, %v385
    %v394 = vadd.f32 %v362, %v386
    %v395 = vadd.f32 %v363, %v387
    %v396 = vadd.f32 %v364, %v388
    %v397 = vpack.c.bf16 %v391, %v389
    %v398 = vpack.c.bf16 %v392, %v390
    %v399 = vpack.c.bf16 %v395, %v393
    %v400 = vpack.c.bf16 %v396, %v394
    %v405 = vunpack.c.l.b16 %v51
    %v406 = vunpack.c.l.b16 %v52
    %v407 = vunpack.c.l.b16 %v53
    %v408 = vunpack.c.l.b16 %v54
    %v409 = vpack.c.b16 %v406, %v405
    %v410 = vpack.c.b16 %v408, %v407
    %vm411 = vcmask 261120
    %v413 = vsel %vm411, %v409, 0
    %v416 = vsel %vm411, %v410, 0
    %418 = vmatprep.subr.bf16.mxu0 0
    %419 = vmatpush1.bf16.msra.mxu0 0
    %420 = vmatprep.subr.bf16.mxu0 0
    %421 = vmatpush1.bf16.msra.mxu0 0
    %422 = vmatprep.subr.bf16.mxu0 0
    %423 = vmatpush1.bf16.msra.mxu0 0
    %424 = vmatprep.subr.bf16.mxu0 0
    %425 = vmatpush1.bf16.msra.mxu0 0
    %426 = vmatprep.subr.bf16.mxu0 0
    %427 = vmatpush1.bf16.msra.mxu0 0
    %428 = vmatprep.subr.bf16.mxu0 0
    %429 = vmatpush1.bf16.msra.mxu0 0
    %430 = vmatprep.subr.bf16.mxu0 %v400
    %431 = vmatpush1.bf16.msra.mxu0 %v399
    %432 = vmatprep.subr.bf16.mxu0 %v398
    %433 = vmatpush1.bf16.msra.mxu0 %v397
    %434 = vmatprep.subr.bf16.mxu0 0
    %435 = vmatpush2.bf16.msra.mxu0 0
    %436 = vmatprep.subr.bf16.mxu0 0
    %437 = vmatpush2.bf16.msra.mxu0 0
    %438 = vmatprep.subr.bf16.mxu0 0
    %439 = vmatpush2.bf16.msra.mxu0 0
    %440 = vmatprep.subr.bf16.mxu0 0
    %441 = vmatpush2.bf16.msra.mxu0 0
    %442 = vmatprep.subr.bf16.mxu0 0
    %443 = vmatpush2.bf16.msra.mxu0 0
    %444 = vmatprep.subr.bf16.mxu0 0
    %445 = vmatpush2.bf16.msra.mxu0 0
    %446 = vmatprep.subr.bf16.mxu0 0
    %447 = vmatpush2.bf16.msra.mxu0 0
    %448 = vmatprep.subr.bf16.mxu0 0
    %449 = vmatpush2.bf16.msra.mxu0 0
    %450 = vmatprep.mubr.bf16.mxu0 0
    %451 = vmatmul.mubr.bf16.gmra.mxu0 %v413
    %v452 = vpop.f32.mrf.mxu0
    %v453 = vadd.f32 0.0, %v452
    %v454 = vpop.f32.mrf.mxu0
    %v455 = vadd.f32 0.0, %v454
    %v456 = vpop.f32.mrf.mxu0
    %v457 = vadd.f32 0.0, %v456
    %v458 = vpop.f32.mrf.mxu0
    %v459 = vadd.f32 0.0, %v458
    %460 = vmatprep.mubr.bf16.mxu0 0
    %461 = vmatmul.mubr.bf16.gmra.mxu0 %v416
    %v462 = vpop.f32.mrf.mxu0
    %v463 = vadd.f32 0.0, %v462
    %v464 = vpop.f32.mrf.mxu0
    %v465 = vadd.f32 0.0, %v464
    %v466 = vpop.f32.mrf.mxu0
    %v467 = vadd.f32 0.0, %v466
    %v468 = vpop.f32.mrf.mxu0
    %v469 = vadd.f32 0.0, %v468
    %470 = vdwg.mxu0
    %v471 = vpack.c.bf16 %v457, %v453
    %v472 = vpack.c.bf16 %v459, %v455
    %v473 = vpack.c.bf16 %v467, %v463
    %v474 = vpack.c.bf16 %v469, %v465
    %v479 = vunpack.c.l.b16 %v471
    %v480 = vunpack.c.l.b16 %v472
    %v481 = vunpack.c.h.b16 %v471
    %v482 = vunpack.c.h.b16 %v472
    %v483 = vunpack.c.l.b16 %v473
    %v484 = vunpack.c.l.b16 %v474
    %v485 = vunpack.c.h.b16 %v473
    %v486 = vunpack.c.h.b16 %v474
    %v487 = vpack.c.b16 %v480, %v479
    %v488 = vpack.c.b16 %v482, %v481
    %v489 = vpack.c.b16 %v484, %v483
    %v490 = vpack.c.b16 %v486, %v485
    %495 = vst [vmem:[#allocation7] sm:$0xff] %v487
    %496 = vst [vmem:[#allocation7 + $0x8] sm:$0xff] %v488
    %497 = vst [vmem:[#allocation7 + $0x10] sm:$0xff] %v489
    %498 = vst [vmem:[#allocation7 + $0x18] sm:$0xff] %v490
    %v499 = vmul.f32 %v139, %v276
    %v500 = vmul.f32 %v140, %v276
    %v501 = vmul.f32 %v141, %v281
    %v502 = vmul.f32 %v142, %v281
    %v503 = vmul.f32 %v143, %v286
    %v504 = vmul.f32 %v144, %v286
    %v505 = vmul.f32 %v145, %v291
    %v506 = vmul.f32 %v146, %v291
    %507 = vset.pattern.permute.xlu0 2
    %508 = vperm.xlu0 %507, %v47
    %v509 = vpop.permute.xlu0 %508
    %511 = vset.pattern.permute.xlu0 2
    %512 = vperm.xlu0 %511, %v48
    %v513 = vpop.permute.xlu0 %512
    %515 = vset.pattern.permute.xlu0 2
    %516 = vperm.xlu0 %515, %v49
    %v517 = vpop.permute.xlu0 %516
    %519 = vset.pattern.permute.xlu0 2
    %520 = vperm.xlu0 %519, %v50
    %v521 = vpop.permute.xlu0 %520
    %v523 = vmul.f32 %v118, %v509
    %v524 = vmul.f32 %v119, %v509
    %v525 = vmul.f32 %v120, %v513
    %v526 = vmul.f32 %v121, %v513
    %v527 = vmul.f32 %v122, %v517
    %v528 = vmul.f32 %v123, %v517
    %v529 = vmul.f32 %v124, %v521
    %v530 = vmul.f32 %v125, %v521
    %v531 = vadd.f32 %v499, %v523
    %v532 = vadd.f32 %v500, %v524
    %v533 = vadd.f32 %v501, %v525
    %v534 = vadd.f32 %v502, %v526
    %v535 = vadd.f32 %v503, %v527
    %v536 = vadd.f32 %v504, %v528
    %v537 = vadd.f32 %v505, %v529
    %v538 = vadd.f32 %v506, %v530
    %v539 = vmul.f32 %v160, %v303
    %v540 = vmul.f32 %v161, %v303
    %v541 = vmul.f32 %v162, %v307
    %v542 = vmul.f32 %v163, %v307
    %v543 = vmul.f32 %v164, %v311
    %v544 = vmul.f32 %v165, %v311
    %v545 = vmul.f32 %v166, %v315
    %v546 = vmul.f32 %v167, %v315
    %v547 = vadd.f32 %v531, %v539
    %v548 = vadd.f32 %v532, %v540
    %v549 = vadd.f32 %v533, %v541
    %v550 = vadd.f32 %v534, %v542
    %v551 = vadd.f32 %v535, %v543
    %v552 = vadd.f32 %v536, %v544
    %v553 = vadd.f32 %v537, %v545
    %v554 = vadd.f32 %v538, %v546
    %v555 = vmul.f32 %v181, %v335
    %v556 = vmul.f32 %v182, %v335
    %v557 = vmul.f32 %v183, %v339
    %v558 = vmul.f32 %v184, %v339
    %v559 = vmul.f32 %v185, %v343
    %v560 = vmul.f32 %v186, %v343
    %v561 = vmul.f32 %v187, %v347
    %v562 = vmul.f32 %v188, %v347
    %v563 = vadd.f32 %v547, %v555
    %v564 = vadd.f32 %v548, %v556
    %v565 = vadd.f32 %v549, %v557
    %v566 = vadd.f32 %v550, %v558
    %v567 = vadd.f32 %v551, %v559
    %v568 = vadd.f32 %v552, %v560
    %v569 = vadd.f32 %v553, %v561
    %v570 = vadd.f32 %v554, %v562
    %v571 = vmul.f32 %v202, %v367
    %v572 = vmul.f32 %v203, %v367
    %v573 = vmul.f32 %v204, %v371
    %v574 = vmul.f32 %v205, %v371
    %v575 = vmul.f32 %v206, %v375
    %v576 = vmul.f32 %v207, %v375
    %v577 = vmul.f32 %v208, %v379
    %v578 = vmul.f32 %v209, %v379
    %v579 = vadd.f32 %v563, %v571
    %v580 = vadd.f32 %v564, %v572
    %v581 = vadd.f32 %v565, %v573
    %v582 = vadd.f32 %v566, %v574
    %v583 = vadd.f32 %v567, %v575
    %v584 = vadd.f32 %v568, %v576
    %v585 = vadd.f32 %v569, %v577
    %v586 = vadd.f32 %v570, %v578
    %v587 = vpack.c.bf16 %v581, %v579
    %v588 = vpack.c.bf16 %v582, %v580
    %v589 = vpack.c.bf16 %v585, %v583
    %v590 = vpack.c.bf16 %v586, %v584
    %591 = vmatprep.subr.bf16.mxu0 0
    %592 = vmatpush1.bf16.msra.mxu0 0
    %593 = vmatprep.subr.bf16.mxu0 0
    %594 = vmatpush1.bf16.msra.mxu0 0
    %595 = vmatprep.subr.bf16.mxu0 0
    %596 = vmatpush1.bf16.msra.mxu0 0
    %597 = vmatprep.subr.bf16.mxu0 0
    %598 = vmatpush1.bf16.msra.mxu0 0
    %599 = vmatprep.subr.bf16.mxu0 0
    %600 = vmatpush1.bf16.msra.mxu0 0
    %601 = vmatprep.subr.bf16.mxu0 0
    %602 = vmatpush1.bf16.msra.mxu0 0
    %603 = vmatprep.subr.bf16.mxu0 %v590
    %604 = vmatpush1.bf16.msra.mxu0 %v589
    %605 = vmatprep.subr.bf16.mxu0 %v588
    %606 = vmatpush1.bf16.msra.mxu0 %v587
    %607 = vmatprep.subr.bf16.mxu0 0
    %608 = vmatpush2.bf16.msra.mxu0 0
    %609 = vmatprep.subr.bf16.mxu0 0
    %610 = vmatpush2.bf16.msra.mxu0 0
    %611 = vmatprep.subr.bf16.mxu0 0
    %612 = vmatpush2.bf16.msra.mxu0 0
    %613 = vmatprep.subr.bf16.mxu0 0
    %614 = vmatpush2.bf16.msra.mxu0 0
    %615 = vmatprep.subr.bf16.mxu0 0
    %616 = vmatpush2.bf16.msra.mxu0 0
    %617 = vmatprep.subr.bf16.mxu0 0
    %618 = vmatpush2.bf16.msra.mxu0 0
    %619 = vmatprep.subr.bf16.mxu0 0
    %620 = vmatpush2.bf16.msra.mxu0 0
    %621 = vmatprep.subr.bf16.mxu0 0
    %622 = vmatpush2.bf16.msra.mxu0 0
    %623 = vmatprep.mubr.bf16.mxu0 0
    %624 = vmatmul.mubr.bf16.gmra.mxu0 %v413
    %v625 = vpop.f32.mrf.mxu0
    %v626 = vadd.f32 0.0, %v625
    %v627 = vpop.f32.mrf.mxu0
    %v628 = vadd.f32 0.0, %v627
    %v629 = vpop.f32.mrf.mxu0
    %v630 = vadd.f32 0.0, %v629
    %v631 = vpop.f32.mrf.mxu0
    %v632 = vadd.f32 0.0, %v631
    %633 = vmatprep.mubr.bf16.mxu0 0
    %634 = vmatmul.mubr.bf16.gmra.mxu0 %v416
    %v635 = vpop.f32.mrf.mxu0
    %v636 = vadd.f32 0.0, %v635
    %v637 = vpop.f32.mrf.mxu0
    %v638 = vadd.f32 0.0, %v637
    %v639 = vpop.f32.mrf.mxu0
    %v640 = vadd.f32 0.0, %v639
    %v641 = vpop.f32.mrf.mxu0
    %v642 = vadd.f32 0.0, %v641
    %643 = vdwg.mxu0
    %v644 = vpack.c.bf16 %v630, %v626
    %v645 = vpack.c.bf16 %v632, %v628
    %v646 = vpack.c.bf16 %v640, %v636
    %v647 = vpack.c.bf16 %v642, %v638
    %v652 = vunpack.c.l.b16 %v644
    %v653 = vunpack.c.l.b16 %v645
    %v654 = vunpack.c.h.b16 %v644
    %v655 = vunpack.c.h.b16 %v645
    %v656 = vunpack.c.l.b16 %v646
    %v657 = vunpack.c.l.b16 %v647
    %v658 = vunpack.c.h.b16 %v646
    %v659 = vunpack.c.h.b16 %v647
    %v660 = vpack.c.b16 %v653, %v652
    %v661 = vpack.c.b16 %v655, %v654
    %v662 = vpack.c.b16 %v657, %v656
    %v663 = vpack.c.b16 %v659, %v658
    %s668 = scalar_lea.vmem [#allocation7], 32
    %669 = vst [vmem:[%s668] sm:$0xff] %v660
    %670 = vst [vmem:[%s668 + $0x8] sm:$0xff] %v661
    %671 = vst [vmem:[%s668 + $0x10] sm:$0xff] %v662
    %672 = vst [vmem:[%s668 + $0x18] sm:$0xff] %v663
    %v673 = vmul.f32 %v160, %v276
    %v674 = vmul.f32 %v161, %v276
    %v675 = vmul.f32 %v162, %v281
    %v676 = vmul.f32 %v163, %v281
    %v677 = vmul.f32 %v164, %v286
    %v678 = vmul.f32 %v165, %v286
    %v679 = vmul.f32 %v166, %v291
    %v680 = vmul.f32 %v167, %v291
    %681 = vset.pattern.permute.xlu0 1
    %682 = vperm.xlu0 %681, %v47
    %v683 = vpop.permute.xlu0 %682
    %685 = vset.pattern.permute.xlu0 1
    %686 = vperm.xlu0 %685, %v48
    %v687 = vpop.permute.xlu0 %686
    %689 = vset.pattern.permute.xlu0 1
    %690 = vperm.xlu0 %689, %v49
    %v691 = vpop.permute.xlu0 %690
    %693 = vset.pattern.permute.xlu0 1
    %694 = vperm.xlu0 %693, %v50
    %v695 = vpop.permute.xlu0 %694
    %v697 = vmul.f32 %v118, %v683
    %v698 = vmul.f32 %v119, %v683
    %v699 = vmul.f32 %v120, %v687
    %v700 = vmul.f32 %v121, %v687
    %v701 = vmul.f32 %v122, %v691
    %v702 = vmul.f32 %v123, %v691
    %v703 = vmul.f32 %v124, %v695
    %v704 = vmul.f32 %v125, %v695
    %v705 = vadd.f32 %v673, %v697
    %v706 = vadd.f32 %v674, %v698
    %v707 = vadd.f32 %v675, %v699
    %v708 = vadd.f32 %v676, %v700
    %v709 = vadd.f32 %v677, %v701
    %v710 = vadd.f32 %v678, %v702
    %v711 = vadd.f32 %v679, %v703
    %v712 = vadd.f32 %v680, %v704
    %v713 = vmul.f32 %v139, %v509
    %v714 = vmul.f32 %v140, %v509
    %v715 = vmul.f32 %v141, %v513
    %v716 = vmul.f32 %v142, %v513
    %v717 = vmul.f32 %v143, %v517
    %v718 = vmul.f32 %v144, %v517
    %v719 = vmul.f32 %v145, %v521
    %v720 = vmul.f32 %v146, %v521
    %v721 = vadd.f32 %v705, %v713
    %v722 = vadd.f32 %v706, %v714
    %v723 = vadd.f32 %v707, %v715
    %v724 = vadd.f32 %v708, %v716
    %v725 = vadd.f32 %v709, %v717
    %v726 = vadd.f32 %v710, %v718
    %v727 = vadd.f32 %v711, %v719
    %v728 = vadd.f32 %v712, %v720
    %v729 = vmul.f32 %v181, %v303
    %v730 = vmul.f32 %v182, %v303
    %v731 = vmul.f32 %v183, %v307
    %v732 = vmul.f32 %v184, %v307
    %v733 = vmul.f32 %v185, %v311
    %v734 = vmul.f32 %v186, %v311
    %v735 = vmul.f32 %v187, %v315
    %v736 = vmul.f32 %v188, %v315
    %v737 = vadd.f32 %v721, %v729
    %v738 = vadd.f32 %v722, %v730
    %v739 = vadd.f32 %v723, %v731
    %v740 = vadd.f32 %v724, %v732
    %v741 = vadd.f32 %v725, %v733
    %v742 = vadd.f32 %v726, %v734
    %v743 = vadd.f32 %v727, %v735
    %v744 = vadd.f32 %v728, %v736
    %v745 = vmul.f32 %v202, %v335
    %v746 = vmul.f32 %v203, %v335
    %v747 = vmul.f32 %v204, %v339
    %v748 = vmul.f32 %v205, %v339
    %v749 = vmul.f32 %v206, %v343
    %v750 = vmul.f32 %v207, %v343
    %v751 = vmul.f32 %v208, %v347
    %v752 = vmul.f32 %v209, %v347
    %v753 = vadd.f32 %v737, %v745
    %v754 = vadd.f32 %v738, %v746
    %v755 = vadd.f32 %v739, %v747
    %v756 = vadd.f32 %v740, %v748
    %v757 = vadd.f32 %v741, %v749
    %v758 = vadd.f32 %v742, %v750
    %v759 = vadd.f32 %v743, %v751
    %v760 = vadd.f32 %v744, %v752
    %v761 = vmul.f32 %v223, %v367
    %v762 = vmul.f32 %v224, %v367
    %v763 = vmul.f32 %v225, %v371
    %v764 = vmul.f32 %v226, %v371
    %v765 = vmul.f32 %v227, %v375
    %v766 = vmul.f32 %v228, %v375
    %v767 = vmul.f32 %v229, %v379
    %v768 = vmul.f32 %v230, %v379
    %v769 = vadd.f32 %v753, %v761
    %v770 = vadd.f32 %v754, %v762
    %v771 = vadd.f32 %v755, %v763
    %v772 = vadd.f32 %v756, %v764
    %v773 = vadd.f32 %v757, %v765
    %v774 = vadd.f32 %v758, %v766
    %v775 = vadd.f32 %v759, %v767
    %v776 = vadd.f32 %v760, %v768
    %v777 = vpack.c.bf16 %v771, %v769
    %v778 = vpack.c.bf16 %v772, %v770
    %v779 = vpack.c.bf16 %v775, %v773
    %v780 = vpack.c.bf16 %v776, %v774
    %781 = vmatprep.subr.bf16.mxu0 0
    %782 = vmatpush1.bf16.msra.mxu0 0
    %783 = vmatprep.subr.bf16.mxu0 0
    %784 = vmatpush1.bf16.msra.mxu0 0
    %785 = vmatprep.subr.bf16.mxu0 0
    %786 = vmatpush1.bf16.msra.mxu0 0
    %787 = vmatprep.subr.bf16.mxu0 0
    %788 = vmatpush1.bf16.msra.mxu0 0
    %789 = vmatprep.subr.bf16.mxu0 0
    %790 = vmatpush1.bf16.msra.mxu0 0
    %791 = vmatprep.subr.bf16.mxu0 0
    %792 = vmatpush1.bf16.msra.mxu0 0
    %793 = vmatprep.subr.bf16.mxu0 %v780
    %794 = vmatpush1.bf16.msra.mxu0 %v779
    %795 = vmatprep.subr.bf16.mxu0 %v778
    %796 = vmatpush1.bf16.msra.mxu0 %v777
    %797 = vmatprep.subr.bf16.mxu0 0
    %798 = vmatpush2.bf16.msra.mxu0 0
    %799 = vmatprep.subr.bf16.mxu0 0
    %800 = vmatpush2.bf16.msra.mxu0 0
    %801 = vmatprep.subr.bf16.mxu0 0
    %802 = vmatpush2.bf16.msra.mxu0 0
    %803 = vmatprep.subr.bf16.mxu0 0
    %804 = vmatpush2.bf16.msra.mxu0 0
    %805 = vmatprep.subr.bf16.mxu0 0
    %806 = vmatpush2.bf16.msra.mxu0 0
    %807 = vmatprep.subr.bf16.mxu0 0
    %808 = vmatpush2.bf16.msra.mxu0 0
    %809 = vmatprep.subr.bf16.mxu0 0
    %810 = vmatpush2.bf16.msra.mxu0 0
    %811 = vmatprep.subr.bf16.mxu0 0
    %812 = vmatpush2.bf16.msra.mxu0 0
    %813 = vmatprep.mubr.bf16.mxu0 0
    %814 = vmatmul.mubr.bf16.gmra.mxu0 %v413
    %v815 = vpop.f32.mrf.mxu0
    %v816 = vadd.f32 0.0, %v815
    %v817 = vpop.f32.mrf.mxu0
    %v818 = vadd.f32 0.0, %v817
    %v819 = vpop.f32.mrf.mxu0
    %v820 = vadd.f32 0.0, %v819
    %v821 = vpop.f32.mrf.mxu0
    %v822 = vadd.f32 0.0, %v821
    %823 = vmatprep.mubr.bf16.mxu0 0
    %824 = vmatmul.mubr.bf16.gmra.mxu0 %v416
    %v825 = vpop.f32.mrf.mxu0
    %v826 = vadd.f32 0.0, %v825
    %v827 = vpop.f32.mrf.mxu0
    %v828 = vadd.f32 0.0, %v827
    %v829 = vpop.f32.mrf.mxu0
    %v830 = vadd.f32 0.0, %v829
    %v831 = vpop.f32.mrf.mxu0
    %v832 = vadd.f32 0.0, %v831
    %833 = vdwg.mxu0
    %v834 = vpack.c.bf16 %v820, %v816
    %v835 = vpack.c.bf16 %v822, %v818
    %v836 = vpack.c.bf16 %v830, %v826
    %v837 = vpack.c.bf16 %v832, %v828
    %v842 = vunpack.c.l.b16 %v834
    %v843 = vunpack.c.l.b16 %v835
    %v844 = vunpack.c.h.b16 %v834
    %v845 = vunpack.c.h.b16 %v835
    %v846 = vunpack.c.l.b16 %v836
    %v847 = vunpack.c.l.b16 %v837
    %v848 = vunpack.c.h.b16 %v836
    %v849 = vunpack.c.h.b16 %v837
    %v850 = vpack.c.b16 %v843, %v842
    %v851 = vpack.c.b16 %v845, %v844
    %v852 = vpack.c.b16 %v847, %v846
    %v853 = vpack.c.b16 %v849, %v848
    %s858 = scalar_lea.vmem [#allocation7], 64
    %859 = vst [vmem:[%s858] sm:$0xff] %v850
    %860 = vst [vmem:[%s858 + $0x8] sm:$0xff] %v851
    %861 = vst [vmem:[%s858 + $0x10] sm:$0xff] %v852
    %862 = vst [vmem:[%s858 + $0x18] sm:$0xff] %v853
    %v863 = vmul.f32 %v181, %v276
    %v864 = vmul.f32 %v182, %v276
    %v865 = vmul.f32 %v183, %v281
    %v866 = vmul.f32 %v184, %v281
    %v867 = vmul.f32 %v185, %v286
    %v868 = vmul.f32 %v186, %v286
    %v869 = vmul.f32 %v187, %v291
    %v870 = vmul.f32 %v188, %v291
    %871 = vset.pattern.permute.xlu0 0
    %872 = vperm.xlu0 %871, %v47
    %v873 = vpop.permute.xlu0 %872
    %875 = vset.pattern.permute.xlu0 0
    %876 = vperm.xlu0 %875, %v48
    %v877 = vpop.permute.xlu0 %876
    %879 = vset.pattern.permute.xlu0 0
    %880 = vperm.xlu0 %879, %v49
    %v881 = vpop.permute.xlu0 %880
    %883 = vset.pattern.permute.xlu0 0
    %884 = vperm.xlu0 %883, %v50
    %v885 = vpop.permute.xlu0 %884
    %v887 = vmul.f32 %v118, %v873
    %v888 = vmul.f32 %v119, %v873
    %v889 = vmul.f32 %v120, %v877
    %v890 = vmul.f32 %v121, %v877
    %v891 = vmul.f32 %v122, %v881
    %v892 = vmul.f32 %v123, %v881
    %v893 = vmul.f32 %v124, %v885
    %v894 = vmul.f32 %v125, %v885
    %v895 = vadd.f32 %v863, %v887
    %v896 = vadd.f32 %v864, %v888
    %v897 = vadd.f32 %v865, %v889
    %v898 = vadd.f32 %v866, %v890
    %v899 = vadd.f32 %v867, %v891
    %v900 = vadd.f32 %v868, %v892
    %v901 = vadd.f32 %v869, %v893
    %v902 = vadd.f32 %v870, %v894
    %v903 = vmul.f32 %v139, %v683
    %v904 = vmul.f32 %v140, %v683
    %v905 = vmul.f32 %v141, %v687
    %v906 = vmul.f32 %v142, %v687
    %v907 = vmul.f32 %v143, %v691
    %v908 = vmul.f32 %v144, %v691
    %v909 = vmul.f32 %v145, %v695
    %v910 = vmul.f32 %v146, %v695
    %v911 = vadd.f32 %v895, %v903
    %v912 = vadd.f32 %v896, %v904
    %v913 = vadd.f32 %v897, %v905
    %v914 = vadd.f32 %v898, %v906
    %v915 = vadd.f32 %v899, %v907
    %v916 = vadd.f32 %v900, %v908
    %v917 = vadd.f32 %v901, %v909
    %v918 = vadd.f32 %v902, %v910
    %v919 = vmul.f32 %v160, %v509
    %v920 = vmul.f32 %v161, %v509
    %v921 = vmul.f32 %v162, %v513
    %v922 = vmul.f32 %v163, %v513
    %v923 = vmul.f32 %v164, %v517
    %v924 = vmul.f32 %v165, %v517
    %v925 = vmul.f32 %v166, %v521
    %v926 = vmul.f32 %v167, %v521
    %v927 = vadd.f32 %v911, %v919
    %v928 = vadd.f32 %v912, %v920
    %v929 = vadd.f32 %v913, %v921
    %v930 = vadd.f32 %v914, %v922
    %v931 = vadd.f32 %v915, %v923
    %v932 = vadd.f32 %v916, %v924
    %v933 = vadd.f32 %v917, %v925
    %v934 = vadd.f32 %v918, %v926
    %v935 = vmul.f32 %v202, %v303
    %v936 = vmul.f32 %v203, %v303
    %v937 = vmul.f32 %v204, %v307
    %v938 = vmul.f32 %v205, %v307
    %v939 = vmul.f32 %v206, %v311
    %v940 = vmul.f32 %v207, %v311
    %v941 = vmul.f32 %v208, %v315
    %v942 = vmul.f32 %v209, %v315
    %v943 = vadd.f32 %v927, %v935
    %v944 = vadd.f32 %v928, %v936
    %v945 = vadd.f32 %v929, %v937
    %v946 = vadd.f32 %v930, %v938
    %v947 = vadd.f32 %v931, %v939
    %v948 = vadd.f32 %v932, %v940
    %v949 = vadd.f32 %v933, %v941
    %v950 = vadd.f32 %v934, %v942
    %v951 = vmul.f32 %v223, %v335
    %v952 = vmul.f32 %v224, %v335
    %v953 = vmul.f32 %v225, %v339
    %v954 = vmul.f32 %v226, %v339
    %v955 = vmul.f32 %v227, %v343
    %v956 = vmul.f32 %v228, %v343
    %v957 = vmul.f32 %v229, %v347
    %v958 = vmul.f32 %v230, %v347
    %v959 = vadd.f32 %v943, %v951
    %v960 = vadd.f32 %v944, %v952
    %v961 = vadd.f32 %v945, %v953
    %v962 = vadd.f32 %v946, %v954
    %v963 = vadd.f32 %v947, %v955
    %v964 = vadd.f32 %v948, %v956
    %v965 = vadd.f32 %v949, %v957
    %v966 = vadd.f32 %v950, %v958
    %v967 = vmul.f32 %v244, %v367
    %v968 = vmul.f32 %v245, %v367
    %v969 = vmul.f32 %v246, %v371
    %v970 = vmul.f32 %v247, %v371
    %v971 = vmul.f32 %v248, %v375
    %v972 = vmul.f32 %v249, %v375
    %v973 = vmul.f32 %v250, %v379
    %v974 = vmul.f32 %v251, %v379
    %v975 = vadd.f32 %v959, %v967
    %v976 = vadd.f32 %v960, %v968
    %v977 = vadd.f32 %v961, %v969
    %v978 = vadd.f32 %v962, %v970
    %v979 = vadd.f32 %v963, %v971
    %v980 = vadd.f32 %v964, %v972
    %v981 = vadd.f32 %v965, %v973
    %v982 = vadd.f32 %v966, %v974
    %v983 = vpack.c.bf16 %v977, %v975
    %v984 = vpack.c.bf16 %v978, %v976
    %v985 = vpack.c.bf16 %v981, %v979
    %v986 = vpack.c.bf16 %v982, %v980
    %987 = vmatprep.subr.bf16.mxu0 0
    %988 = vmatpush1.bf16.msra.mxu0 0
    %989 = vmatprep.subr.bf16.mxu0 0
    %990 = vmatpush1.bf16.msra.mxu0 0
    %991 = vmatprep.subr.bf16.mxu0 0
    %992 = vmatpush1.bf16.msra.mxu0 0
    %993 = vmatprep.subr.bf16.mxu0 0
    %994 = vmatpush1.bf16.msra.mxu0 0
    %995 = vmatprep.subr.bf16.mxu0 0
    %996 = vmatpush1.bf16.msra.mxu0 0
    %997 = vmatprep.subr.bf16.mxu0 0
    %998 = vmatpush1.bf16.msra.mxu0 0
    %999 = vmatprep.subr.bf16.mxu0 %v986
    %1000 = vmatpush1.bf16.msra.mxu0 %v985
    %1001 = vmatprep.subr.bf16.mxu0 %v984
    %1002 = vmatpush1.bf16.msra.mxu0 %v983
    %1003 = vmatprep.subr.bf16.mxu0 0
    %1004 = vmatpush2.bf16.msra.mxu0 0
    %1005 = vmatprep.subr.bf16.mxu0 0
    %1006 = vmatpush2.bf16.msra.mxu0 0
    %1007 = vmatprep.subr.bf16.mxu0 0
    %1008 = vmatpush2.bf16.msra.mxu0 0
    %1009 = vmatprep.subr.bf16.mxu0 0
    %1010 = vmatpush2.bf16.msra.mxu0 0
    %1011 = vmatprep.subr.bf16.mxu0 0
    %1012 = vmatpush2.bf16.msra.mxu0 0
    %1013 = vmatprep.subr.bf16.mxu0 0
    %1014 = vmatpush2.bf16.msra.mxu0 0
    %1015 = vmatprep.subr.bf16.mxu0 0
    %1016 = vmatpush2.bf16.msra.mxu0 0
    %1017 = vmatprep.subr.bf16.mxu0 0
    %1018 = vmatpush2.bf16.msra.mxu0 0
    %1019 = vmatprep.mubr.bf16.mxu0 0
    %1020 = vmatmul.mubr.bf16.gmra.mxu0 %v413
    %v1021 = vpop.f32.mrf.mxu0
    %v1022 = vadd.f32 0.0, %v1021
    %v1023 = vpop.f32.mrf.mxu0
    %v1024 = vadd.f32 0.0, %v1023
    %v1025 = vpop.f32.mrf.mxu0
    %v1026 = vadd.f32 0.0, %v1025
    %v1027 = vpop.f32.mrf.mxu0
    %v1028 = vadd.f32 0.0, %v1027
    %1029 = vmatprep.mubr.bf16.mxu0 0
    %1030 = vmatmul.mubr.bf16.gmra.mxu0 %v416
    %v1031 = vpop.f32.mrf.mxu0
    %v1032 = vadd.f32 0.0, %v1031
    %v1033 = vpop.f32.mrf.mxu0
    %v1034 = vadd.f32 0.0, %v1033
    %v1035 = vpop.f32.mrf.mxu0
    %v1036 = vadd.f32 0.0, %v1035
    %v1037 = vpop.f32.mrf.mxu0
    %v1038 = vadd.f32 0.0, %v1037
    %1039 = vdwg.mxu0
    %v1040 = vpack.c.bf16 %v1026, %v1022
    %v1041 = vpack.c.bf16 %v1028, %v1024
    %v1042 = vpack.c.bf16 %v1036, %v1032
    %v1043 = vpack.c.bf16 %v1038, %v1034
    %v1048 = vunpack.c.l.b16 %v1040
    %v1049 = vunpack.c.l.b16 %v1041
    %v1050 = vunpack.c.h.b16 %v1040
    %v1051 = vunpack.c.h.b16 %v1041
    %v1052 = vunpack.c.l.b16 %v1042
    %v1053 = vunpack.c.l.b16 %v1043
    %v1054 = vunpack.c.h.b16 %v1042
    %v1055 = vunpack.c.h.b16 %v1043
    %v1056 = vpack.c.b16 %v1049, %v1048
    %v1057 = vpack.c.b16 %v1051, %v1050
    %v1058 = vpack.c.b16 %v1053, %v1052
    %v1059 = vpack.c.b16 %v1055, %v1054
    %s1064 = scalar_lea.vmem [#allocation7], 96
    %1065 = vst [vmem:[%s1064] sm:$0xff] %v1056
    %1066 = vst [vmem:[%s1064 + $0x8] sm:$0xff] %v1057
    %1067 = vst [vmem:[%s1064 + $0x10] sm:$0xff] %v1058
    %1068 = vst [vmem:[%s1064 + $0x18] sm:$0xff] %v1059
    %v1069 = vmul.f32 %v202, %v276
    %v1070 = vmul.f32 %v203, %v276
    %v1071 = vmul.f32 %v204, %v281
    %v1072 = vmul.f32 %v205, %v281
    %v1073 = vmul.f32 %v206, %v286
    %v1074 = vmul.f32 %v207, %v286
    %v1075 = vmul.f32 %v208, %v291
    %v1076 = vmul.f32 %v209, %v291
    %v1077 = vmul.f32 %v139, %v873
    %v1078 = vmul.f32 %v140, %v873
    %v1079 = vmul.f32 %v141, %v877
    %v1080 = vmul.f32 %v142, %v877
    %v1081 = vmul.f32 %v143, %v881
    %v1082 = vmul.f32 %v144, %v881
    %v1083 = vmul.f32 %v145, %v885
    %v1084 = vmul.f32 %v146, %v885
    %v1085 = vadd.f32 %v1069, %v1077
    %v1086 = vadd.f32 %v1070, %v1078
    %v1087 = vadd.f32 %v1071, %v1079
    %v1088 = vadd.f32 %v1072, %v1080
    %v1089 = vadd.f32 %v1073, %v1081
    %v1090 = vadd.f32 %v1074, %v1082
    %v1091 = vadd.f32 %v1075, %v1083
    %v1092 = vadd.f32 %v1076, %v1084
    %v1093 = vmul.f32 %v160, %v683
    %v1094 = vmul.f32 %v161, %v683
    %v1095 = vmul.f32 %v162, %v687
    %v1096 = vmul.f32 %v163, %v687
    %v1097 = vmul.f32 %v164, %v691
    %v1098 = vmul.f32 %v165, %v691
    %v1099 = vmul.f32 %v166, %v695
    %v1100 = vmul.f32 %v167, %v695
    %v1101 = vadd.f32 %v1085, %v1093
    %v1102 = vadd.f32 %v1086, %v1094
    %v1103 = vadd.f32 %v1087, %v1095
    %v1104 = vadd.f32 %v1088, %v1096
    %v1105 = vadd.f32 %v1089, %v1097
    %v1106 = vadd.f32 %v1090, %v1098
    %v1107 = vadd.f32 %v1091, %v1099
    %v1108 = vadd.f32 %v1092, %v1100
    %v1109 = vmul.f32 %v181, %v509
    %v1110 = vmul.f32 %v182, %v509
    %v1111 = vmul.f32 %v183, %v513
    %v1112 = vmul.f32 %v184, %v513
    %v1113 = vmul.f32 %v185, %v517
    %v1114 = vmul.f32 %v186, %v517
    %v1115 = vmul.f32 %v187, %v521
    %v1116 = vmul.f32 %v188, %v521
    %v1117 = vadd.f32 %v1101, %v1109
    %v1118 = vadd.f32 %v1102, %v1110
    %v1119 = vadd.f32 %v1103, %v1111
    %v1120 = vadd.f32 %v1104, %v1112
    %v1121 = vadd.f32 %v1105, %v1113
    %v1122 = vadd.f32 %v1106, %v1114
    %v1123 = vadd.f32 %v1107, %v1115
    %v1124 = vadd.f32 %v1108, %v1116
    %v1125 = vmul.f32 %v223, %v303
    %v1126 = vmul.f32 %v224, %v303
    %v1127 = vmul.f32 %v225, %v307
    %v1128 = vmul.f32 %v226, %v307
    %v1129 = vmul.f32 %v227, %v311
    %v1130 = vmul.f32 %v228, %v311
    %v1131 = vmul.f32 %v229, %v315
    %v1132 = vmul.f32 %v230, %v315
    %v1133 = vadd.f32 %v1117, %v1125
    %v1134 = vadd.f32 %v1118, %v1126
    %v1135 = vadd.f32 %v1119, %v1127
    %v1136 = vadd.f32 %v1120, %v1128
    %v1137 = vadd.f32 %v1121, %v1129
    %v1138 = vadd.f32 %v1122, %v1130
    %v1139 = vadd.f32 %v1123, %v1131
    %v1140 = vadd.f32 %v1124, %v1132
    %v1141 = vmul.f32 %v244, %v335
    %v1142 = vmul.f32 %v245, %v335
    %v1143 = vmul.f32 %v246, %v339
    %v1144 = vmul.f32 %v247, %v339
    %v1145 = vmul.f32 %v248, %v343
    %v1146 = vmul.f32 %v249, %v343
    %v1147 = vmul.f32 %v250, %v347
    %v1148 = vmul.f32 %v251, %v347
    %v1149 = vadd.f32 %v1133, %v1141
    %v1150 = vadd.f32 %v1134, %v1142
    %v1151 = vadd.f32 %v1135, %v1143
    %v1152 = vadd.f32 %v1136, %v1144
    %v1153 = vadd.f32 %v1137, %v1145
    %v1154 = vadd.f32 %v1138, %v1146
    %v1155 = vadd.f32 %v1139, %v1147
    %v1156 = vadd.f32 %v1140, %v1148
    %v1157 = vmul.f32 %v265, %v367
    %v1158 = vmul.f32 %v266, %v367
    %v1159 = vmul.f32 %v267, %v371
    %v1160 = vmul.f32 %v268, %v371
    %v1161 = vmul.f32 %v269, %v375
    %v1162 = vmul.f32 %v270, %v375
    %v1163 = vmul.f32 %v271, %v379
    %v1164 = vmul.f32 %v272, %v379
    %v1165 = vadd.f32 %v1149, %v1157
    %v1166 = vadd.f32 %v1150, %v1158
    %v1167 = vadd.f32 %v1151, %v1159
    %v1168 = vadd.f32 %v1152, %v1160
    %v1169 = vadd.f32 %v1153, %v1161
    %v1170 = vadd.f32 %v1154, %v1162
    %v1171 = vadd.f32 %v1155, %v1163
    %v1172 = vadd.f32 %v1156, %v1164
    %v1173 = vpack.c.bf16 %v1167, %v1165
    %v1174 = vpack.c.bf16 %v1168, %v1166
    %v1175 = vpack.c.bf16 %v1171, %v1169
    %v1176 = vpack.c.bf16 %v1172, %v1170
    %1177 = vmatprep.subr.bf16.mxu0 0
    %1178 = vmatpush1.bf16.msra.mxu0 0
    %1179 = vmatprep.subr.bf16.mxu0 0
    %1180 = vmatpush1.bf16.msra.mxu0 0
    %1181 = vmatprep.subr.bf16.mxu0 0
    %1182 = vmatpush1.bf16.msra.mxu0 0
    %1183 = vmatprep.subr.bf16.mxu0 0
    %1184 = vmatpush1.bf16.msra.mxu0 0
    %1185 = vmatprep.subr.bf16.mxu0 0
    %1186 = vmatpush1.bf16.msra.mxu0 0
    %1187 = vmatprep.subr.bf16.mxu0 0
    %1188 = vmatpush1.bf16.msra.mxu0 0
    %1189 = vmatprep.subr.bf16.mxu0 %v1176
    %1190 = vmatpush1.bf16.msra.mxu0 %v1175
    %1191 = vmatprep.subr.bf16.mxu0 %v1174
    %1192 = vmatpush1.bf16.msra.mxu0 %v1173
    %1193 = vmatprep.subr.bf16.mxu0 0
    %1194 = vmatpush2.bf16.msra.mxu0 0
    %1195 = vmatprep.subr.bf16.mxu0 0
    %1196 = vmatpush2.bf16.msra.mxu0 0
    %1197 = vmatprep.subr.bf16.mxu0 0
    %1198 = vmatpush2.bf16.msra.mxu0 0
    %1199 = vmatprep.subr.bf16.mxu0 0
    %1200 = vmatpush2.bf16.msra.mxu0 0
    %1201 = vmatprep.subr.bf16.mxu0 0
    %1202 = vmatpush2.bf16.msra.mxu0 0
    %1203 = vmatprep.subr.bf16.mxu0 0
    %1204 = vmatpush2.bf16.msra.mxu0 0
    %1205 = vmatprep.subr.bf16.mxu0 0
    %1206 = vmatpush2.bf16.msra.mxu0 0
    %1207 = vmatprep.subr.bf16.mxu0 0
    %1208 = vmatpush2.bf16.msra.mxu0 0
    %1209 = vmatprep.mubr.bf16.mxu0 0
    %1210 = vmatmul.mubr.bf16.gmra.mxu0 %v413
    %v1211 = vpop.f32.mrf.mxu0
    %v1212 = vadd.f32 0.0, %v1211
    %v1213 = vpop.f32.mrf.mxu0
    %v1214 = vadd.f32 0.0, %v1213
    %v1215 = vpop.f32.mrf.mxu0
    %v1216 = vadd.f32 0.0, %v1215
    %v1217 = vpop.f32.mrf.mxu0
    %v1218 = vadd.f32 0.0, %v1217
    %1219 = vmatprep.mubr.bf16.mxu0 0
    %1220 = vmatmul.mubr.bf16.gmra.mxu0 %v416
    %v1221 = vpop.f32.mrf.mxu0
    %v1222 = vadd.f32 0.0, %v1221
    %v1223 = vpop.f32.mrf.mxu0
    %v1224 = vadd.f32 0.0, %v1223
    %v1225 = vpop.f32.mrf.mxu0
    %v1226 = vadd.f32 0.0, %v1225
    %v1227 = vpop.f32.mrf.mxu0
    %v1228 = vadd.f32 0.0, %v1227
    %1229 = vdwg.mxu0
    %v1230 = vpack.c.bf16 %v1216, %v1212
    %v1231 = vpack.c.bf16 %v1218, %v1214
    %v1232 = vpack.c.bf16 %v1226, %v1222
    %v1233 = vpack.c.bf16 %v1228, %v1224
    %v1238 = vunpack.c.l.b16 %v1230
    %v1239 = vunpack.c.l.b16 %v1231
    %v1240 = vunpack.c.h.b16 %v1230
    %v1241 = vunpack.c.h.b16 %v1231
    %v1242 = vunpack.c.l.b16 %v1232
    %v1243 = vunpack.c.l.b16 %v1233
    %v1244 = vunpack.c.h.b16 %v1232
    %v1245 = vunpack.c.h.b16 %v1233
    %v1246 = vpack.c.b16 %v1239, %v1238
    %v1247 = vpack.c.b16 %v1241, %v1240
    %v1248 = vpack.c.b16 %v1243, %v1242
    %v1249 = vpack.c.b16 %v1245, %v1244
    %s1254 = scalar_lea.vmem [#allocation7], 128
    %1255 = vst [vmem:[%s1254] sm:$0xff] %v1246
    %1256 = vst [vmem:[%s1254 + $0x8] sm:$0xff] %v1247
    %1257 = vst [vmem:[%s1254 + $0x10] sm:$0xff] %v1248
    %1258 = vst [vmem:[%s1254 + $0x18] sm:$0xff] %v1249
    %v1259 = vmul.f32 %v223, %v276
    %v1260 = vmul.f32 %v224, %v276
    %v1261 = vmul.f32 %v225, %v281
    %v1262 = vmul.f32 %v226, %v281
    %v1263 = vmul.f32 %v227, %v286
    %v1264 = vmul.f32 %v228, %v286
    %v1265 = vmul.f32 %v229, %v291
    %v1266 = vmul.f32 %v230, %v291
    %v1267 = vmul.f32 %v160, %v873
    %v1268 = vmul.f32 %v161, %v873
    %v1269 = vmul.f32 %v162, %v877
    %v1270 = vmul.f32 %v163, %v877
    %v1271 = vmul.f32 %v164, %v881
    %v1272 = vmul.f32 %v165, %v881
    %v1273 = vmul.f32 %v166, %v885
    %v1274 = vmul.f32 %v167, %v885
    %v1275 = vadd.f32 %v1259, %v1267
    %v1276 = vadd.f32 %v1260, %v1268
    %v1277 = vadd.f32 %v1261, %v1269
    %v1278 = vadd.f32 %v1262, %v1270
    %v1279 = vadd.f32 %v1263, %v1271
    %v1280 = vadd.f32 %v1264, %v1272
    %v1281 = vadd.f32 %v1265, %v1273
    %v1282 = vadd.f32 %v1266, %v1274
    %v1283 = vmul.f32 %v181, %v683
    %v1284 = vmul.f32 %v182, %v683
    %v1285 = vmul.f32 %v183, %v687
    %v1286 = vmul.f32 %v184, %v687
    %v1287 = vmul.f32 %v185, %v691
    %v1288 = vmul.f32 %v186, %v691
    %v1289 = vmul.f32 %v187, %v695
    %v1290 = vmul.f32 %v188, %v695
    %v1291 = vadd.f32 %v1275, %v1283
    %v1292 = vadd.f32 %v1276, %v1284
    %v1293 = vadd.f32 %v1277, %v1285
    %v1294 = vadd.f32 %v1278, %v1286
    %v1295 = vadd.f32 %v1279, %v1287
    %v1296 = vadd.f32 %v1280, %v1288
    %v1297 = vadd.f32 %v1281, %v1289
    %v1298 = vadd.f32 %v1282, %v1290
    %v1299 = vmul.f32 %v202, %v509
    %v1300 = vmul.f32 %v203, %v509
    %v1301 = vmul.f32 %v204, %v513
    %v1302 = vmul.f32 %v205, %v513
    %v1303 = vmul.f32 %v206, %v517
    %v1304 = vmul.f32 %v207, %v517
    %v1305 = vmul.f32 %v208, %v521
    %v1306 = vmul.f32 %v209, %v521
    %v1307 = vadd.f32 %v1291, %v1299
    %v1308 = vadd.f32 %v1292, %v1300
    %v1309 = vadd.f32 %v1293, %v1301
    %v1310 = vadd.f32 %v1294, %v1302
    %v1311 = vadd.f32 %v1295, %v1303
    %v1312 = vadd.f32 %v1296, %v1304
    %v1313 = vadd.f32 %v1297, %v1305
    %v1314 = vadd.f32 %v1298, %v1306
    %v1315 = vmul.f32 %v244, %v303
    %v1316 = vmul.f32 %v245, %v303
    %v1317 = vmul.f32 %v246, %v307
    %v1318 = vmul.f32 %v247, %v307
    %v1319 = vmul.f32 %v248, %v311
    %v1320 = vmul.f32 %v249, %v311
    %v1321 = vmul.f32 %v250, %v315
    %v1322 = vmul.f32 %v251, %v315
    %v1323 = vadd.f32 %v1307, %v1315
    %v1324 = vadd.f32 %v1308, %v1316
    %v1325 = vadd.f32 %v1309, %v1317
    %v1326 = vadd.f32 %v1310, %v1318
    %v1327 = vadd.f32 %v1311, %v1319
    %v1328 = vadd.f32 %v1312, %v1320
    %v1329 = vadd.f32 %v1313, %v1321
    %v1330 = vadd.f32 %v1314, %v1322
    %v1331 = vmul.f32 %v265, %v335
    %v1332 = vmul.f32 %v266, %v335
    %v1333 = vmul.f32 %v267, %v339
    %v1334 = vmul.f32 %v268, %v339
    %v1335 = vmul.f32 %v269, %v343
    %v1336 = vmul.f32 %v270, %v343
    %v1337 = vmul.f32 %v271, %v347
    %v1338 = vmul.f32 %v272, %v347
    %v1339 = vadd.f32 %v1323, %v1331
    %v1340 = vadd.f32 %v1324, %v1332
    %v1341 = vadd.f32 %v1325, %v1333
    %v1342 = vadd.f32 %v1326, %v1334
    %v1343 = vadd.f32 %v1327, %v1335
    %v1344 = vadd.f32 %v1328, %v1336
    %v1345 = vadd.f32 %v1329, %v1337
    %v1346 = vadd.f32 %v1330, %v1338
    %v1347 = vpack.c.bf16 %v1341, %v1339
    %v1348 = vpack.c.bf16 %v1342, %v1340
    %v1349 = vpack.c.bf16 %v1345, %v1343
    %v1350 = vpack.c.bf16 %v1346, %v1344
    %1351 = vmatprep.subr.bf16.mxu0 0
    %1352 = vmatpush1.bf16.msra.mxu0 0
    %1353 = vmatprep.subr.bf16.mxu0 0
    %1354 = vmatpush1.bf16.msra.mxu0 0
    %1355 = vmatprep.subr.bf16.mxu0 0
    %1356 = vmatpush1.bf16.msra.mxu0 0
    %1357 = vmatprep.subr.bf16.mxu0 0
    %1358 = vmatpush1.bf16.msra.mxu0 0
    %1359 = vmatprep.subr.bf16.mxu0 0
    %1360 = vmatpush1.bf16.msra.mxu0 0
    %1361 = vmatprep.subr.bf16.mxu0 0
    %1362 = vmatpush1.bf16.msra.mxu0 0
    %1363 = vmatprep.subr.bf16.mxu0 %v1350
    %1364 = vmatpush1.bf16.msra.mxu0 %v1349
    %1365 = vmatprep.subr.bf16.mxu0 %v1348
    %1366 = vmatpush1.bf16.msra.mxu0 %v1347
    %1367 = vmatprep.subr.bf16.mxu0 0
    %1368 = vmatpush2.bf16.msra.mxu0 0
    %1369 = vmatprep.subr.bf16.mxu0 0
    %1370 = vmatpush2.bf16.msra.mxu0 0
    %1371 = vmatprep.subr.bf16.mxu0 0
    %1372 = vmatpush2.bf16.msra.mxu0 0
    %1373 = vmatprep.subr.bf16.mxu0 0
    %1374 = vmatpush2.bf16.msra.mxu0 0
    %1375 = vmatprep.subr.bf16.mxu0 0
    %1376 = vmatpush2.bf16.msra.mxu0 0
    %1377 = vmatprep.subr.bf16.mxu0 0
    %1378 = vmatpush2.bf16.msra.mxu0 0
    %1379 = vmatprep.subr.bf16.mxu0 0
    %1380 = vmatpush2.bf16.msra.mxu0 0
    %1381 = vmatprep.subr.bf16.mxu0 0
    %1382 = vmatpush2.bf16.msra.mxu0 0
    %1383 = vmatprep.mubr.bf16.mxu0 0
    %1384 = vmatmul.mubr.bf16.gmra.mxu0 %v413
    %v1385 = vpop.f32.mrf.mxu0
    %v1386 = vadd.f32 0.0, %v1385
    %v1387 = vpop.f32.mrf.mxu0
    %v1388 = vadd.f32 0.0, %v1387
    %v1389 = vpop.f32.mrf.mxu0
    %v1390 = vadd.f32 0.0, %v1389
    %v1391 = vpop.f32.mrf.mxu0
    %v1392 = vadd.f32 0.0, %v1391
    %1393 = vmatprep.mubr.bf16.mxu0 0
    %1394 = vmatmul.mubr.bf16.gmra.mxu0 %v416
    %v1395 = vpop.f32.mrf.mxu0
    %v1396 = vadd.f32 0.0, %v1395
    %v1397 = vpop.f32.mrf.mxu0
    %v1398 = vadd.f32 0.0, %v1397
    %v1399 = vpop.f32.mrf.mxu0
    %v1400 = vadd.f32 0.0, %v1399
    %v1401 = vpop.f32.mrf.mxu0
    %v1402 = vadd.f32 0.0, %v1401
    %1403 = vdwg.mxu0
    %v1404 = vpack.c.bf16 %v1390, %v1386
    %v1405 = vpack.c.bf16 %v1392, %v1388
    %v1406 = vpack.c.bf16 %v1400, %v1396
    %v1407 = vpack.c.bf16 %v1402, %v1398
    %v1412 = vunpack.c.l.b16 %v1404
    %v1413 = vunpack.c.l.b16 %v1405
    %v1414 = vunpack.c.h.b16 %v1404
    %v1415 = vunpack.c.h.b16 %v1405
    %v1416 = vunpack.c.l.b16 %v1406
    %v1417 = vunpack.c.l.b16 %v1407
    %v1418 = vunpack.c.h.b16 %v1406
    %v1419 = vunpack.c.h.b16 %v1407
    %v1420 = vpack.c.b16 %v1413, %v1412
    %v1421 = vpack.c.b16 %v1415, %v1414
    %v1422 = vpack.c.b16 %v1417, %v1416
    %v1423 = vpack.c.b16 %v1419, %v1418
    %s1428 = scalar_lea.vmem [#allocation7], 160
    %1429 = vst [vmem:[%s1428] sm:$0xff] %v1420
    %1430 = vst [vmem:[%s1428 + $0x8] sm:$0xff] %v1421
    %1431 = vst [vmem:[%s1428 + $0x10] sm:$0xff] %v1422
    %1432 = vst [vmem:[%s1428 + $0x18] sm:$0xff] %v1423
    %v1433 = vmul.f32 %v244, %v276
    %v1434 = vmul.f32 %v245, %v276
    %v1435 = vmul.f32 %v246, %v281
    %v1436 = vmul.f32 %v247, %v281
    %v1437 = vmul.f32 %v248, %v286
    %v1438 = vmul.f32 %v249, %v286
    %v1439 = vmul.f32 %v250, %v291
    %v1440 = vmul.f32 %v251, %v291
    %v1441 = vmul.f32 %v181, %v873
    %v1442 = vmul.f32 %v182, %v873
    %v1443 = vmul.f32 %v183, %v877
    %v1444 = vmul.f32 %v184, %v877
    %v1445 = vmul.f32 %v185, %v881
    %v1446 = vmul.f32 %v186, %v881
    %v1447 = vmul.f32 %v187, %v885
    %v1448 = vmul.f32 %v188, %v885
    %v1449 = vadd.f32 %v1433, %v1441
    %v1450 = vadd.f32 %v1434, %v1442
    %v1451 = vadd.f32 %v1435, %v1443
    %v1452 = vadd.f32 %v1436, %v1444
    %v1453 = vadd.f32 %v1437, %v1445
    %v1454 = vadd.f32 %v1438, %v1446
    %v1455 = vadd.f32 %v1439, %v1447
    %v1456 = vadd.f32 %v1440, %v1448
    %v1457 = vmul.f32 %v202, %v683
    %v1458 = vmul.f32 %v203, %v683
    %v1459 = vmul.f32 %v204, %v687
    %v1460 = vmul.f32 %v205, %v687
    %v1461 = vmul.f32 %v206, %v691
    %v1462 = vmul.f32 %v207, %v691
    %v1463 = vmul.f32 %v208, %v695
    %v1464 = vmul.f32 %v209, %v695
    %v1465 = vadd.f32 %v1449, %v1457
    %v1466 = vadd.f32 %v1450, %v1458
    %v1467 = vadd.f32 %v1451, %v1459
    %v1468 = vadd.f32 %v1452, %v1460
    %v1469 = vadd.f32 %v1453, %v1461
    %v1470 = vadd.f32 %v1454, %v1462
    %v1471 = vadd.f32 %v1455, %v1463
    %v1472 = vadd.f32 %v1456, %v1464
    %v1473 = vmul.f32 %v223, %v509
    %v1474 = vmul.f32 %v224, %v509
    %v1475 = vmul.f32 %v225, %v513
    %v1476 = vmul.f32 %v226, %v513
    %v1477 = vmul.f32 %v227, %v517
    %v1478 = vmul.f32 %v228, %v517
    %v1479 = vmul.f32 %v229, %v521
    %v1480 = vmul.f32 %v230, %v521
    %v1481 = vadd.f32 %v1465, %v1473
    %v1482 = vadd.f32 %v1466, %v1474
    %v1483 = vadd.f32 %v1467, %v1475
    %v1484 = vadd.f32 %v1468, %v1476
    %v1485 = vadd.f32 %v1469, %v1477
    %v1486 = vadd.f32 %v1470, %v1478
    %v1487 = vadd.f32 %v1471, %v1479
    %v1488 = vadd.f32 %v1472, %v1480
    %v1489 = vmul.f32 %v265, %v303
    %v1490 = vmul.f32 %v266, %v303
    %v1491 = vmul.f32 %v267, %v307
    %v1492 = vmul.f32 %v268, %v307
    %v1493 = vmul.f32 %v269, %v311
    %v1494 = vmul.f32 %v270, %v311
    %v1495 = vmul.f32 %v271, %v315
    %v1496 = vmul.f32 %v272, %v315
    %v1497 = vadd.f32 %v1481, %v1489
    %v1498 = vadd.f32 %v1482, %v1490
    %v1499 = vadd.f32 %v1483, %v1491
    %v1500 = vadd.f32 %v1484, %v1492
    %v1501 = vadd.f32 %v1485, %v1493
    %v1502 = vadd.f32 %v1486, %v1494
    %v1503 = vadd.f32 %v1487, %v1495
    %v1504 = vadd.f32 %v1488, %v1496
    %v1505 = vpack.c.bf16 %v1499, %v1497
    %v1506 = vpack.c.bf16 %v1500, %v1498
    %v1507 = vpack.c.bf16 %v1503, %v1501
    %v1508 = vpack.c.bf16 %v1504, %v1502
    %1509 = vmatprep.subr.bf16.mxu0 0
    %1510 = vmatpush1.bf16.msra.mxu0 0
    %1511 = vmatprep.subr.bf16.mxu0 0
    %1512 = vmatpush1.bf16.msra.mxu0 0
    %1513 = vmatprep.subr.bf16.mxu0 0
    %1514 = vmatpush1.bf16.msra.mxu0 0
    %1515 = vmatprep.subr.bf16.mxu0 0
    %1516 = vmatpush1.bf16.msra.mxu0 0
    %1517 = vmatprep.subr.bf16.mxu0 0
    %1518 = vmatpush1.bf16.msra.mxu0 0
    %1519 = vmatprep.subr.bf16.mxu0 0
    %1520 = vmatpush1.bf16.msra.mxu0 0
    %1521 = vmatprep.subr.bf16.mxu0 %v1508
    %1522 = vmatpush1.bf16.msra.mxu0 %v1507
    %1523 = vmatprep.subr.bf16.mxu0 %v1506
    %1524 = vmatpush1.bf16.msra.mxu0 %v1505
    %1525 = vmatprep.subr.bf16.mxu0 0
    %1526 = vmatpush2.bf16.msra.mxu0 0
    %1527 = vmatprep.subr.bf16.mxu0 0
    %1528 = vmatpush2.bf16.msra.mxu0 0
    %1529 = vmatprep.subr.bf16.mxu0 0
    %1530 = vmatpush2.bf16.msra.mxu0 0
    %1531 = vmatprep.subr.bf16.mxu0 0
    %1532 = vmatpush2.bf16.msra.mxu0 0
    %1533 = vmatprep.subr.bf16.mxu0 0
    %1534 = vmatpush2.bf16.msra.mxu0 0
    %1535 = vmatprep.subr.bf16.mxu0 0
    %1536 = vmatpush2.bf16.msra.mxu0 0
    %1537 = vmatprep.subr.bf16.mxu0 0
    %1538 = vmatpush2.bf16.msra.mxu0 0
    %1539 = vmatprep.subr.bf16.mxu0 0
    %1540 = vmatpush2.bf16.msra.mxu0 0
    %1541 = vmatprep.mubr.bf16.mxu0 0
    %1542 = vmatmul.mubr.bf16.gmra.mxu0 %v413
    %v1543 = vpop.f32.mrf.mxu0
    %v1544 = vadd.f32 0.0, %v1543
    %v1545 = vpop.f32.mrf.mxu0
    %v1546 = vadd.f32 0.0, %v1545
    %v1547 = vpop.f32.mrf.mxu0
    %v1548 = vadd.f32 0.0, %v1547
    %v1549 = vpop.f32.mrf.mxu0
    %v1550 = vadd.f32 0.0, %v1549
    %1551 = vmatprep.mubr.bf16.mxu0 0
    %1552 = vmatmul.mubr.bf16.gmra.mxu0 %v416
    %v1553 = vpop.f32.mrf.mxu0
    %v1554 = vadd.f32 0.0, %v1553
    %v1555 = vpop.f32.mrf.mxu0
    %v1556 = vadd.f32 0.0, %v1555
    %v1557 = vpop.f32.mrf.mxu0
    %v1558 = vadd.f32 0.0, %v1557
    %v1559 = vpop.f32.mrf.mxu0
    %v1560 = vadd.f32 0.0, %v1559
    %1561 = vdwg.mxu0
    %v1562 = vpack.c.bf16 %v1548, %v1544
    %v1563 = vpack.c.bf16 %v1550, %v1546
    %v1564 = vpack.c.bf16 %v1558, %v1554
    %v1565 = vpack.c.bf16 %v1560, %v1556
    %v1570 = vunpack.c.l.b16 %v1562
    %v1571 = vunpack.c.l.b16 %v1563
    %v1572 = vunpack.c.h.b16 %v1562
    %v1573 = vunpack.c.h.b16 %v1563
    %v1574 = vunpack.c.l.b16 %v1564
    %v1575 = vunpack.c.l.b16 %v1565
    %v1576 = vunpack.c.h.b16 %v1564
    %v1577 = vunpack.c.h.b16 %v1565
    %v1578 = vpack.c.b16 %v1571, %v1570
    %v1579 = vpack.c.b16 %v1573, %v1572
    %v1580 = vpack.c.b16 %v1575, %v1574
    %v1581 = vpack.c.b16 %v1577, %v1576
    %s1586 = scalar_lea.vmem [#allocation7], 192
    %1587 = vst [vmem:[%s1586] sm:$0xff] %v1578
    %1588 = vst [vmem:[%s1586 + $0x8] sm:$0xff] %v1579
    %1589 = vst [vmem:[%s1586 + $0x10] sm:$0xff] %v1580
    %1590 = vst [vmem:[%s1586 + $0x18] sm:$0xff] %v1581
    %v1591 = vmul.f32 %v265, %v276
    %v1592 = vmul.f32 %v266, %v276
    %v1593 = vmul.f32 %v267, %v281
    %v1594 = vmul.f32 %v268, %v281
    %v1595 = vmul.f32 %v269, %v286
    %v1596 = vmul.f32 %v270, %v286
    %v1597 = vmul.f32 %v271, %v291
    %v1598 = vmul.f32 %v272, %v291
    %v1599 = vmul.f32 %v202, %v873
    %v1600 = vmul.f32 %v203, %v873
    %v1601 = vmul.f32 %v204, %v877
    %v1602 = vmul.f32 %v205, %v877
    %v1603 = vmul.f32 %v206, %v881
    %v1604 = vmul.f32 %v207, %v881
    %v1605 = vmul.f32 %v208, %v885
    %v1606 = vmul.f32 %v209, %v885
    %v1607 = vadd.f32 %v1591, %v1599
    %v1608 = vadd.f32 %v1592, %v1600
    %v1609 = vadd.f32 %v1593, %v1601
    %v1610 = vadd.f32 %v1594, %v1602
    %v1611 = vadd.f32 %v1595, %v1603
    %v1612 = vadd.f32 %v1596, %v1604
    %v1613 = vadd.f32 %v1597, %v1605
    %v1614 = vadd.f32 %v1598, %v1606
    %v1615 = vmul.f32 %v223, %v683
    %v1616 = vmul.f32 %v224, %v683
    %v1617 = vmul.f32 %v225, %v687
    %v1618 = vmul.f32 %v226, %v687
    %v1619 = vmul.f32 %v227, %v691
    %v1620 = vmul.f32 %v228, %v691
    %v1621 = vmul.f32 %v229, %v695
    %v1622 = vmul.f32 %v230, %v695
    %v1623 = vadd.f32 %v1607, %v1615
    %v1624 = vadd.f32 %v1608, %v1616
    %v1625 = vadd.f32 %v1609, %v1617
    %v1626 = vadd.f32 %v1610, %v1618
    %v1627 = vadd.f32 %v1611, %v1619
    %v1628 = vadd.f32 %v1612, %v1620
    %v1629 = vadd.f32 %v1613, %v1621
    %v1630 = vadd.f32 %v1614, %v1622
    %v1631 = vmul.f32 %v244, %v509
    %v1632 = vmul.f32 %v245, %v509
    %v1633 = vmul.f32 %v246, %v513
    %v1634 = vmul.f32 %v247, %v513
    %v1635 = vmul.f32 %v248, %v517
    %v1636 = vmul.f32 %v249, %v517
    %v1637 = vmul.f32 %v250, %v521
    %v1638 = vmul.f32 %v251, %v521
    %v1639 = vadd.f32 %v1623, %v1631
    %v1640 = vadd.f32 %v1624, %v1632
    %v1641 = vadd.f32 %v1625, %v1633
    %v1642 = vadd.f32 %v1626, %v1634
    %v1643 = vadd.f32 %v1627, %v1635
    %v1644 = vadd.f32 %v1628, %v1636
    %v1645 = vadd.f32 %v1629, %v1637
    %v1646 = vadd.f32 %v1630, %v1638
    %v1647 = vpack.c.bf16 %v1641, %v1639
    %v1648 = vpack.c.bf16 %v1642, %v1640
    %v1649 = vpack.c.bf16 %v1645, %v1643
    %v1650 = vpack.c.bf16 %v1646, %v1644
    %1651 = vmatprep.subr.bf16.mxu0 0
    %1652 = vmatpush1.bf16.msra.mxu0 0
    %1653 = vmatprep.subr.bf16.mxu0 0
    %1654 = vmatpush1.bf16.msra.mxu0 0
    %1655 = vmatprep.subr.bf16.mxu0 0
    %1656 = vmatpush1.bf16.msra.mxu0 0
    %1657 = vmatprep.subr.bf16.mxu0 0
    %1658 = vmatpush1.bf16.msra.mxu0 0
    %1659 = vmatprep.subr.bf16.mxu0 0
    %1660 = vmatpush1.bf16.msra.mxu0 0
    %1661 = vmatprep.subr.bf16.mxu0 0
    %1662 = vmatpush1.bf16.msra.mxu0 0
    %1663 = vmatprep.subr.bf16.mxu0 %v1650
    %1664 = vmatpush1.bf16.msra.mxu0 %v1649
    %1665 = vmatprep.subr.bf16.mxu0 %v1648
    %1666 = vmatpush1.bf16.msra.mxu0 %v1647
    %1667 = vmatprep.subr.bf16.mxu0 0
    %1668 = vmatpush2.bf16.msra.mxu0 0
    %1669 = vmatprep.subr.bf16.mxu0 0
    %1670 = vmatpush2.bf16.msra.mxu0 0
    %1671 = vmatprep.subr.bf16.mxu0 0
    %1672 = vmatpush2.bf16.msra.mxu0 0
    %1673 = vmatprep.subr.bf16.mxu0 0
    %1674 = vmatpush2.bf16.msra.mxu0 0
    %1675 = vmatprep.subr.bf16.mxu0 0
    %1676 = vmatpush2.bf16.msra.mxu0 0
    %1677 = vmatprep.subr.bf16.mxu0 0
    %1678 = vmatpush2.bf16.msra.mxu0 0
    %1679 = vmatprep.subr.bf16.mxu0 0
    %1680 = vmatpush2.bf16.msra.mxu0 0
    %1681 = vmatprep.subr.bf16.mxu0 0
    %1682 = vmatpush2.bf16.msra.mxu0 0
    %1683 = vmatprep.mubr.bf16.mxu0 0
    %1684 = vmatmul.mubr.bf16.gmra.mxu0 %v413
    %v1685 = vpop.f32.mrf.mxu0
    %v1686 = vadd.f32 0.0, %v1685
    %v1687 = vpop.f32.mrf.mxu0
    %v1688 = vadd.f32 0.0, %v1687
    %v1689 = vpop.f32.mrf.mxu0
    %v1690 = vadd.f32 0.0, %v1689
    %v1691 = vpop.f32.mrf.mxu0
    %v1692 = vadd.f32 0.0, %v1691
    %1693 = vmatprep.mubr.bf16.mxu0 0
    %1694 = vmatmul.mubr.bf16.gmra.mxu0 %v416
    %v1695 = vpop.f32.mrf.mxu0
    %v1696 = vadd.f32 0.0, %v1695
    %v1697 = vpop.f32.mrf.mxu0
    %v1698 = vadd.f32 0.0, %v1697
    %v1699 = vpop.f32.mrf.mxu0
    %v1700 = vadd.f32 0.0, %v1699
    %v1701 = vpop.f32.mrf.mxu0
    %v1702 = vadd.f32 0.0, %v1701
    %1703 = vdwg.mxu0
    %v1704 = vpack.c.bf16 %v1690, %v1686
    %v1705 = vpack.c.bf16 %v1692, %v1688
    %v1706 = vpack.c.bf16 %v1700, %v1696
    %v1707 = vpack.c.bf16 %v1702, %v1698
    %v1712 = vunpack.c.l.b16 %v1704
    %v1713 = vunpack.c.l.b16 %v1705
    %v1714 = vunpack.c.h.b16 %v1704
    %v1715 = vunpack.c.h.b16 %v1705
    %v1716 = vunpack.c.l.b16 %v1706
    %v1717 = vunpack.c.l.b16 %v1707
    %v1718 = vunpack.c.h.b16 %v1706
    %v1719 = vunpack.c.h.b16 %v1707
    %v1720 = vpack.c.b16 %v1713, %v1712
    %v1721 = vpack.c.b16 %v1715, %v1714
    %v1722 = vpack.c.b16 %v1717, %v1716
    %v1723 = vpack.c.b16 %v1719, %v1718
    %s1728 = scalar_lea.vmem [#allocation7], 224
    %1729 = vst [vmem:[%s1728] sm:$0xff] %v1720
    %1730 = vst [vmem:[%s1728 + $0x8] sm:$0xff] %v1721
    %1731 = vst [vmem:[%s1728 + $0x10] sm:$0xff] %v1722
    %1732 = vst [vmem:[%s1728 + $0x18] sm:$0xff] %v1723
    %s1733 = scalar_lea.vmem [#allocation2], 128
    %v1734 = vld [vmem:[%s1733] sm:$0xff]
    %v1735 = vld [vmem:[%s1733 + $0x8] sm:$0xff]
    %v1736 = vld [vmem:[%s1733 + $0x10] sm:$0xff]
    %v1737 = vld [vmem:[%s1733 + $0x18] sm:$0xff]
    %v1738 = vunpack.c.l.bf16 %v1734
    %v1739 = vunpack.c.h.bf16 %v1734
    %v1740 = vunpack.c.l.bf16 %v1735
    %v1741 = vunpack.c.h.bf16 %v1735
    %v1742 = vunpack.c.l.bf16 %v1736
    %v1743 = vunpack.c.h.bf16 %v1736
    %v1744 = vunpack.c.l.bf16 %v1737
    %v1745 = vunpack.c.h.bf16 %v1737
    %s1746 = scalar_lea.vmem [#allocation2], 160
    %v1747 = vld [vmem:[%s1746] sm:$0xff]
    %v1748 = vld [vmem:[%s1746 + $0x8] sm:$0xff]
    %v1749 = vld [vmem:[%s1746 + $0x10] sm:$0xff]
    %v1750 = vld [vmem:[%s1746 + $0x18] sm:$0xff]
    %v1751 = vunpack.c.l.bf16 %v1747
    %v1752 = vunpack.c.h.bf16 %v1747
    %v1753 = vunpack.c.l.bf16 %v1748
    %v1754 = vunpack.c.h.bf16 %v1748
    %v1755 = vunpack.c.l.bf16 %v1749
    %v1756 = vunpack.c.h.bf16 %v1749
    %v1757 = vunpack.c.l.bf16 %v1750
    %v1758 = vunpack.c.h.bf16 %v1750
    %s1759 = scalar_lea.vmem [#allocation2], 192
    %v1760 = vld [vmem:[%s1759] sm:$0xff]
    %v1761 = vld [vmem:[%s1759 + $0x8] sm:$0xff]
    %v1762 = vld [vmem:[%s1759 + $0x10] sm:$0xff]
    %v1763 = vld [vmem:[%s1759 + $0x18] sm:$0xff]
    %v1764 = vunpack.c.l.bf16 %v1760
    %v1765 = vunpack.c.h.bf16 %v1760
    %v1766 = vunpack.c.l.bf16 %v1761
    %v1767 = vunpack.c.h.bf16 %v1761
    %v1768 = vunpack.c.l.bf16 %v1762
    %v1769 = vunpack.c.h.bf16 %v1762
    %v1770 = vunpack.c.l.bf16 %v1763
    %v1771 = vunpack.c.h.bf16 %v1763
    %s1772 = scalar_lea.vmem [#allocation2], 224
    %v1773 = vld [vmem:[%s1772] sm:$0xff]
    %v1774 = vld [vmem:[%s1772 + $0x8] sm:$0xff]
    %v1775 = vld [vmem:[%s1772 + $0x10] sm:$0xff]
    %v1776 = vld [vmem:[%s1772 + $0x18] sm:$0xff]
    %v1777 = vunpack.c.l.bf16 %v1773
    %v1778 = vunpack.c.h.bf16 %v1773
    %v1779 = vunpack.c.l.bf16 %v1774
    %v1780 = vunpack.c.h.bf16 %v1774
    %v1781 = vunpack.c.l.bf16 %v1775
    %v1782 = vunpack.c.h.bf16 %v1775
    %v1783 = vunpack.c.l.bf16 %v1776
    %v1784 = vunpack.c.h.bf16 %v1776
    %s1785 = scalar_lea.vmem [#allocation5], 256
    %v1786 = vld [vmem:[%s1785] sm:$0xff]
    %v1787 = vld [vmem:[%s1785 + $0x8] sm:$0xff]
    %v1788 = vld [vmem:[%s1785 + $0x10] sm:$0xff]
    %v1789 = vld [vmem:[%s1785 + $0x18] sm:$0xff]
    %v1790 = vunpack.c.l.bf16 %v1786
    %v1791 = vunpack.c.h.bf16 %v1786
    %v1792 = vunpack.c.l.bf16 %v1787
    %v1793 = vunpack.c.h.bf16 %v1787
    %v1794 = vunpack.c.l.bf16 %v1788
    %v1795 = vunpack.c.h.bf16 %v1788
    %v1796 = vunpack.c.l.bf16 %v1789
    %v1797 = vunpack.c.h.bf16 %v1789
    %v1798 = vadd.f32 %v1738, %v1790
    %v1799 = vadd.f32 %v1739, %v1791
    %v1800 = vadd.f32 %v1740, %v1792
    %v1801 = vadd.f32 %v1741, %v1793
    %v1802 = vadd.f32 %v1742, %v1794
    %v1803 = vadd.f32 %v1743, %v1795
    %v1804 = vadd.f32 %v1744, %v1796
    %v1805 = vadd.f32 %v1745, %v1797
    %s1806 = scalar_lea.vmem [#allocation5], 288
    %v1807 = vld [vmem:[%s1806] sm:$0xff]
    %v1808 = vld [vmem:[%s1806 + $0x8] sm:$0xff]
    %v1809 = vld [vmem:[%s1806 + $0x10] sm:$0xff]
    %v1810 = vld [vmem:[%s1806 + $0x18] sm:$0xff]
    %v1811 = vunpack.c.l.bf16 %v1807
    %v1812 = vunpack.c.h.bf16 %v1807
    %v1813 = vunpack.c.l.bf16 %v1808
    %v1814 = vunpack.c.h.bf16 %v1808
    %v1815 = vunpack.c.l.bf16 %v1809
    %v1816 = vunpack.c.h.bf16 %v1809
    %v1817 = vunpack.c.l.bf16 %v1810
    %v1818 = vunpack.c.h.bf16 %v1810
    %v1819 = vadd.f32 %v1738, %v1811
    %v1820 = vadd.f32 %v1739, %v1812
    %v1821 = vadd.f32 %v1740, %v1813
    %v1822 = vadd.f32 %v1741, %v1814
    %v1823 = vadd.f32 %v1742, %v1815
    %v1824 = vadd.f32 %v1743, %v1816
    %v1825 = vadd.f32 %v1744, %v1817
    %v1826 = vadd.f32 %v1745, %v1818
    %s1827 = scalar_lea.vmem [#allocation5], 320
    %v1828 = vld [vmem:[%s1827] sm:$0xff]
    %v1829 = vld [vmem:[%s1827 + $0x8] sm:$0xff]
    %v1830 = vld [vmem:[%s1827 + $0x10] sm:$0xff]
    %v1831 = vld [vmem:[%s1827 + $0x18] sm:$0xff]
    %v1832 = vunpack.c.l.bf16 %v1828
    %v1833 = vunpack.c.h.bf16 %v1828
    %v1834 = vunpack.c.l.bf16 %v1829
    %v1835 = vunpack.c.h.bf16 %v1829
    %v1836 = vunpack.c.l.bf16 %v1830
    %v1837 = vunpack.c.h.bf16 %v1830
    %v1838 = vunpack.c.l.bf16 %v1831
    %v1839 = vunpack.c.h.bf16 %v1831
    %v1840 = vadd.f32 %v1751, %v1832
    %v1841 = vadd.f32 %v1752, %v1833
    %v1842 = vadd.f32 %v1753, %v1834
    %v1843 = vadd.f32 %v1754, %v1835
    %v1844 = vadd.f32 %v1755, %v1836
    %v1845 = vadd.f32 %v1756, %v1837
    %v1846 = vadd.f32 %v1757, %v1838
    %v1847 = vadd.f32 %v1758, %v1839
    %s1848 = scalar_lea.vmem [#allocation5], 352
    %v1849 = vld [vmem:[%s1848] sm:$0xff]
    %v1850 = vld [vmem:[%s1848 + $0x8] sm:$0xff]
    %v1851 = vld [vmem:[%s1848 + $0x10] sm:$0xff]
    %v1852 = vld [vmem:[%s1848 + $0x18] sm:$0xff]
    %v1853 = vunpack.c.l.bf16 %v1849
    %v1854 = vunpack.c.h.bf16 %v1849
    %v1855 = vunpack.c.l.bf16 %v1850
    %v1856 = vunpack.c.h.bf16 %v1850
    %v1857 = vunpack.c.l.bf16 %v1851
    %v1858 = vunpack.c.h.bf16 %v1851
    %v1859 = vunpack.c.l.bf16 %v1852
    %v1860 = vunpack.c.h.bf16 %v1852
    %v1861 = vadd.f32 %v1751, %v1853
    %v1862 = vadd.f32 %v1752, %v1854
    %v1863 = vadd.f32 %v1753, %v1855
    %v1864 = vadd.f32 %v1754, %v1856
    %v1865 = vadd.f32 %v1755, %v1857
    %v1866 = vadd.f32 %v1756, %v1858
    %v1867 = vadd.f32 %v1757, %v1859
    %v1868 = vadd.f32 %v1758, %v1860
    %s1869 = scalar_lea.vmem [#allocation5], 384
    %v1870 = vld [vmem:[%s1869] sm:$0xff]
    %v1871 = vld [vmem:[%s1869 + $0x8] sm:$0xff]
    %v1872 = vld [vmem:[%s1869 + $0x10] sm:$0xff]
    %v1873 = vld [vmem:[%s1869 + $0x18] sm:$0xff]
    %v1874 = vunpack.c.l.bf16 %v1870
    %v1875 = vunpack.c.h.bf16 %v1870
    %v1876 = vunpack.c.l.bf16 %v1871
    %v1877 = vunpack.c.h.bf16 %v1871
    %v1878 = vunpack.c.l.bf16 %v1872
    %v1879 = vunpack.c.h.bf16 %v1872
    %v1880 = vunpack.c.l.bf16 %v1873
    %v1881 = vunpack.c.h.bf16 %v1873
    %v1882 = vadd.f32 %v1764, %v1874
    %v1883 = vadd.f32 %v1765, %v1875
    %v1884 = vadd.f32 %v1766, %v1876
    %v1885 = vadd.f32 %v1767, %v1877
    %v1886 = vadd.f32 %v1768, %v1878
    %v1887 = vadd.f32 %v1769, %v1879
    %v1888 = vadd.f32 %v1770, %v1880
    %v1889 = vadd.f32 %v1771, %v1881
    %s1890 = scalar_lea.vmem [#allocation5], 416
    %v1891 = vld [vmem:[%s1890] sm:$0xff]
    %v1892 = vld [vmem:[%s1890 + $0x8] sm:$0xff]
    %v1893 = vld [vmem:[%s1890 + $0x10] sm:$0xff]
    %v1894 = vld [vmem:[%s1890 + $0x18] sm:$0xff]
    %v1895 = vunpack.c.l.bf16 %v1891
    %v1896 = vunpack.c.h.bf16 %v1891
    %v1897 = vunpack.c.l.bf16 %v1892
    %v1898 = vunpack.c.h.bf16 %v1892
    %v1899 = vunpack.c.l.bf16 %v1893
    %v1900 = vunpack.c.h.bf16 %v1893
    %v1901 = vunpack.c.l.bf16 %v1894
    %v1902 = vunpack.c.h.bf16 %v1894
    %v1903 = vadd.f32 %v1764, %v1895
    %v1904 = vadd.f32 %v1765, %v1896
    %v1905 = vadd.f32 %v1766, %v1897
    %v1906 = vadd.f32 %v1767, %v1898
    %v1907 = vadd.f32 %v1768, %v1899
    %v1908 = vadd.f32 %v1769, %v1900
    %v1909 = vadd.f32 %v1770, %v1901
    %v1910 = vadd.f32 %v1771, %v1902
    %s1911 = scalar_lea.vmem [#allocation5], 448
    %v1912 = vld [vmem:[%s1911] sm:$0xff]
    %v1913 = vld [vmem:[%s1911 + $0x8] sm:$0xff]
    %v1914 = vld [vmem:[%s1911 + $0x10] sm:$0xff]
    %v1915 = vld [vmem:[%s1911 + $0x18] sm:$0xff]
    %v1916 = vunpack.c.l.bf16 %v1912
    %v1917 = vunpack.c.h.bf16 %v1912
    %v1918 = vunpack.c.l.bf16 %v1913
    %v1919 = vunpack.c.h.bf16 %v1913
    %v1920 = vunpack.c.l.bf16 %v1914
    %v1921 = vunpack.c.h.bf16 %v1914
    %v1922 = vunpack.c.l.bf16 %v1915
    %v1923 = vunpack.c.h.bf16 %v1915
    %v1924 = vadd.f32 %v1777, %v1916
    %v1925 = vadd.f32 %v1778, %v1917
    %v1926 = vadd.f32 %v1779, %v1918
    %v1927 = vadd.f32 %v1780, %v1919
    %v1928 = vadd.f32 %v1781, %v1920
    %v1929 = vadd.f32 %v1782, %v1921
    %v1930 = vadd.f32 %v1783, %v1922
    %v1931 = vadd.f32 %v1784, %v1923
    %s1932 = scalar_lea.vmem [#allocation5], 480
    %v1933 = vld [vmem:[%s1932] sm:$0xff]
    %v1934 = vld [vmem:[%s1932 + $0x8] sm:$0xff]
    %v1935 = vld [vmem:[%s1932 + $0x10] sm:$0xff]
    %v1936 = vld [vmem:[%s1932 + $0x18] sm:$0xff]
    %v1937 = vunpack.c.l.bf16 %v1933
    %v1938 = vunpack.c.h.bf16 %v1933
    %v1939 = vunpack.c.l.bf16 %v1934
    %v1940 = vunpack.c.h.bf16 %v1934
    %v1941 = vunpack.c.l.bf16 %v1935
    %v1942 = vunpack.c.h.bf16 %v1935
    %v1943 = vunpack.c.l.bf16 %v1936
    %v1944 = vunpack.c.h.bf16 %v1936
    %v1945 = vadd.f32 %v1777, %v1937
    %v1946 = vadd.f32 %v1778, %v1938
    %v1947 = vadd.f32 %v1779, %v1939
    %v1948 = vadd.f32 %v1780, %v1940
    %v1949 = vadd.f32 %v1781, %v1941
    %v1950 = vadd.f32 %v1782, %v1942
    %v1951 = vadd.f32 %v1783, %v1943
    %v1952 = vadd.f32 %v1784, %v1944
    %v1953 = vmul.f32 %v1798, %v276
    %v1954 = vmul.f32 %v1799, %v276
    %v1955 = vmul.f32 %v1800, %v281
    %v1956 = vmul.f32 %v1801, %v281
    %v1957 = vmul.f32 %v1802, %v286
    %v1958 = vmul.f32 %v1803, %v286
    %v1959 = vmul.f32 %v1804, %v291
    %v1960 = vmul.f32 %v1805, %v291
    %v1961 = vmul.f32 %v1819, %v303
    %v1962 = vmul.f32 %v1820, %v303
    %v1963 = vmul.f32 %v1821, %v307
    %v1964 = vmul.f32 %v1822, %v307
    %v1965 = vmul.f32 %v1823, %v311
    %v1966 = vmul.f32 %v1824, %v311
    %v1967 = vmul.f32 %v1825, %v315
    %v1968 = vmul.f32 %v1826, %v315
    %v1969 = vadd.f32 %v1953, %v1961
    %v1970 = vadd.f32 %v1954, %v1962
    %v1971 = vadd.f32 %v1955, %v1963
    %v1972 = vadd.f32 %v1956, %v1964
    %v1973 = vadd.f32 %v1957, %v1965
    %v1974 = vadd.f32 %v1958, %v1966
    %v1975 = vadd.f32 %v1959, %v1967
    %v1976 = vadd.f32 %v1960, %v1968
    %v1977 = vmul.f32 %v1840, %v335
    %v1978 = vmul.f32 %v1841, %v335
    %v1979 = vmul.f32 %v1842, %v339
    %v1980 = vmul.f32 %v1843, %v339
    %v1981 = vmul.f32 %v1844, %v343
    %v1982 = vmul.f32 %v1845, %v343
    %v1983 = vmul.f32 %v1846, %v347
    %v1984 = vmul.f32 %v1847, %v347
    %v1985 = vadd.f32 %v1969, %v1977
    %v1986 = vadd.f32 %v1970, %v1978
    %v1987 = vadd.f32 %v1971, %v1979
    %v1988 = vadd.f32 %v1972, %v1980
    %v1989 = vadd.f32 %v1973, %v1981
    %v1990 = vadd.f32 %v1974, %v1982
    %v1991 = vadd.f32 %v1975, %v1983
    %v1992 = vadd.f32 %v1976, %v1984
    %v1993 = vmul.f32 %v1861, %v367
    %v1994 = vmul.f32 %v1862, %v367
    %v1995 = vmul.f32 %v1863, %v371
    %v1996 = vmul.f32 %v1864, %v371
    %v1997 = vmul.f32 %v1865, %v375
    %v1998 = vmul.f32 %v1866, %v375
    %v1999 = vmul.f32 %v1867, %v379
    %v2000 = vmul.f32 %v1868, %v379
    %v2001 = vadd.f32 %v1985, %v1993
    %v2002 = vadd.f32 %v1986, %v1994
    %v2003 = vadd.f32 %v1987, %v1995
    %v2004 = vadd.f32 %v1988, %v1996
    %v2005 = vadd.f32 %v1989, %v1997
    %v2006 = vadd.f32 %v1990, %v1998
    %v2007 = vadd.f32 %v1991, %v1999
    %v2008 = vadd.f32 %v1992, %v2000
    %v2009 = vpack.c.bf16 %v2003, %v2001
    %v2010 = vpack.c.bf16 %v2004, %v2002
    %v2011 = vpack.c.bf16 %v2007, %v2005
    %v2012 = vpack.c.bf16 %v2008, %v2006
    %2013 = vmatprep.subr.bf16.mxu0 0
    %2014 = vmatpush1.bf16.msra.mxu0 0
    %2015 = vmatprep.subr.bf16.mxu0 0
    %2016 = vmatpush1.bf16.msra.mxu0 0
    %2017 = vmatprep.subr.bf16.mxu0 0
    %2018 = vmatpush1.bf16.msra.mxu0 0
    %2019 = vmatprep.subr.bf16.mxu0 0
    %2020 = vmatpush1.bf16.msra.mxu0 0
    %2021 = vmatprep.subr.bf16.mxu0 0
    %2022 = vmatpush1.bf16.msra.mxu0 0
    %2023 = vmatprep.subr.bf16.mxu0 0
    %2024 = vmatpush1.bf16.msra.mxu0 0
    %2025 = vmatprep.subr.bf16.mxu0 %v2012
    %2026 = vmatpush1.bf16.msra.mxu0 %v2011
    %2027 = vmatprep.subr.bf16.mxu0 %v2010
    %2028 = vmatpush1.bf16.msra.mxu0 %v2009
    %2029 = vmatprep.subr.bf16.mxu0 0
    %2030 = vmatpush2.bf16.msra.mxu0 0
    %2031 = vmatprep.subr.bf16.mxu0 0
    %2032 = vmatpush2.bf16.msra.mxu0 0
    %2033 = vmatprep.subr.bf16.mxu0 0
    %2034 = vmatpush2.bf16.msra.mxu0 0
    %2035 = vmatprep.subr.bf16.mxu0 0
    %2036 = vmatpush2.bf16.msra.mxu0 0
    %2037 = vmatprep.subr.bf16.mxu0 0
    %2038 = vmatpush2.bf16.msra.mxu0 0
    %2039 = vmatprep.subr.bf16.mxu0 0
    %2040 = vmatpush2.bf16.msra.mxu0 0
    %2041 = vmatprep.subr.bf16.mxu0 0
    %2042 = vmatpush2.bf16.msra.mxu0 0
    %2043 = vmatprep.subr.bf16.mxu0 0
    %2044 = vmatpush2.bf16.msra.mxu0 0
    %2045 = vmatprep.mubr.bf16.mxu0 0
    %2046 = vmatmul.mubr.bf16.gmra.mxu0 %v413
    %v2047 = vpop.f32.mrf.mxu0
    %v2048 = vadd.f32 0.0, %v2047
    %v2049 = vpop.f32.mrf.mxu0
    %v2050 = vadd.f32 0.0, %v2049
    %v2051 = vpop.f32.mrf.mxu0
    %v2052 = vadd.f32 0.0, %v2051
    %v2053 = vpop.f32.mrf.mxu0
    %v2054 = vadd.f32 0.0, %v2053
    %2055 = vmatprep.mubr.bf16.mxu0 0
    %2056 = vmatmul.mubr.bf16.gmra.mxu0 %v416
    %v2057 = vpop.f32.mrf.mxu0
    %v2058 = vadd.f32 0.0, %v2057
    %v2059 = vpop.f32.mrf.mxu0
    %v2060 = vadd.f32 0.0, %v2059
    %v2061 = vpop.f32.mrf.mxu0
    %v2062 = vadd.f32 0.0, %v2061
    %v2063 = vpop.f32.mrf.mxu0
    %v2064 = vadd.f32 0.0, %v2063
    %2065 = vdwg.mxu0
    %v2066 = vpack.c.bf16 %v2052, %v2048
    %v2067 = vpack.c.bf16 %v2054, %v2050
    %v2068 = vpack.c.bf16 %v2062, %v2058
    %v2069 = vpack.c.bf16 %v2064, %v2060
    %v2074 = vunpack.c.l.b16 %v2066
    %v2075 = vunpack.c.l.b16 %v2067
    %v2076 = vunpack.c.h.b16 %v2066
    %v2077 = vunpack.c.h.b16 %v2067
    %v2078 = vunpack.c.l.b16 %v2068
    %v2079 = vunpack.c.l.b16 %v2069
    %v2080 = vunpack.c.h.b16 %v2068
    %v2081 = vunpack.c.h.b16 %v2069
    %v2082 = vpack.c.b16 %v2075, %v2074
    %v2083 = vpack.c.b16 %v2077, %v2076
    %v2084 = vpack.c.b16 %v2079, %v2078
    %v2085 = vpack.c.b16 %v2081, %v2080
    %s2090 = scalar_lea.vmem [#allocation7], 256
    %2091 = vst [vmem:[%s2090] sm:$0xff] %v2082
    %2092 = vst [vmem:[%s2090 + $0x8] sm:$0xff] %v2083
    %2093 = vst [vmem:[%s2090 + $0x10] sm:$0xff] %v2084
    %2094 = vst [vmem:[%s2090 + $0x18] sm:$0xff] %v2085
    %v2095 = vmul.f32 %v1819, %v276
    %v2096 = vmul.f32 %v1820, %v276
    %v2097 = vmul.f32 %v1821, %v281
    %v2098 = vmul.f32 %v1822, %v281
    %v2099 = vmul.f32 %v1823, %v286
    %v2100 = vmul.f32 %v1824, %v286
    %v2101 = vmul.f32 %v1825, %v291
    %v2102 = vmul.f32 %v1826, %v291
    %v2103 = vmul.f32 %v1798, %v509
    %v2104 = vmul.f32 %v1799, %v509
    %v2105 = vmul.f32 %v1800, %v513
    %v2106 = vmul.f32 %v1801, %v513
    %v2107 = vmul.f32 %v1802, %v517
    %v2108 = vmul.f32 %v1803, %v517
    %v2109 = vmul.f32 %v1804, %v521
    %v2110 = vmul.f32 %v1805, %v521
    %v2111 = vadd.f32 %v2095, %v2103
    %v2112 = vadd.f32 %v2096, %v2104
    %v2113 = vadd.f32 %v2097, %v2105
    %v2114 = vadd.f32 %v2098, %v2106
    %v2115 = vadd.f32 %v2099, %v2107
    %v2116 = vadd.f32 %v2100, %v2108
    %v2117 = vadd.f32 %v2101, %v2109
    %v2118 = vadd.f32 %v2102, %v2110
    %v2119 = vmul.f32 %v1840, %v303
    %v2120 = vmul.f32 %v1841, %v303
    %v2121 = vmul.f32 %v1842, %v307
    %v2122 = vmul.f32 %v1843, %v307
    %v2123 = vmul.f32 %v1844, %v311
    %v2124 = vmul.f32 %v1845, %v311
    %v2125 = vmul.f32 %v1846, %v315
    %v2126 = vmul.f32 %v1847, %v315
    %v2127 = vadd.f32 %v2111, %v2119
    %v2128 = vadd.f32 %v2112, %v2120
    %v2129 = vadd.f32 %v2113, %v2121
    %v2130 = vadd.f32 %v2114, %v2122
    %v2131 = vadd.f32 %v2115, %v2123
    %v2132 = vadd.f32 %v2116, %v2124
    %v2133 = vadd.f32 %v2117, %v2125
    %v2134 = vadd.f32 %v2118, %v2126
    %v2135 = vmul.f32 %v1861, %v335
    %v2136 = vmul.f32 %v1862, %v335
    %v2137 = vmul.f32 %v1863, %v339
    %v2138 = vmul.f32 %v1864, %v339
    %v2139 = vmul.f32 %v1865, %v343
    %v2140 = vmul.f32 %v1866, %v343
    %v2141 = vmul.f32 %v1867, %v347
    %v2142 = vmul.f32 %v1868, %v347
    %v2143 = vadd.f32 %v2127, %v2135
    %v2144 = vadd.f32 %v2128, %v2136
    %v2145 = vadd.f32 %v2129, %v2137
    %v2146 = vadd.f32 %v2130, %v2138
    %v2147 = vadd.f32 %v2131, %v2139
    %v2148 = vadd.f32 %v2132, %v2140
    %v2149 = vadd.f32 %v2133, %v2141
    %v2150 = vadd.f32 %v2134, %v2142
    %v2151 = vmul.f32 %v1882, %v367
    %v2152 = vmul.f32 %v1883, %v367
    %v2153 = vmul.f32 %v1884, %v371
    %v2154 = vmul.f32 %v1885, %v371
    %v2155 = vmul.f32 %v1886, %v375
    %v2156 = vmul.f32 %v1887, %v375
    %v2157 = vmul.f32 %v1888, %v379
    %v2158 = vmul.f32 %v1889, %v379
    %v2159 = vadd.f32 %v2143, %v2151
    %v2160 = vadd.f32 %v2144, %v2152
    %v2161 = vadd.f32 %v2145, %v2153
    %v2162 = vadd.f32 %v2146, %v2154
    %v2163 = vadd.f32 %v2147, %v2155
    %v2164 = vadd.f32 %v2148, %v2156
    %v2165 = vadd.f32 %v2149, %v2157
    %v2166 = vadd.f32 %v2150, %v2158
    %v2167 = vpack.c.bf16 %v2161, %v2159
    %v2168 = vpack.c.bf16 %v2162, %v2160
    %v2169 = vpack.c.bf16 %v2165, %v2163
    %v2170 = vpack.c.bf16 %v2166, %v2164
    %2171 = vmatprep.subr.bf16.mxu0 0
    %2172 = vmatpush1.bf16.msra.mxu0 0
    %2173 = vmatprep.subr.bf16.mxu0 0
    %2174 = vmatpush1.bf16.msra.mxu0 0
    %2175 = vmatprep.subr.bf16.mxu0 0
    %2176 = vmatpush1.bf16.msra.mxu0 0
    %2177 = vmatprep.subr.bf16.mxu0 0
    %2178 = vmatpush1.bf16.msra.mxu0 0
    %2179 = vmatprep.subr.bf16.mxu0 0
    %2180 = vmatpush1.bf16.msra.mxu0 0
    %2181 = vmatprep.subr.bf16.mxu0 0
    %2182 = vmatpush1.bf16.msra.mxu0 0
    %2183 = vmatprep.subr.bf16.mxu0 %v2170
    %2184 = vmatpush1.bf16.msra.mxu0 %v2169
    %2185 = vmatprep.subr.bf16.mxu0 %v2168
    %2186 = vmatpush1.bf16.msra.mxu0 %v2167
    %2187 = vmatprep.subr.bf16.mxu0 0
    %2188 = vmatpush2.bf16.msra.mxu0 0
    %2189 = vmatprep.subr.bf16.mxu0 0
    %2190 = vmatpush2.bf16.msra.mxu0 0
    %2191 = vmatprep.subr.bf16.mxu0 0
    %2192 = vmatpush2.bf16.msra.mxu0 0
    %2193 = vmatprep.subr.bf16.mxu0 0
    %2194 = vmatpush2.bf16.msra.mxu0 0
    %2195 = vmatprep.subr.bf16.mxu0 0
    %2196 = vmatpush2.bf16.msra.mxu0 0
    %2197 = vmatprep.subr.bf16.mxu0 0
    %2198 = vmatpush2.bf16.msra.mxu0 0
    %2199 = vmatprep.subr.bf16.mxu0 0
    %2200 = vmatpush2.bf16.msra.mxu0 0
    %2201 = vmatprep.subr.bf16.mxu0 0
    %2202 = vmatpush2.bf16.msra.mxu0 0
    %2203 = vmatprep.mubr.bf16.mxu0 0
    %2204 = vmatmul.mubr.bf16.gmra.mxu0 %v413
    %v2205 = vpop.f32.mrf.mxu0
    %v2206 = vadd.f32 0.0, %v2205
    %v2207 = vpop.f32.mrf.mxu0
    %v2208 = vadd.f32 0.0, %v2207
    %v2209 = vpop.f32.mrf.mxu0
    %v2210 = vadd.f32 0.0, %v2209
    %v2211 = vpop.f32.mrf.mxu0
    %v2212 = vadd.f32 0.0, %v2211
    %2213 = vmatprep.mubr.bf16.mxu0 0
    %2214 = vmatmul.mubr.bf16.gmra.mxu0 %v416
    %v2215 = vpop.f32.mrf.mxu0
    %v2216 = vadd.f32 0.0, %v2215
    %v2217 = vpop.f32.mrf.mxu0
    %v2218 = vadd.f32 0.0, %v2217
    %v2219 = vpop.f32.mrf.mxu0
    %v2220 = vadd.f32 0.0, %v2219
    %v2221 = vpop.f32.mrf.mxu0
    %v2222 = vadd.f32 0.0, %v2221
    %2223 = vdwg.mxu0
    %v2224 = vpack.c.bf16 %v2210, %v2206
    %v2225 = vpack.c.bf16 %v2212, %v2208
    %v2226 = vpack.c.bf16 %v2220, %v2216
    %v2227 = vpack.c.bf16 %v2222, %v2218
    %v2232 = vunpack.c.l.b16 %v2224
    %v2233 = vunpack.c.l.b16 %v2225
    %v2234 = vunpack.c.h.b16 %v2224
    %v2235 = vunpack.c.h.b16 %v2225
    %v2236 = vunpack.c.l.b16 %v2226
    %v2237 = vunpack.c.l.b16 %v2227
    %v2238 = vunpack.c.h.b16 %v2226
    %v2239 = vunpack.c.h.b16 %v2227
    %v2240 = vpack.c.b16 %v2233, %v2232
    %v2241 = vpack.c.b16 %v2235, %v2234
    %v2242 = vpack.c.b16 %v2237, %v2236
    %v2243 = vpack.c.b16 %v2239, %v2238
    %s2248 = scalar_lea.vmem [#allocation7], 288
    %2249 = vst [vmem:[%s2248] sm:$0xff] %v2240
    %2250 = vst [vmem:[%s2248 + $0x8] sm:$0xff] %v2241
    %2251 = vst [vmem:[%s2248 + $0x10] sm:$0xff] %v2242
    %2252 = vst [vmem:[%s2248 + $0x18] sm:$0xff] %v2243
    %v2253 = vmul.f32 %v1840, %v276
    %v2254 = vmul.f32 %v1841, %v276
    %v2255 = vmul.f32 %v1842, %v281
    %v2256 = vmul.f32 %v1843, %v281
    %v2257 = vmul.f32 %v1844, %v286
    %v2258 = vmul.f32 %v1845, %v286
    %v2259 = vmul.f32 %v1846, %v291
    %v2260 = vmul.f32 %v1847, %v291
    %v2261 = vmul.f32 %v1798, %v683
    %v2262 = vmul.f32 %v1799, %v683
    %v2263 = vmul.f32 %v1800, %v687
    %v2264 = vmul.f32 %v1801, %v687
    %v2265 = vmul.f32 %v1802, %v691
    %v2266 = vmul.f32 %v1803, %v691
    %v2267 = vmul.f32 %v1804, %v695
    %v2268 = vmul.f32 %v1805, %v695
    %v2269 = vadd.f32 %v2253, %v2261
    %v2270 = vadd.f32 %v2254, %v2262
    %v2271 = vadd.f32 %v2255, %v2263
    %v2272 = vadd.f32 %v2256, %v2264
    %v2273 = vadd.f32 %v2257, %v2265
    %v2274 = vadd.f32 %v2258, %v2266
    %v2275 = vadd.f32 %v2259, %v2267
    %v2276 = vadd.f32 %v2260, %v2268
    %v2277 = vmul.f32 %v1819, %v509
    %v2278 = vmul.f32 %v1820, %v509
    %v2279 = vmul.f32 %v1821, %v513
    %v2280 = vmul.f32 %v1822, %v513
    %v2281 = vmul.f32 %v1823, %v517
    %v2282 = vmul.f32 %v1824, %v517
    %v2283 = vmul.f32 %v1825, %v521
    %v2284 = vmul.f32 %v1826, %v521
    %v2285 = vadd.f32 %v2269, %v2277
    %v2286 = vadd.f32 %v2270, %v2278
    %v2287 = vadd.f32 %v2271, %v2279
    %v2288 = vadd.f32 %v2272, %v2280
    %v2289 = vadd.f32 %v2273, %v2281
    %v2290 = vadd.f32 %v2274, %v2282
    %v2291 = vadd.f32 %v2275, %v2283
    %v2292 = vadd.f32 %v2276, %v2284
    %v2293 = vmul.f32 %v1861, %v303
    %v2294 = vmul.f32 %v1862, %v303
    %v2295 = vmul.f32 %v1863, %v307
    %v2296 = vmul.f32 %v1864, %v307
    %v2297 = vmul.f32 %v1865, %v311
    %v2298 = vmul.f32 %v1866, %v311
    %v2299 = vmul.f32 %v1867, %v315
    %v2300 = vmul.f32 %v1868, %v315
    %v2301 = vadd.f32 %v2285, %v2293
    %v2302 = vadd.f32 %v2286, %v2294
    %v2303 = vadd.f32 %v2287, %v2295
    %v2304 = vadd.f32 %v2288, %v2296
    %v2305 = vadd.f32 %v2289, %v2297
    %v2306 = vadd.f32 %v2290, %v2298
    %v2307 = vadd.f32 %v2291, %v2299
    %v2308 = vadd.f32 %v2292, %v2300
    %v2309 = vmul.f32 %v1882, %v335
    %v2310 = vmul.f32 %v1883, %v335
    %v2311 = vmul.f32 %v1884, %v339
    %v2312 = vmul.f32 %v1885, %v339
    %v2313 = vmul.f32 %v1886, %v343
    %v2314 = vmul.f32 %v1887, %v343
    %v2315 = vmul.f32 %v1888, %v347
    %v2316 = vmul.f32 %v1889, %v347
    %v2317 = vadd.f32 %v2301, %v2309
    %v2318 = vadd.f32 %v2302, %v2310
    %v2319 = vadd.f32 %v2303, %v2311
    %v2320 = vadd.f32 %v2304, %v2312
    %v2321 = vadd.f32 %v2305, %v2313
    %v2322 = vadd.f32 %v2306, %v2314
    %v2323 = vadd.f32 %v2307, %v2315
    %v2324 = vadd.f32 %v2308, %v2316
    %v2325 = vmul.f32 %v1903, %v367
    %v2326 = vmul.f32 %v1904, %v367
    %v2327 = vmul.f32 %v1905, %v371
    %v2328 = vmul.f32 %v1906, %v371
    %v2329 = vmul.f32 %v1907, %v375
    %v2330 = vmul.f32 %v1908, %v375
    %v2331 = vmul.f32 %v1909, %v379
    %v2332 = vmul.f32 %v1910, %v379
    %v2333 = vadd.f32 %v2317, %v2325
    %v2334 = vadd.f32 %v2318, %v2326
    %v2335 = vadd.f32 %v2319, %v2327
    %v2336 = vadd.f32 %v2320, %v2328
    %v2337 = vadd.f32 %v2321, %v2329
    %v2338 = vadd.f32 %v2322, %v2330
    %v2339 = vadd.f32 %v2323, %v2331
    %v2340 = vadd.f32 %v2324, %v2332
    %v2341 = vpack.c.bf16 %v2335, %v2333
    %v2342 = vpack.c.bf16 %v2336, %v2334
    %v2343 = vpack.c.bf16 %v2339, %v2337
    %v2344 = vpack.c.bf16 %v2340, %v2338
    %2345 = vmatprep.subr.bf16.mxu0 0
    %2346 = vmatpush1.bf16.msra.mxu0 0
    %2347 = vmatprep.subr.bf16.mxu0 0
    %2348 = vmatpush1.bf16.msra.mxu0 0
    %2349 = vmatprep.subr.bf16.mxu0 0
    %2350 = vmatpush1.bf16.msra.mxu0 0
    %2351 = vmatprep.subr.bf16.mxu0 0
    %2352 = vmatpush1.bf16.msra.mxu0 0
    %2353 = vmatprep.subr.bf16.mxu0 0
    %2354 = vmatpush1.bf16.msra.mxu0 0
    %2355 = vmatprep.subr.bf16.mxu0 0
    %2356 = vmatpush1.bf16.msra.mxu0 0
    %2357 = vmatprep.subr.bf16.mxu0 %v2344
    %2358 = vmatpush1.bf16.msra.mxu0 %v2343
    %2359 = vmatprep.subr.bf16.mxu0 %v2342
    %2360 = vmatpush1.bf16.msra.mxu0 %v2341
    %2361 = vmatprep.subr.bf16.mxu0 0
    %2362 = vmatpush2.bf16.msra.mxu0 0
    %2363 = vmatprep.subr.bf16.mxu0 0
    %2364 = vmatpush2.bf16.msra.mxu0 0
    %2365 = vmatprep.subr.bf16.mxu0 0
    %2366 = vmatpush2.bf16.msra.mxu0 0
    %2367 = vmatprep.subr.bf16.mxu0 0
    %2368 = vmatpush2.bf16.msra.mxu0 0
    %2369 = vmatprep.subr.bf16.mxu0 0
    %2370 = vmatpush2.bf16.msra.mxu0 0
    %2371 = vmatprep.subr.bf16.mxu0 0
    %2372 = vmatpush2.bf16.msra.mxu0 0
    %2373 = vmatprep.subr.bf16.mxu0 0
    %2374 = vmatpush2.bf16.msra.mxu0 0
    %2375 = vmatprep.subr.bf16.mxu0 0
    %2376 = vmatpush2.bf16.msra.mxu0 0
    %2377 = vmatprep.mubr.bf16.mxu0 0
    %2378 = vmatmul.mubr.bf16.gmra.mxu0 %v413
    %v2379 = vpop.f32.mrf.mxu0
    %v2380 = vadd.f32 0.0, %v2379
    %v2381 = vpop.f32.mrf.mxu0
    %v2382 = vadd.f32 0.0, %v2381
    %v2383 = vpop.f32.mrf.mxu0
    %v2384 = vadd.f32 0.0, %v2383
    %v2385 = vpop.f32.mrf.mxu0
    %v2386 = vadd.f32 0.0, %v2385
    %2387 = vmatprep.mubr.bf16.mxu0 0
    %2388 = vmatmul.mubr.bf16.gmra.mxu0 %v416
    %v2389 = vpop.f32.mrf.mxu0
    %v2390 = vadd.f32 0.0, %v2389
    %v2391 = vpop.f32.mrf.mxu0
    %v2392 = vadd.f32 0.0, %v2391
    %v2393 = vpop.f32.mrf.mxu0
    %v2394 = vadd.f32 0.0, %v2393
    %v2395 = vpop.f32.mrf.mxu0
    %v2396 = vadd.f32 0.0, %v2395
    %2397 = vdwg.mxu0
    %v2398 = vpack.c.bf16 %v2384, %v2380
    %v2399 = vpack.c.bf16 %v2386, %v2382
    %v2400 = vpack.c.bf16 %v2394, %v2390
    %v2401 = vpack.c.bf16 %v2396, %v2392
    %v2406 = vunpack.c.l.b16 %v2398
    %v2407 = vunpack.c.l.b16 %v2399
    %v2408 = vunpack.c.h.b16 %v2398
    %v2409 = vunpack.c.h.b16 %v2399
    %v2410 = vunpack.c.l.b16 %v2400
    %v2411 = vunpack.c.l.b16 %v2401
    %v2412 = vunpack.c.h.b16 %v2400
    %v2413 = vunpack.c.h.b16 %v2401
    %v2414 = vpack.c.b16 %v2407, %v2406
    %v2415 = vpack.c.b16 %v2409, %v2408
    %v2416 = vpack.c.b16 %v2411, %v2410
    %v2417 = vpack.c.b16 %v2413, %v2412
    %s2422 = scalar_lea.vmem [#allocation7], 320
    %2423 = vst [vmem:[%s2422] sm:$0xff] %v2414
    %2424 = vst [vmem:[%s2422 + $0x8] sm:$0xff] %v2415
    %2425 = vst [vmem:[%s2422 + $0x10] sm:$0xff] %v2416
    %2426 = vst [vmem:[%s2422 + $0x18] sm:$0xff] %v2417
    %v2427 = vmul.f32 %v1861, %v276
    %v2428 = vmul.f32 %v1862, %v276
    %v2429 = vmul.f32 %v1863, %v281
    %v2430 = vmul.f32 %v1864, %v281
    %v2431 = vmul.f32 %v1865, %v286
    %v2432 = vmul.f32 %v1866, %v286
    %v2433 = vmul.f32 %v1867, %v291
    %v2434 = vmul.f32 %v1868, %v291
    %v2435 = vmul.f32 %v1798, %v873
    %v2436 = vmul.f32 %v1799, %v873
    %v2437 = vmul.f32 %v1800, %v877
    %v2438 = vmul.f32 %v1801, %v877
    %v2439 = vmul.f32 %v1802, %v881
    %v2440 = vmul.f32 %v1803, %v881
    %v2441 = vmul.f32 %v1804, %v885
    %v2442 = vmul.f32 %v1805, %v885
    %v2443 = vadd.f32 %v2427, %v2435
    %v2444 = vadd.f32 %v2428, %v2436
    %v2445 = vadd.f32 %v2429, %v2437
    %v2446 = vadd.f32 %v2430, %v2438
    %v2447 = vadd.f32 %v2431, %v2439
    %v2448 = vadd.f32 %v2432, %v2440
    %v2449 = vadd.f32 %v2433, %v2441
    %v2450 = vadd.f32 %v2434, %v2442
    %v2451 = vmul.f32 %v1819, %v683
    %v2452 = vmul.f32 %v1820, %v683
    %v2453 = vmul.f32 %v1821, %v687
    %v2454 = vmul.f32 %v1822, %v687
    %v2455 = vmul.f32 %v1823, %v691
    %v2456 = vmul.f32 %v1824, %v691
    %v2457 = vmul.f32 %v1825, %v695
    %v2458 = vmul.f32 %v1826, %v695
    %v2459 = vadd.f32 %v2443, %v2451
    %v2460 = vadd.f32 %v2444, %v2452
    %v2461 = vadd.f32 %v2445, %v2453
    %v2462 = vadd.f32 %v2446, %v2454
    %v2463 = vadd.f32 %v2447, %v2455
    %v2464 = vadd.f32 %v2448, %v2456
    %v2465 = vadd.f32 %v2449, %v2457
    %v2466 = vadd.f32 %v2450, %v2458
    %v2467 = vmul.f32 %v1840, %v509
    %v2468 = vmul.f32 %v1841, %v509
    %v2469 = vmul.f32 %v1842, %v513
    %v2470 = vmul.f32 %v1843, %v513
    %v2471 = vmul.f32 %v1844, %v517
    %v2472 = vmul.f32 %v1845, %v517
    %v2473 = vmul.f32 %v1846, %v521
    %v2474 = vmul.f32 %v1847, %v521
    %v2475 = vadd.f32 %v2459, %v2467
    %v2476 = vadd.f32 %v2460, %v2468
    %v2477 = vadd.f32 %v2461, %v2469
    %v2478 = vadd.f32 %v2462, %v2470
    %v2479 = vadd.f32 %v2463, %v2471
    %v2480 = vadd.f32 %v2464, %v2472
    %v2481 = vadd.f32 %v2465, %v2473
    %v2482 = vadd.f32 %v2466, %v2474
    %v2483 = vmul.f32 %v1882, %v303
    %v2484 = vmul.f32 %v1883, %v303
    %v2485 = vmul.f32 %v1884, %v307
    %v2486 = vmul.f32 %v1885, %v307
    %v2487 = vmul.f32 %v1886, %v311
    %v2488 = vmul.f32 %v1887, %v311
    %v2489 = vmul.f32 %v1888, %v315
    %v2490 = vmul.f32 %v1889, %v315
    %v2491 = vadd.f32 %v2475, %v2483
    %v2492 = vadd.f32 %v2476, %v2484
    %v2493 = vadd.f32 %v2477, %v2485
    %v2494 = vadd.f32 %v2478, %v2486
    %v2495 = vadd.f32 %v2479, %v2487
    %v2496 = vadd.f32 %v2480, %v2488
    %v2497 = vadd.f32 %v2481, %v2489
    %v2498 = vadd.f32 %v2482, %v2490
    %v2499 = vmul.f32 %v1903, %v335
    %v2500 = vmul.f32 %v1904, %v335
    %v2501 = vmul.f32 %v1905, %v339
    %v2502 = vmul.f32 %v1906, %v339
    %v2503 = vmul.f32 %v1907, %v343
    %v2504 = vmul.f32 %v1908, %v343
    %v2505 = vmul.f32 %v1909, %v347
    %v2506 = vmul.f32 %v1910, %v347
    %v2507 = vadd.f32 %v2491, %v2499
    %v2508 = vadd.f32 %v2492, %v2500
    %v2509 = vadd.f32 %v2493, %v2501
    %v2510 = vadd.f32 %v2494, %v2502
    %v2511 = vadd.f32 %v2495, %v2503
    %v2512 = vadd.f32 %v2496, %v2504
    %v2513 = vadd.f32 %v2497, %v2505
    %v2514 = vadd.f32 %v2498, %v2506
    %v2515 = vmul.f32 %v1924, %v367
    %v2516 = vmul.f32 %v1925, %v367
    %v2517 = vmul.f32 %v1926, %v371
    %v2518 = vmul.f32 %v1927, %v371
    %v2519 = vmul.f32 %v1928, %v375
    %v2520 = vmul.f32 %v1929, %v375
    %v2521 = vmul.f32 %v1930, %v379
    %v2522 = vmul.f32 %v1931, %v379
    %v2523 = vadd.f32 %v2507, %v2515
    %v2524 = vadd.f32 %v2508, %v2516
    %v2525 = vadd.f32 %v2509, %v2517
    %v2526 = vadd.f32 %v2510, %v2518
    %v2527 = vadd.f32 %v2511, %v2519
    %v2528 = vadd.f32 %v2512, %v2520
    %v2529 = vadd.f32 %v2513, %v2521
    %v2530 = vadd.f32 %v2514, %v2522
    %v2531 = vpack.c.bf16 %v2525, %v2523
    %v2532 = vpack.c.bf16 %v2526, %v2524
    %v2533 = vpack.c.bf16 %v2529, %v2527
    %v2534 = vpack.c.bf16 %v2530, %v2528
    %2535 = vmatprep.subr.bf16.mxu0 0
    %2536 = vmatpush1.bf16.msra.mxu0 0
    %2537 = vmatprep.subr.bf16.mxu0 0
    %2538 = vmatpush1.bf16.msra.mxu0 0
    %2539 = vmatprep.subr.bf16.mxu0 0
    %2540 = vmatpush1.bf16.msra.mxu0 0
    %2541 = vmatprep.subr.bf16.mxu0 0
    %2542 = vmatpush1.bf16.msra.mxu0 0
    %2543 = vmatprep.subr.bf16.mxu0 0
    %2544 = vmatpush1.bf16.msra.mxu0 0
    %2545 = vmatprep.subr.bf16.mxu0 0
    %2546 = vmatpush1.bf16.msra.mxu0 0
    %2547 = vmatprep.subr.bf16.mxu0 %v2534
    %2548 = vmatpush1.bf16.msra.mxu0 %v2533
    %2549 = vmatprep.subr.bf16.mxu0 %v2532
    %2550 = vmatpush1.bf16.msra.mxu0 %v2531
    %2551 = vmatprep.subr.bf16.mxu0 0
    %2552 = vmatpush2.bf16.msra.mxu0 0
    %2553 = vmatprep.subr.bf16.mxu0 0
    %2554 = vmatpush2.bf16.msra.mxu0 0
    %2555 = vmatprep.subr.bf16.mxu0 0
    %2556 = vmatpush2.bf16.msra.mxu0 0
    %2557 = vmatprep.subr.bf16.mxu0 0
    %2558 = vmatpush2.bf16.msra.mxu0 0
    %2559 = vmatprep.subr.bf16.mxu0 0
    %2560 = vmatpush2.bf16.msra.mxu0 0
    %2561 = vmatprep.subr.bf16.mxu0 0
    %2562 = vmatpush2.bf16.msra.mxu0 0
    %2563 = vmatprep.subr.bf16.mxu0 0
    %2564 = vmatpush2.bf16.msra.mxu0 0
    %2565 = vmatprep.subr.bf16.mxu0 0
    %2566 = vmatpush2.bf16.msra.mxu0 0
    %2567 = vmatprep.mubr.bf16.mxu0 0
    %2568 = vmatmul.mubr.bf16.gmra.mxu0 %v413
    %v2569 = vpop.f32.mrf.mxu0
    %v2570 = vadd.f32 0.0, %v2569
    %v2571 = vpop.f32.mrf.mxu0
    %v2572 = vadd.f32 0.0, %v2571
    %v2573 = vpop.f32.mrf.mxu0
    %v2574 = vadd.f32 0.0, %v2573
    %v2575 = vpop.f32.mrf.mxu0
    %v2576 = vadd.f32 0.0, %v2575
    %2577 = vmatprep.mubr.bf16.mxu0 0
    %2578 = vmatmul.mubr.bf16.gmra.mxu0 %v416
    %v2579 = vpop.f32.mrf.mxu0
    %v2580 = vadd.f32 0.0, %v2579
    %v2581 = vpop.f32.mrf.mxu0
    %v2582 = vadd.f32 0.0, %v2581
    %v2583 = vpop.f32.mrf.mxu0
    %v2584 = vadd.f32 0.0, %v2583
    %v2585 = vpop.f32.mrf.mxu0
    %v2586 = vadd.f32 0.0, %v2585
    %2587 = vdwg.mxu0
    %v2588 = vpack.c.bf16 %v2574, %v2570
    %v2589 = vpack.c.bf16 %v2576, %v2572
    %v2590 = vpack.c.bf16 %v2584, %v2580
    %v2591 = vpack.c.bf16 %v2586, %v2582
    %v2596 = vunpack.c.l.b16 %v2588
    %v2597 = vunpack.c.l.b16 %v2589
    %v2598 = vunpack.c.h.b16 %v2588
    %v2599 = vunpack.c.h.b16 %v2589
    %v2600 = vunpack.c.l.b16 %v2590
    %v2601 = vunpack.c.l.b16 %v2591
    %v2602 = vunpack.c.h.b16 %v2590
    %v2603 = vunpack.c.h.b16 %v2591
    %v2604 = vpack.c.b16 %v2597, %v2596
    %v2605 = vpack.c.b16 %v2599, %v2598
    %v2606 = vpack.c.b16 %v2601, %v2600
    %v2607 = vpack.c.b16 %v2603, %v2602
    %s2612 = scalar_lea.vmem [#allocation7], 352
    %2613 = vst [vmem:[%s2612] sm:$0xff] %v2604
    %2614 = vst [vmem:[%s2612 + $0x8] sm:$0xff] %v2605
    %2615 = vst [vmem:[%s2612 + $0x10] sm:$0xff] %v2606
    %2616 = vst [vmem:[%s2612 + $0x18] sm:$0xff] %v2607
    %v2617 = vmul.f32 %v1882, %v276
    %v2618 = vmul.f32 %v1883, %v276
    %v2619 = vmul.f32 %v1884, %v281
    %v2620 = vmul.f32 %v1885, %v281
    %v2621 = vmul.f32 %v1886, %v286
    %v2622 = vmul.f32 %v1887, %v286
    %v2623 = vmul.f32 %v1888, %v291
    %v2624 = vmul.f32 %v1889, %v291
    %v2625 = vmul.f32 %v1819, %v873
    %v2626 = vmul.f32 %v1820, %v873
    %v2627 = vmul.f32 %v1821, %v877
    %v2628 = vmul.f32 %v1822, %v877
    %v2629 = vmul.f32 %v1823, %v881
    %v2630 = vmul.f32 %v1824, %v881
    %v2631 = vmul.f32 %v1825, %v885
    %v2632 = vmul.f32 %v1826, %v885
    %v2633 = vadd.f32 %v2617, %v2625
    %v2634 = vadd.f32 %v2618, %v2626
    %v2635 = vadd.f32 %v2619, %v2627
    %v2636 = vadd.f32 %v2620, %v2628
    %v2637 = vadd.f32 %v2621, %v2629
    %v2638 = vadd.f32 %v2622, %v2630
    %v2639 = vadd.f32 %v2623, %v2631
    %v2640 = vadd.f32 %v2624, %v2632
    %v2641 = vmul.f32 %v1840, %v683
    %v2642 = vmul.f32 %v1841, %v683
    %v2643 = vmul.f32 %v1842, %v687
    %v2644 = vmul.f32 %v1843, %v687
    %v2645 = vmul.f32 %v1844, %v691
    %v2646 = vmul.f32 %v1845, %v691
    %v2647 = vmul.f32 %v1846, %v695
    %v2648 = vmul.f32 %v1847, %v695
    %v2649 = vadd.f32 %v2633, %v2641
    %v2650 = vadd.f32 %v2634, %v2642
    %v2651 = vadd.f32 %v2635, %v2643
    %v2652 = vadd.f32 %v2636, %v2644
    %v2653 = vadd.f32 %v2637, %v2645
    %v2654 = vadd.f32 %v2638, %v2646
    %v2655 = vadd.f32 %v2639, %v2647
    %v2656 = vadd.f32 %v2640, %v2648
    %v2657 = vmul.f32 %v1861, %v509
    %v2658 = vmul.f32 %v1862, %v509
    %v2659 = vmul.f32 %v1863, %v513
    %v2660 = vmul.f32 %v1864, %v513
    %v2661 = vmul.f32 %v1865, %v517
    %v2662 = vmul.f32 %v1866, %v517
    %v2663 = vmul.f32 %v1867, %v521
    %v2664 = vmul.f32 %v1868, %v521
    %v2665 = vadd.f32 %v2649, %v2657
    %v2666 = vadd.f32 %v2650, %v2658
    %v2667 = vadd.f32 %v2651, %v2659
    %v2668 = vadd.f32 %v2652, %v2660
    %v2669 = vadd.f32 %v2653, %v2661
    %v2670 = vadd.f32 %v2654, %v2662
    %v2671 = vadd.f32 %v2655, %v2663
    %v2672 = vadd.f32 %v2656, %v2664
    %v2673 = vmul.f32 %v1903, %v303
    %v2674 = vmul.f32 %v1904, %v303
    %v2675 = vmul.f32 %v1905, %v307
    %v2676 = vmul.f32 %v1906, %v307
    %v2677 = vmul.f32 %v1907, %v311
    %v2678 = vmul.f32 %v1908, %v311
    %v2679 = vmul.f32 %v1909, %v315
    %v2680 = vmul.f32 %v1910, %v315
    %v2681 = vadd.f32 %v2665, %v2673
    %v2682 = vadd.f32 %v2666, %v2674
    %v2683 = vadd.f32 %v2667, %v2675
    %v2684 = vadd.f32 %v2668, %v2676
    %v2685 = vadd.f32 %v2669, %v2677
    %v2686 = vadd.f32 %v2670, %v2678
    %v2687 = vadd.f32 %v2671, %v2679
    %v2688 = vadd.f32 %v2672, %v2680
    %v2689 = vmul.f32 %v1924, %v335
    %v2690 = vmul.f32 %v1925, %v335
    %v2691 = vmul.f32 %v1926, %v339
    %v2692 = vmul.f32 %v1927, %v339
    %v2693 = vmul.f32 %v1928, %v343
    %v2694 = vmul.f32 %v1929, %v343
    %v2695 = vmul.f32 %v1930, %v347
    %v2696 = vmul.f32 %v1931, %v347
    %v2697 = vadd.f32 %v2681, %v2689
    %v2698 = vadd.f32 %v2682, %v2690
    %v2699 = vadd.f32 %v2683, %v2691
    %v2700 = vadd.f32 %v2684, %v2692
    %v2701 = vadd.f32 %v2685, %v2693
    %v2702 = vadd.f32 %v2686, %v2694
    %v2703 = vadd.f32 %v2687, %v2695
    %v2704 = vadd.f32 %v2688, %v2696
    %v2705 = vmul.f32 %v1945, %v367
    %v2706 = vmul.f32 %v1946, %v367
    %v2707 = vmul.f32 %v1947, %v371
    %v2708 = vmul.f32 %v1948, %v371
    %v2709 = vmul.f32 %v1949, %v375
    %v2710 = vmul.f32 %v1950, %v375
    %v2711 = vmul.f32 %v1951, %v379
    %v2712 = vmul.f32 %v1952, %v379
    %v2713 = vadd.f32 %v2697, %v2705
    %v2714 = vadd.f32 %v2698, %v2706
    %v2715 = vadd.f32 %v2699, %v2707
    %v2716 = vadd.f32 %v2700, %v2708
    %v2717 = vadd.f32 %v2701, %v2709
    %v2718 = vadd.f32 %v2702, %v2710
    %v2719 = vadd.f32 %v2703, %v2711
    %v2720 = vadd.f32 %v2704, %v2712
    %v2721 = vpack.c.bf16 %v2715, %v2713
    %v2722 = vpack.c.bf16 %v2716, %v2714
    %v2723 = vpack.c.bf16 %v2719, %v2717
    %v2724 = vpack.c.bf16 %v2720, %v2718
    %2725 = vmatprep.subr.bf16.mxu0 0
    %2726 = vmatpush1.bf16.msra.mxu0 0
    %2727 = vmatprep.subr.bf16.mxu0 0
    %2728 = vmatpush1.bf16.msra.mxu0 0
    %2729 = vmatprep.subr.bf16.mxu0 0
    %2730 = vmatpush1.bf16.msra.mxu0 0
    %2731 = vmatprep.subr.bf16.mxu0 0
    %2732 = vmatpush1.bf16.msra.mxu0 0
    %2733 = vmatprep.subr.bf16.mxu0 0
    %2734 = vmatpush1.bf16.msra.mxu0 0
    %2735 = vmatprep.subr.bf16.mxu0 0
    %2736 = vmatpush1.bf16.msra.mxu0 0
    %2737 = vmatprep.subr.bf16.mxu0 %v2724
    %2738 = vmatpush1.bf16.msra.mxu0 %v2723
    %2739 = vmatprep.subr.bf16.mxu0 %v2722
    %2740 = vmatpush1.bf16.msra.mxu0 %v2721
    %2741 = vmatprep.subr.bf16.mxu0 0
    %2742 = vmatpush2.bf16.msra.mxu0 0
    %2743 = vmatprep.subr.bf16.mxu0 0
    %2744 = vmatpush2.bf16.msra.mxu0 0
    %2745 = vmatprep.subr.bf16.mxu0 0
    %2746 = vmatpush2.bf16.msra.mxu0 0
    %2747 = vmatprep.subr.bf16.mxu0 0
    %2748 = vmatpush2.bf16.msra.mxu0 0
    %2749 = vmatprep.subr.bf16.mxu0 0
    %2750 = vmatpush2.bf16.msra.mxu0 0
    %2751 = vmatprep.subr.bf16.mxu0 0
    %2752 = vmatpush2.bf16.msra.mxu0 0
    %2753 = vmatprep.subr.bf16.mxu0 0
    %2754 = vmatpush2.bf16.msra.mxu0 0
    %2755 = vmatprep.subr.bf16.mxu0 0
    %2756 = vmatpush2.bf16.msra.mxu0 0
    %2757 = vmatprep.mubr.bf16.mxu0 0
    %2758 = vmatmul.mubr.bf16.gmra.mxu0 %v413
    %v2759 = vpop.f32.mrf.mxu0
    %v2760 = vadd.f32 0.0, %v2759
    %v2761 = vpop.f32.mrf.mxu0
    %v2762 = vadd.f32 0.0, %v2761
    %v2763 = vpop.f32.mrf.mxu0
    %v2764 = vadd.f32 0.0, %v2763
    %v2765 = vpop.f32.mrf.mxu0
    %v2766 = vadd.f32 0.0, %v2765
    %2767 = vmatprep.mubr.bf16.mxu0 0
    %2768 = vmatmul.mubr.bf16.gmra.mxu0 %v416
    %v2769 = vpop.f32.mrf.mxu0
    %v2770 = vadd.f32 0.0, %v2769
    %v2771 = vpop.f32.mrf.mxu0
    %v2772 = vadd.f32 0.0, %v2771
    %v2773 = vpop.f32.mrf.mxu0
    %v2774 = vadd.f32 0.0, %v2773
    %v2775 = vpop.f32.mrf.mxu0
    %v2776 = vadd.f32 0.0, %v2775
    %2777 = vdwg.mxu0
    %v2778 = vpack.c.bf16 %v2764, %v2760
    %v2779 = vpack.c.bf16 %v2766, %v2762
    %v2780 = vpack.c.bf16 %v2774, %v2770
    %v2781 = vpack.c.bf16 %v2776, %v2772
    %v2786 = vunpack.c.l.b16 %v2778
    %v2787 = vunpack.c.l.b16 %v2779
    %v2788 = vunpack.c.h.b16 %v2778
    %v2789 = vunpack.c.h.b16 %v2779
    %v2790 = vunpack.c.l.b16 %v2780
    %v2791 = vunpack.c.l.b16 %v2781
    %v2792 = vunpack.c.h.b16 %v2780
    %v2793 = vunpack.c.h.b16 %v2781
    %v2794 = vpack.c.b16 %v2787, %v2786
    %v2795 = vpack.c.b16 %v2789, %v2788
    %v2796 = vpack.c.b16 %v2791, %v2790
    %v2797 = vpack.c.b16 %v2793, %v2792
    %s2802 = scalar_lea.vmem [#allocation7], 384
    %2803 = vst [vmem:[%s2802] sm:$0xff] %v2794
    %2804 = vst [vmem:[%s2802 + $0x8] sm:$0xff] %v2795
    %2805 = vst [vmem:[%s2802 + $0x10] sm:$0xff] %v2796
    %2806 = vst [vmem:[%s2802 + $0x18] sm:$0xff] %v2797
    %v2807 = vmul.f32 %v1903, %v276
    %v2808 = vmul.f32 %v1904, %v276
    %v2809 = vmul.f32 %v1905, %v281
    %v2810 = vmul.f32 %v1906, %v281
    %v2811 = vmul.f32 %v1907, %v286
    %v2812 = vmul.f32 %v1908, %v286
    %v2813 = vmul.f32 %v1909, %v291
    %v2814 = vmul.f32 %v1910, %v291
    %v2815 = vmul.f32 %v1840, %v873
    %v2816 = vmul.f32 %v1841, %v873
    %v2817 = vmul.f32 %v1842, %v877
    %v2818 = vmul.f32 %v1843, %v877
    %v2819 = vmul.f32 %v1844, %v881
    %v2820 = vmul.f32 %v1845, %v881
    %v2821 = vmul.f32 %v1846, %v885
    %v2822 = vmul.f32 %v1847, %v885
    %v2823 = vadd.f32 %v2807, %v2815
    %v2824 = vadd.f32 %v2808, %v2816
    %v2825 = vadd.f32 %v2809, %v2817
    %v2826 = vadd.f32 %v2810, %v2818
    %v2827 = vadd.f32 %v2811, %v2819
    %v2828 = vadd.f32 %v2812, %v2820
    %v2829 = vadd.f32 %v2813, %v2821
    %v2830 = vadd.f32 %v2814, %v2822
    %v2831 = vmul.f32 %v1861, %v683
    %v2832 = vmul.f32 %v1862, %v683
    %v2833 = vmul.f32 %v1863, %v687
    %v2834 = vmul.f32 %v1864, %v687
    %v2835 = vmul.f32 %v1865, %v691
    %v2836 = vmul.f32 %v1866, %v691
    %v2837 = vmul.f32 %v1867, %v695
    %v2838 = vmul.f32 %v1868, %v695
    %v2839 = vadd.f32 %v2823, %v2831
    %v2840 = vadd.f32 %v2824, %v2832
    %v2841 = vadd.f32 %v2825, %v2833
    %v2842 = vadd.f32 %v2826, %v2834
    %v2843 = vadd.f32 %v2827, %v2835
    %v2844 = vadd.f32 %v2828, %v2836
    %v2845 = vadd.f32 %v2829, %v2837
    %v2846 = vadd.f32 %v2830, %v2838
    %v2847 = vmul.f32 %v1882, %v509
    %v2848 = vmul.f32 %v1883, %v509
    %v2849 = vmul.f32 %v1884, %v513
    %v2850 = vmul.f32 %v1885, %v513
    %v2851 = vmul.f32 %v1886, %v517
    %v2852 = vmul.f32 %v1887, %v517
    %v2853 = vmul.f32 %v1888, %v521
    %v2854 = vmul.f32 %v1889, %v521
    %v2855 = vadd.f32 %v2839, %v2847
    %v2856 = vadd.f32 %v2840, %v2848
    %v2857 = vadd.f32 %v2841, %v2849
    %v2858 = vadd.f32 %v2842, %v2850
    %v2859 = vadd.f32 %v2843, %v2851
    %v2860 = vadd.f32 %v2844, %v2852
    %v2861 = vadd.f32 %v2845, %v2853
    %v2862 = vadd.f32 %v2846, %v2854
    %v2863 = vmul.f32 %v1924, %v303
    %v2864 = vmul.f32 %v1925, %v303
    %v2865 = vmul.f32 %v1926, %v307
    %v2866 = vmul.f32 %v1927, %v307
    %v2867 = vmul.f32 %v1928, %v311
    %v2868 = vmul.f32 %v1929, %v311
    %v2869 = vmul.f32 %v1930, %v315
    %v2870 = vmul.f32 %v1931, %v315
    %v2871 = vadd.f32 %v2855, %v2863
    %v2872 = vadd.f32 %v2856, %v2864
    %v2873 = vadd.f32 %v2857, %v2865
    %v2874 = vadd.f32 %v2858, %v2866
    %v2875 = vadd.f32 %v2859, %v2867
    %v2876 = vadd.f32 %v2860, %v2868
    %v2877 = vadd.f32 %v2861, %v2869
    %v2878 = vadd.f32 %v2862, %v2870
    %v2879 = vmul.f32 %v1945, %v335
    %v2880 = vmul.f32 %v1946, %v335
    %v2881 = vmul.f32 %v1947, %v339
    %v2882 = vmul.f32 %v1948, %v339
    %v2883 = vmul.f32 %v1949, %v343
    %v2884 = vmul.f32 %v1950, %v343
    %v2885 = vmul.f32 %v1951, %v347
    %v2886 = vmul.f32 %v1952, %v347
    %v2887 = vadd.f32 %v2871, %v2879
    %v2888 = vadd.f32 %v2872, %v2880
    %v2889 = vadd.f32 %v2873, %v2881
    %v2890 = vadd.f32 %v2874, %v2882
    %v2891 = vadd.f32 %v2875, %v2883
    %v2892 = vadd.f32 %v2876, %v2884
    %v2893 = vadd.f32 %v2877, %v2885
    %v2894 = vadd.f32 %v2878, %v2886
    %v2895 = vpack.c.bf16 %v2889, %v2887
    %v2896 = vpack.c.bf16 %v2890, %v2888
    %v2897 = vpack.c.bf16 %v2893, %v2891
    %v2898 = vpack.c.bf16 %v2894, %v2892
    %2899 = vmatprep.subr.bf16.mxu0 0
    %2900 = vmatpush1.bf16.msra.mxu0 0
    %2901 = vmatprep.subr.bf16.mxu0 0
    %2902 = vmatpush1.bf16.msra.mxu0 0
    %2903 = vmatprep.subr.bf16.mxu0 0
    %2904 = vmatpush1.bf16.msra.mxu0 0
    %2905 = vmatprep.subr.bf16.mxu0 0
    %2906 = vmatpush1.bf16.msra.mxu0 0
    %2907 = vmatprep.subr.bf16.mxu0 0
    %2908 = vmatpush1.bf16.msra.mxu0 0
    %2909 = vmatprep.subr.bf16.mxu0 0
    %2910 = vmatpush1.bf16.msra.mxu0 0
    %2911 = vmatprep.subr.bf16.mxu0 %v2898
    %2912 = vmatpush1.bf16.msra.mxu0 %v2897
    %2913 = vmatprep.subr.bf16.mxu0 %v2896
    %2914 = vmatpush1.bf16.msra.mxu0 %v2895
    %2915 = vmatprep.subr.bf16.mxu0 0
    %2916 = vmatpush2.bf16.msra.mxu0 0
    %2917 = vmatprep.subr.bf16.mxu0 0
    %2918 = vmatpush2.bf16.msra.mxu0 0
    %2919 = vmatprep.subr.bf16.mxu0 0
    %2920 = vmatpush2.bf16.msra.mxu0 0
    %2921 = vmatprep.subr.bf16.mxu0 0
    %2922 = vmatpush2.bf16.msra.mxu0 0
    %2923 = vmatprep.subr.bf16.mxu0 0
    %2924 = vmatpush2.bf16.msra.mxu0 0
    %2925 = vmatprep.subr.bf16.mxu0 0
    %2926 = vmatpush2.bf16.msra.mxu0 0
    %2927 = vmatprep.subr.bf16.mxu0 0
    %2928 = vmatpush2.bf16.msra.mxu0 0
    %2929 = vmatprep.subr.bf16.mxu0 0
    %2930 = vmatpush2.bf16.msra.mxu0 0
    %2931 = vmatprep.mubr.bf16.mxu0 0
    %2932 = vmatmul.mubr.bf16.gmra.mxu0 %v413
    %v2933 = vpop.f32.mrf.mxu0
    %v2934 = vadd.f32 0.0, %v2933
    %v2935 = vpop.f32.mrf.mxu0
    %v2936 = vadd.f32 0.0, %v2935
    %v2937 = vpop.f32.mrf.mxu0
    %v2938 = vadd.f32 0.0, %v2937
    %v2939 = vpop.f32.mrf.mxu0
    %v2940 = vadd.f32 0.0, %v2939
    %2941 = vmatprep.mubr.bf16.mxu0 0
    %2942 = vmatmul.mubr.bf16.gmra.mxu0 %v416
    %v2943 = vpop.f32.mrf.mxu0
    %v2944 = vadd.f32 0.0, %v2943
    %v2945 = vpop.f32.mrf.mxu0
    %v2946 = vadd.f32 0.0, %v2945
    %v2947 = vpop.f32.mrf.mxu0
    %v2948 = vadd.f32 0.0, %v2947
    %v2949 = vpop.f32.mrf.mxu0
    %v2950 = vadd.f32 0.0, %v2949
    %2951 = vdwg.mxu0
    %v2952 = vpack.c.bf16 %v2938, %v2934
    %v2953 = vpack.c.bf16 %v2940, %v2936
    %v2954 = vpack.c.bf16 %v2948, %v2944
    %v2955 = vpack.c.bf16 %v2950, %v2946
    %v2960 = vunpack.c.l.b16 %v2952
    %v2961 = vunpack.c.l.b16 %v2953
    %v2962 = vunpack.c.h.b16 %v2952
    %v2963 = vunpack.c.h.b16 %v2953
    %v2964 = vunpack.c.l.b16 %v2954
    %v2965 = vunpack.c.l.b16 %v2955
    %v2966 = vunpack.c.h.b16 %v2954
    %v2967 = vunpack.c.h.b16 %v2955
    %v2968 = vpack.c.b16 %v2961, %v2960
    %v2969 = vpack.c.b16 %v2963, %v2962
    %v2970 = vpack.c.b16 %v2965, %v2964
    %v2971 = vpack.c.b16 %v2967, %v2966
    %s2976 = scalar_lea.vmem [#allocation7], 416
    %2977 = vst [vmem:[%s2976] sm:$0xff] %v2968
    %2978 = vst [vmem:[%s2976 + $0x8] sm:$0xff] %v2969
    %2979 = vst [vmem:[%s2976 + $0x10] sm:$0xff] %v2970
    %2980 = vst [vmem:[%s2976 + $0x18] sm:$0xff] %v2971
    %v2981 = vmul.f32 %v1924, %v276
    %v2982 = vmul.f32 %v1925, %v276
    %v2983 = vmul.f32 %v1926, %v281
    %v2984 = vmul.f32 %v1927, %v281
    %v2985 = vmul.f32 %v1928, %v286
    %v2986 = vmul.f32 %v1929, %v286
    %v2987 = vmul.f32 %v1930, %v291
    %v2988 = vmul.f32 %v1931, %v291
    %v2989 = vmul.f32 %v1861, %v873
    %v2990 = vmul.f32 %v1862, %v873
    %v2991 = vmul.f32 %v1863, %v877
    %v2992 = vmul.f32 %v1864, %v877
    %v2993 = vmul.f32 %v1865, %v881
    %v2994 = vmul.f32 %v1866, %v881
    %v2995 = vmul.f32 %v1867, %v885
    %v2996 = vmul.f32 %v1868, %v885
    %v2997 = vadd.f32 %v2981, %v2989
    %v2998 = vadd.f32 %v2982, %v2990
    %v2999 = vadd.f32 %v2983, %v2991
    %v3000 = vadd.f32 %v2984, %v2992
    %v3001 = vadd.f32 %v2985, %v2993
    %v3002 = vadd.f32 %v2986, %v2994
    %v3003 = vadd.f32 %v2987, %v2995
    %v3004 = vadd.f32 %v2988, %v2996
    %v3005 = vmul.f32 %v1882, %v683
    %v3006 = vmul.f32 %v1883, %v683
    %v3007 = vmul.f32 %v1884, %v687
    %v3008 = vmul.f32 %v1885, %v687
    %v3009 = vmul.f32 %v1886, %v691
    %v3010 = vmul.f32 %v1887, %v691
    %v3011 = vmul.f32 %v1888, %v695
    %v3012 = vmul.f32 %v1889, %v695
    %v3013 = vadd.f32 %v2997, %v3005
    %v3014 = vadd.f32 %v2998, %v3006
    %v3015 = vadd.f32 %v2999, %v3007
    %v3016 = vadd.f32 %v3000, %v3008
    %v3017 = vadd.f32 %v3001, %v3009
    %v3018 = vadd.f32 %v3002, %v3010
    %v3019 = vadd.f32 %v3003, %v3011
    %v3020 = vadd.f32 %v3004, %v3012
    %v3021 = vmul.f32 %v1903, %v509
    %v3022 = vmul.f32 %v1904, %v509
    %v3023 = vmul.f32 %v1905, %v513
    %v3024 = vmul.f32 %v1906, %v513
    %v3025 = vmul.f32 %v1907, %v517
    %v3026 = vmul.f32 %v1908, %v517
    %v3027 = vmul.f32 %v1909, %v521
    %v3028 = vmul.f32 %v1910, %v521
    %v3029 = vadd.f32 %v3013, %v3021
    %v3030 = vadd.f32 %v3014, %v3022
    %v3031 = vadd.f32 %v3015, %v3023
    %v3032 = vadd.f32 %v3016, %v3024
    %v3033 = vadd.f32 %v3017, %v3025
    %v3034 = vadd.f32 %v3018, %v3026
    %v3035 = vadd.f32 %v3019, %v3027
    %v3036 = vadd.f32 %v3020, %v3028
    %v3037 = vmul.f32 %v1945, %v303
    %v3038 = vmul.f32 %v1946, %v303
    %v3039 = vmul.f32 %v1947, %v307
    %v3040 = vmul.f32 %v1948, %v307
    %v3041 = vmul.f32 %v1949, %v311
    %v3042 = vmul.f32 %v1950, %v311
    %v3043 = vmul.f32 %v1951, %v315
    %v3044 = vmul.f32 %v1952, %v315
    %v3045 = vadd.f32 %v3029, %v3037
    %v3046 = vadd.f32 %v3030, %v3038
    %v3047 = vadd.f32 %v3031, %v3039
    %v3048 = vadd.f32 %v3032, %v3040
    %v3049 = vadd.f32 %v3033, %v3041
    %v3050 = vadd.f32 %v3034, %v3042
    %v3051 = vadd.f32 %v3035, %v3043
    %v3052 = vadd.f32 %v3036, %v3044
    %v3053 = vpack.c.bf16 %v3047, %v3045
    %v3054 = vpack.c.bf16 %v3048, %v3046
    %v3055 = vpack.c.bf16 %v3051, %v3049
    %v3056 = vpack.c.bf16 %v3052, %v3050
    %3057 = vmatprep.subr.bf16.mxu0 0
    %3058 = vmatpush1.bf16.msra.mxu0 0
    %3059 = vmatprep.subr.bf16.mxu0 0
    %3060 = vmatpush1.bf16.msra.mxu0 0
    %3061 = vmatprep.subr.bf16.mxu0 0
    %3062 = vmatpush1.bf16.msra.mxu0 0
    %3063 = vmatprep.subr.bf16.mxu0 0
    %3064 = vmatpush1.bf16.msra.mxu0 0
    %3065 = vmatprep.subr.bf16.mxu0 0
    %3066 = vmatpush1.bf16.msra.mxu0 0
    %3067 = vmatprep.subr.bf16.mxu0 0
    %3068 = vmatpush1.bf16.msra.mxu0 0
    %3069 = vmatprep.subr.bf16.mxu0 %v3056
    %3070 = vmatpush1.bf16.msra.mxu0 %v3055
    %3071 = vmatprep.subr.bf16.mxu0 %v3054
    %3072 = vmatpush1.bf16.msra.mxu0 %v3053
    %3073 = vmatprep.subr.bf16.mxu0 0
    %3074 = vmatpush2.bf16.msra.mxu0 0
    %3075 = vmatprep.subr.bf16.mxu0 0
    %3076 = vmatpush2.bf16.msra.mxu0 0
    %3077 = vmatprep.subr.bf16.mxu0 0
    %3078 = vmatpush2.bf16.msra.mxu0 0
    %3079 = vmatprep.subr.bf16.mxu0 0
    %3080 = vmatpush2.bf16.msra.mxu0 0
    %3081 = vmatprep.subr.bf16.mxu0 0
    %3082 = vmatpush2.bf16.msra.mxu0 0
    %3083 = vmatprep.subr.bf16.mxu0 0
    %3084 = vmatpush2.bf16.msra.mxu0 0
    %3085 = vmatprep.subr.bf16.mxu0 0
    %3086 = vmatpush2.bf16.msra.mxu0 0
    %3087 = vmatprep.subr.bf16.mxu0 0
    %3088 = vmatpush2.bf16.msra.mxu0 0
    %3089 = vmatprep.mubr.bf16.mxu0 0
    %3090 = vmatmul.mubr.bf16.gmra.mxu0 %v413
    %v3091 = vpop.f32.mrf.mxu0
    %v3092 = vadd.f32 0.0, %v3091
    %v3093 = vpop.f32.mrf.mxu0
    %v3094 = vadd.f32 0.0, %v3093
    %v3095 = vpop.f32.mrf.mxu0
    %v3096 = vadd.f32 0.0, %v3095
    %v3097 = vpop.f32.mrf.mxu0
    %v3098 = vadd.f32 0.0, %v3097
    %3099 = vmatprep.mubr.bf16.mxu0 0
    %3100 = vmatmul.mubr.bf16.gmra.mxu0 %v416
    %v3101 = vpop.f32.mrf.mxu0
    %v3102 = vadd.f32 0.0, %v3101
    %v3103 = vpop.f32.mrf.mxu0
    %v3104 = vadd.f32 0.0, %v3103
    %v3105 = vpop.f32.mrf.mxu0
    %v3106 = vadd.f32 0.0, %v3105
    %v3107 = vpop.f32.mrf.mxu0
    %v3108 = vadd.f32 0.0, %v3107
    %3109 = vdwg.mxu0
    %v3110 = vpack.c.bf16 %v3096, %v3092
    %v3111 = vpack.c.bf16 %v3098, %v3094
    %v3112 = vpack.c.bf16 %v3106, %v3102
    %v3113 = vpack.c.bf16 %v3108, %v3104
    %v3118 = vunpack.c.l.b16 %v3110
    %v3119 = vunpack.c.l.b16 %v3111
    %v3120 = vunpack.c.h.b16 %v3110
    %v3121 = vunpack.c.h.b16 %v3111
    %v3122 = vunpack.c.l.b16 %v3112
    %v3123 = vunpack.c.l.b16 %v3113
    %v3124 = vunpack.c.h.b16 %v3112
    %v3125 = vunpack.c.h.b16 %v3113
    %v3126 = vpack.c.b16 %v3119, %v3118
    %v3127 = vpack.c.b16 %v3121, %v3120
    %v3128 = vpack.c.b16 %v3123, %v3122
    %v3129 = vpack.c.b16 %v3125, %v3124
    %s3134 = scalar_lea.vmem [#allocation7], 448
    %3135 = vst [vmem:[%s3134] sm:$0xff] %v3126
    %3136 = vst [vmem:[%s3134 + $0x8] sm:$0xff] %v3127
    %3137 = vst [vmem:[%s3134 + $0x10] sm:$0xff] %v3128
    %3138 = vst [vmem:[%s3134 + $0x18] sm:$0xff] %v3129
    %v3139 = vmul.f32 %v1945, %v276
    %v3140 = vmul.f32 %v1946, %v276
    %v3141 = vmul.f32 %v1947, %v281
    %v3142 = vmul.f32 %v1948, %v281
    %v3143 = vmul.f32 %v1949, %v286
    %v3144 = vmul.f32 %v1950, %v286
    %v3145 = vmul.f32 %v1951, %v291
    %v3146 = vmul.f32 %v1952, %v291
    %v3147 = vmul.f32 %v1882, %v873
    %v3148 = vmul.f32 %v1883, %v873
    %v3149 = vmul.f32 %v1884, %v877
    %v3150 = vmul.f32 %v1885, %v877
    %v3151 = vmul.f32 %v1886, %v881
    %v3152 = vmul.f32 %v1887, %v881
    %v3153 = vmul.f32 %v1888, %v885
    %v3154 = vmul.f32 %v1889, %v885
    %v3155 = vadd.f32 %v3139, %v3147
    %v3156 = vadd.f32 %v3140, %v3148
    %v3157 = vadd.f32 %v3141, %v3149
    %v3158 = vadd.f32 %v3142, %v3150
    %v3159 = vadd.f32 %v3143, %v3151
    %v3160 = vadd.f32 %v3144, %v3152
    %v3161 = vadd.f32 %v3145, %v3153
    %v3162 = vadd.f32 %v3146, %v3154
    %v3163 = vmul.f32 %v1903, %v683
    %v3164 = vmul.f32 %v1904, %v683
    %v3165 = vmul.f32 %v1905, %v687
    %v3166 = vmul.f32 %v1906, %v687
    %v3167 = vmul.f32 %v1907, %v691
    %v3168 = vmul.f32 %v1908, %v691
    %v3169 = vmul.f32 %v1909, %v695
    %v3170 = vmul.f32 %v1910, %v695
    %v3171 = vadd.f32 %v3155, %v3163
    %v3172 = vadd.f32 %v3156, %v3164
    %v3173 = vadd.f32 %v3157, %v3165
    %v3174 = vadd.f32 %v3158, %v3166
    %v3175 = vadd.f32 %v3159, %v3167
    %v3176 = vadd.f32 %v3160, %v3168
    %v3177 = vadd.f32 %v3161, %v3169
    %v3178 = vadd.f32 %v3162, %v3170
    %v3179 = vmul.f32 %v1924, %v509
    %v3180 = vmul.f32 %v1925, %v509
    %v3181 = vmul.f32 %v1926, %v513
    %v3182 = vmul.f32 %v1927, %v513
    %v3183 = vmul.f32 %v1928, %v517
    %v3184 = vmul.f32 %v1929, %v517
    %v3185 = vmul.f32 %v1930, %v521
    %v3186 = vmul.f32 %v1931, %v521
    %v3187 = vadd.f32 %v3171, %v3179
    %v3188 = vadd.f32 %v3172, %v3180
    %v3189 = vadd.f32 %v3173, %v3181
    %v3190 = vadd.f32 %v3174, %v3182
    %v3191 = vadd.f32 %v3175, %v3183
    %v3192 = vadd.f32 %v3176, %v3184
    %v3193 = vadd.f32 %v3177, %v3185
    %v3194 = vadd.f32 %v3178, %v3186
    %v3195 = vpack.c.bf16 %v3189, %v3187
    %v3196 = vpack.c.bf16 %v3190, %v3188
    %v3197 = vpack.c.bf16 %v3193, %v3191
    %v3198 = vpack.c.bf16 %v3194, %v3192
    %3199 = vmatprep.subr.bf16.mxu0 0
    %3200 = vmatpush1.bf16.msra.mxu0 0
    %3201 = vmatprep.subr.bf16.mxu0 0
    %3202 = vmatpush1.bf16.msra.mxu0 0
    %3203 = vmatprep.subr.bf16.mxu0 0
    %3204 = vmatpush1.bf16.msra.mxu0 0
    %3205 = vmatprep.subr.bf16.mxu0 0
    %3206 = vmatpush1.bf16.msra.mxu0 0
    %3207 = vmatprep.subr.bf16.mxu0 0
    %3208 = vmatpush1.bf16.msra.mxu0 0
    %3209 = vmatprep.subr.bf16.mxu0 0
    %3210 = vmatpush1.bf16.msra.mxu0 0
    %3211 = vmatprep.subr.bf16.mxu0 %v3198
    %3212 = vmatpush1.bf16.msra.mxu0 %v3197
    %3213 = vmatprep.subr.bf16.mxu0 %v3196
    %3214 = vmatpush1.bf16.msra.mxu0 %v3195
    %3215 = vmatprep.subr.bf16.mxu0 0
    %3216 = vmatpush2.bf16.msra.mxu0 0
    %3217 = vmatprep.subr.bf16.mxu0 0
    %3218 = vmatpush2.bf16.msra.mxu0 0
    %3219 = vmatprep.subr.bf16.mxu0 0
    %3220 = vmatpush2.bf16.msra.mxu0 0
    %3221 = vmatprep.subr.bf16.mxu0 0
    %3222 = vmatpush2.bf16.msra.mxu0 0
    %3223 = vmatprep.subr.bf16.mxu0 0
    %3224 = vmatpush2.bf16.msra.mxu0 0
    %3225 = vmatprep.subr.bf16.mxu0 0
    %3226 = vmatpush2.bf16.msra.mxu0 0
    %3227 = vmatprep.subr.bf16.mxu0 0
    %3228 = vmatpush2.bf16.msra.mxu0 0
    %3229 = vmatprep.subr.bf16.mxu0 0
    %3230 = vmatpush2.bf16.msra.mxu0 0
    %3231 = vmatprep.mubr.bf16.mxu0 0
    %3232 = vmatmul.mubr.bf16.gmra.mxu0 %v413
    %v3233 = vpop.f32.mrf.mxu0
    %v3234 = vadd.f32 0.0, %v3233
    %v3235 = vpop.f32.mrf.mxu0
    %v3236 = vadd.f32 0.0, %v3235
    %v3237 = vpop.f32.mrf.mxu0
    %v3238 = vadd.f32 0.0, %v3237
    %v3239 = vpop.f32.mrf.mxu0
    %v3240 = vadd.f32 0.0, %v3239
    %3241 = vmatprep.mubr.bf16.mxu0 0
    %3242 = vmatmul.mubr.bf16.gmra.mxu0 %v416
    %v3243 = vpop.f32.mrf.mxu0
    %v3244 = vadd.f32 0.0, %v3243
    %v3245 = vpop.f32.mrf.mxu0
    %v3246 = vadd.f32 0.0, %v3245
    %v3247 = vpop.f32.mrf.mxu0
    %v3248 = vadd.f32 0.0, %v3247
    %v3249 = vpop.f32.mrf.mxu0
    %v3250 = vadd.f32 0.0, %v3249
    %3251 = vdwg.mxu0
    %v3252 = vpack.c.bf16 %v3238, %v3234
    %v3253 = vpack.c.bf16 %v3240, %v3236
    %v3254 = vpack.c.bf16 %v3248, %v3244
    %v3255 = vpack.c.bf16 %v3250, %v3246
    %v3260 = vunpack.c.l.b16 %v3252
    %v3261 = vunpack.c.l.b16 %v3253
    %v3262 = vunpack.c.h.b16 %v3252
    %v3263 = vunpack.c.h.b16 %v3253
    %v3264 = vunpack.c.l.b16 %v3254
    %v3265 = vunpack.c.l.b16 %v3255
    %v3266 = vunpack.c.h.b16 %v3254
    %v3267 = vunpack.c.h.b16 %v3255
    %v3268 = vpack.c.b16 %v3261, %v3260
    %v3269 = vpack.c.b16 %v3263, %v3262
    %v3270 = vpack.c.b16 %v3265, %v3264
    %v3271 = vpack.c.b16 %v3267, %v3266
    %s3276 = scalar_lea.vmem [#allocation7], 480
    %3277 = vst [vmem:[%s3276] sm:$0xff] %v3268
    %3278 = vst [vmem:[%s3276 + $0x8] sm:$0xff] %v3269
    %3279 = vst [vmem:[%s3276 + $0x10] sm:$0xff] %v3270
    %3280 = vst [vmem:[%s3276 + $0x18] sm:$0xff] %v3271
    // Predicated region
    $region26: #{tpu_custom_call.1} parent=1 // pred_check
      _
    $region27: #{tpu_custom_call.1} parent=1 // pred_check_branch
      %3282 = sbr.rel (0) target = $region29
    $region28: #{tpu_custom_call.1} parent=1 // pred_region
      %s3284 = ssub.s32 8192, 8192
      %3285 = vsyncadd [#allocation4], %s3284
      %s3286 = sshll.u32 [#allocation7], 4
      %s3287 = int_to_ptr.vmem [resolvable:$true] %s3286
      %3292 = dma.vmem_to_hbm [thread:$0]  %s3287, 8192, %s4, [#allocation4], 128, 128, 8
    $region29: #{tpu_custom_call.1} parent=1 // pred_fallthru
      _
    // Predicated region
    $region30: #{tpu_custom_call.1} parent=1 // pred_check
      _
    $region31: #{tpu_custom_call.1} parent=1 // pred_check_branch
      %3294 = sbr.rel (0) target = $region33
    $region32: #{tpu_custom_call.1} parent=1 // pred_region
      %3295 = dma.done [#allocation4], 8192
    $region33: #{tpu_custom_call.1} parent=1 // pred_fallthru
      _
    %3296 = vsyncpa [#allocation3], 1
    %3297 = vsyncpa [#allocation6], 1
    %3298 = vsyncpa [#allocation4], 1

</llo_original>
